<compile_context>
chip_gen: v7x
topology: tpu7x:2x2x1
jax: 0.10.0
libtpu: 0.0.40
codegen_flags: <defaults>
</compile_context>

<pallas_src>
import functools

import jax
import jax.numpy as jnp
from jax.experimental import pallas as pl
from jax.experimental.pallas import tpu as pltpu

IGNORE_INDEX = 255


def _adlcom_kernel(logits_ref, target_ref, sum_ref, cnt_ref, sum_acc, cnt_acc,
                   *, n_rows, block_n, tiles_per_split, ignore_index):
    p = pl.program_id(0)          # parallel split (core) index
    i = pl.program_id(1)          # sequential tile index within this split

    @pl.when(i == 0)
    def _():
        sum_acc[...] = jnp.zeros_like(sum_acc)
        cnt_acc[...] = jnp.zeros_like(cnt_acc)

    logits = logits_ref[...].astype(jnp.float32)            # (block_n, C)
    tgt = target_ref[...]                                   # (block_n, 1) int32

    # global row ids of this tile (unclamped) -> mask the ragged / OOB tail
    tile_idx = p * tiles_per_split + i
    row_ids = tile_idx * block_n + jax.lax.broadcasted_iota(
        jnp.int32, (block_n, 1), 0)
    row_valid = (row_ids < n_rows) & (tgt != ignore_index)  # (block_n, 1)

    # one-hot select of the target-class logit, fused with (1 - x)^2
    class_ids = jax.lax.broadcasted_iota(jnp.int32, logits.shape, 1)
    match = (class_ids == tgt) & row_valid                  # (block_n, C)
    per_elem = jnp.where(match, (1.0 - logits) ** 2, 0.0)
    per_row = jnp.sum(per_elem, axis=-1, keepdims=True)     # (block_n, 1)

    # vectorized accumulation; scalar reduction deferred to the epilogue
    sum_acc[...] += per_row
    cnt_acc[...] += row_valid.astype(jnp.float32)

    @pl.when(i == pl.num_programs(1) - 1)
    def _():
        total = jnp.sum(sum_acc[...])
        count = jnp.sum(cnt_acc[...])
        sum_ref[...] = jnp.full(sum_ref.shape, total, jnp.float32)
        cnt_ref[...] = jnp.full(cnt_ref.shape, count, jnp.float32)


def adlcom_loss(contrast_logits, contrast_target, *, block_n_max=512,
                num_splits=2):
    """mean over rows with target != 255 of (1 - logits[row, target[row]])**2."""
    N, C = contrast_logits.shape
    target2d = contrast_target.astype(jnp.int32).reshape(N, 1)

    def round_up(x, m):
        return ((x + m - 1) // m) * m

    # --- row-tile sizing: as large as safely fits the double-buffered VMEM ---
    elem_bytes = jnp.dtype(contrast_logits.dtype).itemsize
    vmem_budget = 8 * 1024 * 1024   # for the 2x logits buffers (v5e/v7x safe)
    cap = max(16, (vmem_budget // (2 * C * elem_bytes)) // 16 * 16)
    block_n = max(16, min(block_n_max, round_up(N, 16), cap))

    n_tiles = -(-N // block_n)
    num_splits = max(1, min(num_splits, n_tiles))
    tiles_per_split = -(-n_tiles // num_splits)

    def in_index_map(p, i):
        # clamp so a trailing split never indexes past the last real tile;
        # duplicated rows are masked in-kernel via the row_ids < N check.
        t = jnp.minimum(p * tiles_per_split + i, n_tiles - 1)
        return (t, 0)

    def out_index_map(p, i):
        return (p, 0, 0)

    kernel = functools.partial(
        _adlcom_kernel, n_rows=N, block_n=block_n,
        tiles_per_split=tiles_per_split, ignore_index=IGNORE_INDEX)

    sum_out, cnt_out = pl.pallas_call(
        kernel,
        out_shape=(
            jax.ShapeDtypeStruct((num_splits, 8, 128), jnp.float32),
            jax.ShapeDtypeStruct((num_splits, 8, 128), jnp.float32),
        ),
        grid_spec=pltpu.PrefetchScalarGridSpec(
            num_scalar_prefetch=0,
            grid=(num_splits, tiles_per_split),
            in_specs=[
                pl.BlockSpec((block_n, C), in_index_map),
                pl.BlockSpec((block_n, 1), in_index_map),
            ],
            out_specs=(
                pl.BlockSpec((1, 8, 128), out_index_map),
                pl.BlockSpec((1, 8, 128), out_index_map),
            ),
            scratch_shapes=[
                pltpu.VMEM((block_n, 1), jnp.float32),
                pltpu.VMEM((block_n, 1), jnp.float32),
            ],
        ),
        compiler_params=pltpu.CompilerParams(
            dimension_semantics=("parallel", "arbitrary"),
            vmem_limit_bytes=32 * 1024 * 1024,
        ),
    )(contrast_logits, target2d)

    total_sum = jnp.sum(sum_out[:, 0, 0])
    total_cnt = jnp.sum(cnt_out[:, 0, 0])
    # NOTE: if every target == ignore_index this is 0/0 -> NaN, matching torch.
    return (total_sum / total_cnt).astype(jnp.float32)


def _reference(contrast_logits, contrast_target):
    logits = contrast_logits.astype(jnp.float32)
    tgt = contrast_target.astype(jnp.int32)
    valid = tgt != IGNORE_INDEX
    safe_tgt = jnp.where(valid, tgt, 0)
    gathered = jnp.take_along_axis(logits, safe_tgt[:, None], axis=-1)[:, 0]
    sq = jnp.where(valid, (1.0 - gathered) ** 2, 0.0)
    return jnp.sum(sq) / jnp.sum(valid.astype(jnp.float32))


if __name__ == "__main__":
    key = jax.random.PRNGKey(0)
    k1, k2, k3 = jax.random.split(key, 3)

    # N pixel-samples (deliberately not a multiple of the row tile), C prototypes
    N, C = 1000, 16
    contrast_logits = jax.random.normal(k1, (N, C), dtype=jnp.float32)
    contrast_target = jax.random.randint(k2, (N,), 0, C, dtype=jnp.int32)
    # mark some rows as ignored (ignore_index=255)
    ignore_mask = jax.random.bernoulli(k3, 0.25, (N,))
    contrast_target = jnp.where(ignore_mask, IGNORE_INDEX, contrast_target)

    loss = adlcom_loss(contrast_logits, contrast_target)
    loss = jax.block_until_ready(loss)

    ref = jax.block_until_ready(_reference(contrast_logits, contrast_target))
    assert jnp.allclose(loss, ref, rtol=1e-5, atol=1e-5), (loss, ref)

    print("KERNEL_OK")
</pallas_src>

<mosaic_0001>
module attributes {stable_mosaic.version = 11 : i64} {
  func.func @_adlcom_kernel(%arg0: i32, %arg1: i32, %arg2: memref<512x16xf32, #tpu.memory_space<vmem>>, %arg3: memref<512x1xi32, #tpu.memory_space<vmem>>, %arg4: memref<1x8x128xf32, #tpu.memory_space<vmem>>, %arg5: memref<1x8x128xf32, #tpu.memory_space<vmem>>, %arg6: memref<512x1xf32, #tpu.memory_space<vmem>>, %arg7: memref<512x1xf32, #tpu.memory_space<vmem>>) attributes {dimension_semantics = [#tpu.dimension_semantics<parallel>, #tpu.dimension_semantics<arbitrary>], iteration_bounds = array<i64: 2, 1>, scalar_prefetch = 0 : i64, scratch_operands = 2 : i64, tpu.core_type = #tpu.core_type<tc>, window_params = [{transform_indices = @transform_0, window_bounds = array<i64: 512, 16>}, {transform_indices = @transform_1, window_bounds = array<i64: 512, 1>}, {transform_indices = @transform_2, window_bounds = array<i64: 1, 8, 128>}, {transform_indices = @transform_3, window_bounds = array<i64: 1, 8, 128>}]} {
    %c0_i32 = arith.constant 0 : i32
    %0 = arith.cmpi eq, %arg1, %c0_i32 : i32
    %1 = arith.extui %0 : i1 to i32
    %c0_i32_0 = arith.constant 0 : i32
    %2 = arith.cmpi ne, %1, %c0_i32_0 : i32
    scf.if %2 {
      %cst_16 = arith.constant 0.000000e+00 : f32
      %39 = vector.broadcast %cst_16 : f32 to vector<512x1xf32>
      %c0_17 = arith.constant 0 : index
      %c0_18 = arith.constant 0 : index
      %40 = vector.load %arg6[%c0_17, %c0_18] : memref<512x1xf32, #tpu.memory_space<vmem>>, vector<512x1xf32>
      tpu.vector_store %arg6[%c0_17, %c0_18], %39 {strides = array<i32>} : memref<512x1xf32, #tpu.memory_space<vmem>>, vector<512x1xf32>,
      %cst_19 = arith.constant 0.000000e+00 : f32
      %41 = vector.broadcast %cst_19 : f32 to vector<512x1xf32>
      %c0_20 = arith.constant 0 : index
      %c0_21 = arith.constant 0 : index
      %42 = vector.load %arg7[%c0_20, %c0_21] : memref<512x1xf32, #tpu.memory_space<vmem>>, vector<512x1xf32>
      tpu.vector_store %arg7[%c0_20, %c0_21], %41 {strides = array<i32>} : memref<512x1xf32, #tpu.memory_space<vmem>>, vector<512x1xf32>,
    } else {
    }
    %c0 = arith.constant 0 : index
    %c0_1 = arith.constant 0 : index
    %3 = vector.load %arg2[%c0, %c0_1] : memref<512x16xf32, #tpu.memory_space<vmem>>, vector<512x16xf32>
    %c0_2 = arith.constant 0 : index
    %c0_3 = arith.constant 0 : index
    %4 = vector.load %arg3[%c0_2, %c0_3] : memref<512x1xi32, #tpu.memory_space<vmem>>, vector<512x1xi32>
    %c1_i32 = arith.constant 1 : i32
    %5 = arith.muli %arg0, %c1_i32 : i32
    %6 = arith.addi %5, %arg1 : i32
    %c512_i32 = arith.constant 512 : i32
    %7 = arith.muli %6, %c512_i32 : i32
    %8 = tpu.iota {dimensions = array<i32: 0>} : vector<512x1xi32>
    %9 = vector.broadcast %7 : i32 to vector<512x1xi32>
    %10 = arith.addi %9, %8 : vector<512x1xi32>
    %c1000_i32 = arith.constant 1000 : i32
    %11 = vector.broadcast %c1000_i32 : i32 to vector<512x1xi32>
    %12 = arith.cmpi slt, %10, %11 : vector<512x1xi32>
    %c255_i32 = arith.constant 255 : i32
    %13 = vector.broadcast %c255_i32 : i32 to vector<512x1xi32>
    %14 = arith.cmpi ne, %4, %13 : vector<512x1xi32>
    %15 = arith.andi %12, %14 : vector<512x1xi1>
    %16 = tpu.iota {dimensions = array<i32: 1>} : vector<512x16xi32>
    %17 = vector.broadcast %4 : vector<512x1xi32> to vector<512x16xi32>
    %18 = arith.cmpi eq, %16, %17 : vector<512x16xi32>
    %19 = vector.broadcast %15 : vector<512x1xi1> to vector<512x16xi1>
    %20 = arith.andi %18, %19 : vector<512x16xi1>
    %cst = arith.constant 1.000000e+00 : f32
    %21 = vector.broadcast %cst : f32 to vector<512x16xf32>
    %22 = arith.subf %21, %3 : vector<512x16xf32>
    %23 = arith.mulf %22, %22 : vector<512x16xf32>
    %cst_4 = arith.constant 0.000000e+00 : f32
    %24 = vector.broadcast %cst_4 : f32 to vector<512x16xf32>
    %25 = arith.select %20, %23, %24 : vector<512x16xi1>, vector<512x16xf32>
    %cst_5 = arith.constant dense<0.000000e+00> : vector<512xf32>
    %26 = vector.multi_reduction <add>, %25, %cst_5 [1] : vector<512x16xf32> to vector<512xf32>
    %27 = vector.shape_cast %26 : vector<512xf32> to vector<512x1xf32>
    %c0_6 = arith.constant 0 : index
    %c0_7 = arith.constant 0 : index
    %28 = vector.load %arg6[%c0_6, %c0_7] : memref<512x1xf32, #tpu.memory_space<vmem>>, vector<512x1xf32>
    %29 = arith.addf %28, %27 : vector<512x1xf32>
    %c0_8 = arith.constant 0 : index
    %c0_9 = arith.constant 0 : index
    %30 = vector.load %arg6[%c0_8, %c0_9] : memref<512x1xf32, #tpu.memory_space<vmem>>, vector<512x1xf32>
    tpu.vector_store %arg6[%c0_8, %c0_9], %29 {strides = array<i32>} : memref<512x1xf32, #tpu.memory_space<vmem>>, vector<512x1xf32>,
    %c0_10 = arith.constant 0 : index
    %c0_11 = arith.constant 0 : index
    %31 = vector.load %arg7[%c0_10, %c0_11] : memref<512x1xf32, #tpu.memory_space<vmem>>, vector<512x1xf32>
    %32 = arith.extui %15 : vector<512x1xi1> to vector<512x1xi32>
    %33 = arith.sitofp %32 : vector<512x1xi32> to vector<512x1xf32>
    %34 = arith.addf %31, %33 : vector<512x1xf32>
    %c0_12 = arith.constant 0 : index
    %c0_13 = arith.constant 0 : index
    %35 = vector.load %arg7[%c0_12, %c0_13] : memref<512x1xf32, #tpu.memory_space<vmem>>, vector<512x1xf32>
    tpu.vector_store %arg7[%c0_12, %c0_13], %34 {strides = array<i32>} : memref<512x1xf32, #tpu.memory_space<vmem>>, vector<512x1xf32>,
    %c0_i32_14 = arith.constant 0 : i32
    %36 = arith.cmpi eq, %arg1, %c0_i32_14 : i32
    %37 = arith.extui %36 : i1 to i32
    %c0_i32_15 = arith.constant 0 : i32
    %38 = arith.cmpi ne, %37, %c0_i32_15 : i32
    scf.if %38 {
      %c0_16 = arith.constant 0 : index
      %c0_17 = arith.constant 0 : index
      %39 = vector.load %arg6[%c0_16, %c0_17] : memref<512x1xf32, #tpu.memory_space<vmem>>, vector<512x1xf32>
      %40 = vector.shape_cast %39 : vector<512x1xf32> to vector<1x512x1xf32>
      %cst_18 = arith.constant dense<0.000000e+00> : vector<1xf32>
      %41 = vector.multi_reduction <add>, %40, %cst_18 [1, 2] : vector<1x512x1xf32> to vector<1xf32>
      %42 = vector.shape_cast %41 : vector<1xf32> to vector<1x1x1xf32>
      %43 = vector.extract %42[0, 0, 0] : f32 from vector<1x1x1xf32>
      %c0_19 = arith.constant 0 : index
      %c0_20 = arith.constant 0 : index
      %44 = vector.load %arg7[%c0_19, %c0_20] : memref<512x1xf32, #tpu.memory_space<vmem>>, vector<512x1xf32>
      %45 = vector.shape_cast %44 : vector<512x1xf32> to vector<1x512x1xf32>
      %cst_21 = arith.constant dense<0.000000e+00> : vector<1xf32>
      %46 = vector.multi_reduction <add>, %45, %cst_21 [1, 2] : vector<1x512x1xf32> to vector<1xf32>
      %47 = vector.shape_cast %46 : vector<1xf32> to vector<1x1x1xf32>
      %48 = vector.extract %47[0, 0, 0] : f32 from vector<1x1x1xf32>
      %49 = vector.broadcast %43 : f32 to vector<1x8x128xf32>
      %c0_22 = arith.constant 0 : index
      %c0_23 = arith.constant 0 : index
      %c0_24 = arith.constant 0 : index
      %50 = vector.load %arg4[%c0_22, %c0_23, %c0_24] : memref<1x8x128xf32, #tpu.memory_space<vmem>>, vector<1x8x128xf32>
      tpu.vector_store %arg4[%c0_22, %c0_23, %c0_24], %49 {strides = array<i32>} : memref<1x8x128xf32, #tpu.memory_space<vmem>>, vector<1x8x128xf32>,
      %51 = vector.broadcast %48 : f32 to vector<1x8x128xf32>
      %c0_25 = arith.constant 0 : index
      %c0_26 = arith.constant 0 : index
      %c0_27 = arith.constant 0 : index
      %52 = vector.load %arg5[%c0_25, %c0_26, %c0_27] : memref<1x8x128xf32, #tpu.memory_space<vmem>>, vector<1x8x128xf32>
      tpu.vector_store %arg5[%c0_25, %c0_26, %c0_27], %51 {strides = array<i32>} : memref<1x8x128xf32, #tpu.memory_space<vmem>>, vector<1x8x128xf32>,
    } else {
    }
    return
  }
  func.func @transform_0(%arg0: i32, %arg1: i32) -> (i32, i32) {
    %c1_i32 = arith.constant 1 : i32
    %0 = arith.muli %arg0, %c1_i32 : i32
    %1 = arith.addi %0, %arg1 : i32
    %c1_i32_0 = arith.constant 1 : i32
    %2 = arith.minsi %1, %c1_i32_0 : i32
    %c0_i32 = arith.constant 0 : i32
    %c0_i32_1 = arith.constant 0 : i32
    return %2, %c0_i32 : i32, i32
  }
  func.func @transform_1(%arg0: i32, %arg1: i32) -> (i32, i32) {
    %c1_i32 = arith.constant 1 : i32
    %0 = arith.muli %arg0, %c1_i32 : i32
    %1 = arith.addi %0, %arg1 : i32
    %c1_i32_0 = arith.constant 1 : i32
    %2 = arith.minsi %1, %c1_i32_0 : i32
    %c0_i32 = arith.constant 0 : i32
    %c0_i32_1 = arith.constant 0 : i32
    return %2, %c0_i32 : i32, i32
  }
  func.func @transform_2(%arg0: i32, %arg1: i32) -> (i32, i32, i32) {
    %c0_i32 = arith.constant 0 : i32
    %c0_i32_0 = arith.constant 0 : i32
    %c0_i32_1 = arith.constant 0 : i32
    return %arg0, %c0_i32, %c0_i32_0 : i32, i32, i32
  }
  func.func @transform_3(%arg0: i32, %arg1: i32) -> (i32, i32, i32) {
    %c0_i32 = arith.constant 0 : i32
    %c0_i32_0 = arith.constant 0 : i32
    %c0_i32_1 = arith.constant 0 : i32
    return %arg0, %c0_i32, %c0_i32_0 : i32, i32, i32
  }
}

</mosaic_0001>

<llo_original>
// kernel: tpu_custom_call.1
$region0: #{tpu_custom_call.1}
  #allocation0 [shape = 'u32[]', space=smem, size = 0x4, offset = 0x4, fixed_abs, tag = 'smem constant byte address 0x4 - core index']
  #allocation1 [shape = 'u32[144,128]{1,0:T(1,128)}', space=vmem, size = 0x12000, scoped, tag = 'internal scratch']
  #allocation2 [shape = 'f32[512,1]{1,0:T(8,128)}', space=vmem, size = 0x40000, scoped, tag = 'scratch operand']
  #allocation3 [shape = 'f32[512,1]{1,0:T(8,128)}', space=vmem, size = 0x40000, scoped, tag = 'scratch operand']
  %s0 = inlined_call_operand.vmem [shape: f32[1000,16], index: 0, kind: input, shape index: {}]
  %s1 = inlined_call_operand.vmem [shape: s32[1000,1], index: 1, kind: input, shape index: {}]
  %s2 = inlined_call_operand.hbm [shape: f32[2,8,128], index: 2, kind: output, shape index: {0}]
  %s3 = inlined_call_operand.hbm [shape: f32[2,8,128], index: 3, kind: output, shape index: {1}]
  %4 = xla_tuple %s2, %s3
  %s5 = sld [smem:[#allocation0]]
  $region57: #{tpu_custom_call.1} parent=0
    _
  %s7 = ssub.s32 1, %s5
  %s8 = scalar_select 0, %s7, %s5
  $region1: #{tpu_custom_call.1} parent=0
    #allocation4 [shape = 'u8[8192]{0}', space=vmem, size = 0x2000, scoped, tag = 'output window, operand 0']
    #allocation5 [shape = 's32[2]{0}', space=sflag, size = 0x8, scoped, tag = 'scoped memory for tpu_custom_call.1']
    #allocation6 [shape = 'u8[8192]{0}', space=vmem, size = 0x2000, scoped, tag = 'output window, operand 1']
    #allocation7 [shape = 's32[2]{0}', space=sflag, size = 0x8, scoped, tag = 'scoped memory for tpu_custom_call.1']
    %9 = vsyncpa [#allocation5], 0
    %s10 = scalar_lea.sflag [#allocation5], 1
    %11 = vsyncpa %s10, 0
    %12 = vsyncpa [#allocation7], 0
    %s13 = scalar_lea.sflag [#allocation7], 1
    %14 = vsyncpa %s13, 0
    loop: start=0, step=1, limit=4
    $region2: #{tpu_custom_call.1} parent=1 // loop_pre_header
      _
    $region3: #{tpu_custom_call.1} parent=1 // loop_header
      %s16 = sphi 0, %s20
      %p17 = scmp.ge.s32.totalorder %s16, 4
      %s23 = sphi 0, %s35
      %s24 = sphi 0, %s31
      %s25 = sphi 0, %s23
      %s26 = sphi 0, %s24
      %s27 = sphi 0, %s25
      %s28 = sphi 0, %s26
      %s44 = sphi 0, %s46
      %s47 = sphi 0, %s44
      %s48 = sphi 0, %s47
      %s64 = sphi 0, %s48
      %s76 = sphi 0, %s78
      %s79 = sphi 0, %s76
      %s80 = sphi 0, %s79
      %s96 = sphi 0, %s80
      %s102 = sphi 0, %s104
      %s105 = sphi 0, %s102
      %s106 = sphi 0, %s105
      %s122 = sphi 0, %s106
      %s128 = sphi 0, %s130
      %s131 = sphi 0, %s128
      %s132 = sphi 0, %s131
      %s148 = sphi 0, %s132
    $region4: #{tpu_custom_call.1} parent=1 // loop_header_branch
      %19 = sbr.rel (%p17) target = $region8
    $region5: #{tpu_custom_call.1} parent=1 // loop_body
      %s21 = ssub.s32 %s16, 1
      %s22 = ssub.s32 %s16, 2
      %s29 = sadd.s32 1, %s24
      %p30 = scmp.ge.s32.totalorder %s29, 1
      %s31 = scalar_select %p30, 0, %s29
      %s32 = sadd.s32 1, %s23
      %s33 = scalar_select %p30, %s32, %s23
      %p34 = scmp.ge.s32.totalorder %s33, 2
      %s35 = scalar_select %p34, 0, %s33
      %s36 = sadd.s32 %s23, %s24
      %p37 = scmp.lt.s32.totalorder %s36, 1
      %s38 = scalar_select %p37, %s36, 1
      %s39 = sadd.s32 %s35, %s31
      %p40 = scmp.lt.s32.totalorder %s39, 1
      %s41 = scalar_select %p40, %s39, 1
      %s42 = ssub.s32 %s38, %s41
      %p43 = scmp.eq.s32.totalorder %s42, 0
      %s45 = sadd.s32 %s44, 1
      %s46 = scalar_select %p43, %s44, %s45
      %p49 = pneg %p43
      %p50 = scmp.eq.s32.totalorder %s16, 1
      %p51 = por %p49, %p50
      %p52 = scmp.ne.s32.totalorder %s44, %s47
      %p53 = scmp.eq.s32.totalorder %s16, 0
      %p54 = por %p52, %p53
      %p55 = scmp.ne.s32.totalorder %s44, %s47
      %p56 = scmp.eq.s32.totalorder %s21, 1
      %p57 = por %p55, %p56
      %p58 = scmp.ne.s32.totalorder %s47, %s48
      %p59 = scmp.eq.s32.totalorder %s21, 0
      %p60 = por %p58, %p59
      %p61 = scmp.ne.s32.totalorder %s47, %s48
      %p62 = scmp.eq.s32.totalorder %s22, 1
      %p63 = por %p61, %p62
      %p65 = scmp.ne.s32.totalorder %s48, %s64
      %p66 = scmp.eq.s32.totalorder %s22, 0
      %p67 = por %p65, %p66
      %s68 = sadd.s32 %s23, %s24
      %p69 = scmp.lt.s32.totalorder %s68, 1
      %s70 = scalar_select %p69, %s68, 1
      %s71 = sadd.s32 %s35, %s31
      %p72 = scmp.lt.s32.totalorder %s71, 1
      %s73 = scalar_select %p72, %s71, 1
      %s74 = ssub.s32 %s70, %s73
      %p75 = scmp.eq.s32.totalorder %s74, 0
      %s77 = sadd.s32 %s76, 1
      %s78 = scalar_select %p75, %s76, %s77
      %p81 = pneg %p75
      %p82 = scmp.eq.s32.totalorder %s16, 1
      %p83 = por %p81, %p82
      %p84 = scmp.ne.s32.totalorder %s76, %s79
      %p85 = scmp.eq.s32.totalorder %s16, 0
      %p86 = por %p84, %p85
      %p87 = scmp.ne.s32.totalorder %s76, %s79
      %p88 = scmp.eq.s32.totalorder %s21, 1
      %p89 = por %p87, %p88
      %p90 = scmp.ne.s32.totalorder %s79, %s80
      %p91 = scmp.eq.s32.totalorder %s21, 0
      %p92 = por %p90, %p91
      %p93 = scmp.ne.s32.totalorder %s79, %s80
      %p94 = scmp.eq.s32.totalorder %s22, 1
      %p95 = por %p93, %p94
      %p97 = scmp.ne.s32.totalorder %s80, %s96
      %p98 = scmp.eq.s32.totalorder %s22, 0
      %p99 = por %p97, %p98
      %s100 = ssub.s32 %s23, %s35
      %p101 = scmp.eq.s32.totalorder %s100, 0
      %s103 = sadd.s32 %s102, 1
      %s104 = scalar_select %p101, %s102, %s103
      %p107 = pneg %p101
      %p108 = scmp.eq.s32.totalorder %s16, 1
      %p109 = por %p107, %p108
      %p110 = scmp.ne.s32.totalorder %s102, %s105
      %p111 = scmp.eq.s32.totalorder %s16, 0
      %p112 = por %p110, %p111
      %p113 = scmp.ne.s32.totalorder %s102, %s105
      %p114 = scmp.eq.s32.totalorder %s21, 1
      %p115 = por %p113, %p114
      %p116 = scmp.ne.s32.totalorder %s105, %s106
      %p117 = scmp.eq.s32.totalorder %s21, 0
      %p118 = por %p116, %p117
      %p119 = scmp.ne.s32.totalorder %s105, %s106
      %p120 = scmp.eq.s32.totalorder %s22, 1
      %p121 = por %p119, %p120
      %p123 = scmp.ne.s32.totalorder %s106, %s122
      %p124 = scmp.eq.s32.totalorder %s22, 0
      %p125 = por %p123, %p124
      %s126 = ssub.s32 %s23, %s35
      %p127 = scmp.eq.s32.totalorder %s126, 0
      %s129 = sadd.s32 %s128, 1
      %s130 = scalar_select %p127, %s128, %s129
      %p133 = pneg %p127
      %p134 = scmp.eq.s32.totalorder %s16, 1
      %p135 = por %p133, %p134
      %p136 = scmp.ne.s32.totalorder %s128, %s131
      %p137 = scmp.eq.s32.totalorder %s16, 0
      %p138 = por %p136, %p137
      %p139 = scmp.ne.s32.totalorder %s128, %s131
      %p140 = scmp.eq.s32.totalorder %s21, 1
      %p141 = por %p139, %p140
      %p142 = scmp.ne.s32.totalorder %s131, %s132
      %p143 = scmp.eq.s32.totalorder %s21, 0
      %p144 = por %p142, %p143
      %p145 = scmp.ne.s32.totalorder %s131, %s132
      %p146 = scmp.eq.s32.totalorder %s22, 1
      %p147 = por %p145, %p146
      %p149 = scmp.ne.s32.totalorder %s132, %s148
      %p150 = scmp.eq.s32.totalorder %s22, 0
      %p151 = por %p149, %p150
      %p152 = scmp.le.s32.totalorder 1, %s16
      %p153 = scmp.lt.s32.totalorder %s16, 3
      %p154 = pnand %p152, %p153
      %p155 = pneg %p154
      // Predicated region
      $region9: #{tpu_custom_call.1} parent=5 // pred_check
        _
      $region10: #{tpu_custom_call.1} parent=5 // pred_check_branch
        %157 = sbr.rel (%p154) target = $region12
      $region11: #{tpu_custom_call.1} parent=5 // pred_region
        %s158 = ssub.s32 %s16, 1
      $region12: #{tpu_custom_call.1} parent=5 // pred_fallthru
        _
      %p159 = scmp.lt.s32.totalorder %s16, 2
      // Predicated region
      $region13: #{tpu_custom_call.1} parent=5 // pred_check
        %p160 = pneg %p159
      $region14: #{tpu_custom_call.1} parent=5 // pred_check_branch
        %162 = sbr.rel (%p160) target = $region16
      $region15: #{tpu_custom_call.1} parent=5 // pred_region
        // Predicated region
        $region17: #{tpu_custom_call.1} parent=15 // pred_check
          %p163 = pneg %p54
        $region18: #{tpu_custom_call.1} parent=15 // pred_check_branch
          %165 = sbr.rel (%p163) target = $region20
        $region19: #{tpu_custom_call.1} parent=15 // pred_region
          %s166 = sadd.s32 %s23, %s24
          %p167 = scmp.lt.s32.totalorder %s166, 1
          %s168 = scalar_select %p167, %s166, 1
          %s169 = smul.u32 64, %s168
          %s170 = ssub.s32 125, %s169
          %p171 = scmp.lt.s32.totalorder %s170, 64
          %s172 = scalar_select %p171, %s170, 64
          %s173 = smul.u32 128, %s172
          %p174 = scmp.lt.s32.totalorder %s169, 124
          %s175 = scalar_select %p174, %s169, 124
          %s176 = smul.addr %s175, 8
          %s177 = scalar_lea.vmem %s0, %s176
          %s178 = sadd.s32 %s23, %s24
          %p179 = scmp.lt.s32.totalorder %s178, 1
          %s180 = scalar_select %p179, %s178, 1
          %s181 = smul.u32 64, %s180
          %s182 = ssub.s32 125, %s181
          %p183 = scmp.lt.s32.totalorder %s182, 64
          %s184 = scalar_select %p183, %s182, 64
          %s185 = smul.u32 128, %s184
        $region20: #{tpu_custom_call.1} parent=15 // pred_fallthru
          _
        // Predicated region
        $region21: #{tpu_custom_call.1} parent=15 // pred_check
          %p186 = pneg %p86
        $region22: #{tpu_custom_call.1} parent=15 // pred_check_branch
          %188 = sbr.rel (%p186) target = $region24
        $region23: #{tpu_custom_call.1} parent=15 // pred_region
          %s189 = sadd.s32 %s23, %s24
          %p190 = scmp.lt.s32.totalorder %s189, 1
          %s191 = scalar_select %p190, %s189, 1
          %s192 = smul.u32 64, %s191
          %s193 = ssub.s32 125, %s192
          %p194 = scmp.lt.s32.totalorder %s193, 64
          %s195 = scalar_select %p194, %s193, 64
          %s196 = smul.u32 128, %s195
          %p197 = scmp.lt.s32.totalorder %s192, 124
          %s198 = scalar_select %p197, %s192, 124
          %s199 = smul.addr %s198, 8
          %s200 = scalar_lea.vmem %s1, %s199
          %s201 = sadd.s32 %s23, %s24
          %p202 = scmp.lt.s32.totalorder %s201, 1
          %s203 = scalar_select %p202, %s201, 1
          %s204 = smul.u32 64, %s203
          %s205 = ssub.s32 125, %s204
          %p206 = scmp.lt.s32.totalorder %s205, 64
          %s207 = scalar_select %p206, %s205, 64
          %s208 = smul.u32 128, %s207
        $region24: #{tpu_custom_call.1} parent=15 // pred_fallthru
          _
      $region16: #{tpu_custom_call.1} parent=5 // pred_fallthru
        _
      %p209 = scmp.le.s32.totalorder 1, %s16
      %p210 = scmp.lt.s32.totalorder %s16, 3
      %p211 = pnand %p209, %p210
      %p212 = pneg %p211
      // Predicated region
      $region25: #{tpu_custom_call.1} parent=5 // pred_check
        _
      $region26: #{tpu_custom_call.1} parent=5 // pred_check_branch
        %214 = sbr.rel (%p211) target = $region28
      $region27: #{tpu_custom_call.1} parent=5 // pred_region
        %s215 = ssub.s32 %s16, 1
        %s216 = sadd.s32 %s25, %s26
        %p217 = scmp.lt.s32.totalorder %s216, 1
        %s218 = scalar_select %p217, %s216, 1
        %s219 = smul.u32 64, %s218
        %s220 = ssub.s32 125, %s219
        %p221 = scmp.lt.s32.totalorder %s220, 64
        %s222 = scalar_select %p221, %s220, 64
        %s223 = smul.u32 128, %s222
        %p224 = scmp.lt.s32.totalorder %s219, 124
        %s225 = scalar_select %p224, %s219, 124
        %s226 = smul.addr %s225, 8
        %s227 = scalar_lea.vmem %s0, %s226
        %p228 = pneg %p60
        %p229 = pneg %p57
        %s230 = sadd.s32 %s25, %s26
        %p231 = scmp.lt.s32.totalorder %s230, 1
        %s232 = scalar_select %p231, %s230, 1
        %s233 = smul.u32 64, %s232
        %s234 = ssub.s32 125, %s233
        %p235 = scmp.lt.s32.totalorder %s234, 64
        %s236 = scalar_select %p235, %s234, 64
        %s237 = smul.u32 128, %s236
        %p238 = scmp.lt.s32.totalorder %s233, 124
        %s239 = scalar_select %p238, %s233, 124
        %s240 = smul.addr %s239, 8
        %s241 = scalar_lea.vmem %s1, %s240
        %p242 = pneg %p92
        %p243 = pneg %p89
        %p244 = pneg %p118
        %p245 = pneg %p115
        %s246 = sand.u32 %s105, 1
        %s247 = scalar_lea.sflag [#allocation5], %s246
        %s248 = sand.u32 %s105, 1
        %s249 = smul.addr %s248, 8
        %s250 = scalar_lea.vmem [#allocation4], %s249
        %p251 = pneg %p144
        %p252 = pneg %p141
        %s253 = sand.u32 %s131, 1
        %s254 = scalar_lea.sflag [#allocation7], %s253
        %s255 = sand.u32 %s131, 1
        %s256 = smul.addr %s255, 8
        %s257 = scalar_lea.vmem [#allocation6], %s256
        %s258 = sadd.s32 %s25, %s26
        %p259 = scmp.lt.s32.totalorder %s258, 1
        %s260 = scalar_select %p259, %s258, 1
        %s261 = smul.u32 64, %s260
        %s262 = ssub.s32 125, %s261
        %p263 = scmp.lt.s32.totalorder %s262, 64
        %s264 = scalar_select %p263, %s262, 64
        %s265 = smul.u32 128, %s264
        %p266 = scmp.lt.s32.totalorder %s261, 124
        %s267 = scalar_select %p266, %s261, 124
        %s268 = smul.addr %s267, 8
        %s269 = scalar_lea.vmem %s0, %s268
        %s270 = sadd.s32 %s25, %s26
        %p271 = scmp.lt.s32.totalorder %s270, 1
        %s272 = scalar_select %p271, %s270, 1
        %s273 = smul.u32 64, %s272
        %s274 = ssub.s32 125, %s273
        %p275 = scmp.lt.s32.totalorder %s274, 64
        %s276 = scalar_select %p275, %s274, 64
        %s277 = smul.u32 128, %s276
        %s278 = sadd.s32 %s25, %s26
        %p279 = scmp.lt.s32.totalorder %s278, 1
        %s280 = scalar_select %p279, %s278, 1
        %s281 = smul.u32 64, %s280
        %s282 = ssub.s32 125, %s281
        %p283 = scmp.lt.s32.totalorder %s282, 64
        %s284 = scalar_select %p283, %s282, 64
        %s285 = smul.u32 128, %s284
        %p286 = scmp.lt.s32.totalorder %s281, 124
        %s287 = scalar_select %p286, %s281, 124
        %s288 = smul.addr %s287, 8
        %s289 = scalar_lea.vmem %s1, %s288
        %s290 = sadd.s32 %s25, %s26
        %p291 = scmp.lt.s32.totalorder %s290, 1
        %s292 = scalar_select %p291, %s290, 1
        %s293 = smul.u32 64, %s292
        %s294 = ssub.s32 125, %s293
        %p295 = scmp.lt.s32.totalorder %s294, 64
        %s296 = scalar_select %p295, %s294, 64
        %s297 = smul.u32 128, %s296
        %p298 = scmp.eq.s32.totalorder %s26, 0
        // Predicated region
        $region29: #{tpu_custom_call.1} parent=27 // pred_check
          %p299 = pneg %p298
        $region30: #{tpu_custom_call.1} parent=27 // pred_check_branch
          %301 = sbr.rel (%p299) target = $region32
        $region31: #{tpu_custom_call.1} parent=27 // pred_region
          %vm302 = vcmask 7168
          %303 = vst.msk [vmem:[#allocation2] sm:$0xff] %vm302, 0.0
          %304 = vst.msk [vmem:[#allocation2 + $0x8] sm:$0xff] %vm302, 0.0
          %305 = vst.msk [vmem:[#allocation2 + $0x10] sm:$0xff] %vm302, 0.0
          %306 = vst.msk [vmem:[#allocation2 + $0x18] sm:$0xff] %vm302, 0.0
          %307 = vst.msk [vmem:[#allocation2 + $0x20] sm:$0xff] %vm302, 0.0
          %308 = vst.msk [vmem:[#allocation2 + $0x28] sm:$0xff] %vm302, 0.0
          %309 = vst.msk [vmem:[#allocation2 + $0x30] sm:$0xff] %vm302, 0.0
          %310 = vst.msk [vmem:[#allocation2 + $0x38] sm:$0xff] %vm302, 0.0
          %311 = vst.msk [vmem:[#allocation2 + $0x40] sm:$0xff] %vm302, 0.0
          %312 = vst.msk [vmem:[#allocation2 + $0x48] sm:$0xff] %vm302, 0.0
          %313 = vst.msk [vmem:[#allocation2 + $0x50] sm:$0xff] %vm302, 0.0
          %314 = vst.msk [vmem:[#allocation2 + $0x58] sm:$0xff] %vm302, 0.0
          %315 = vst.msk [vmem:[#allocation2 + $0x60] sm:$0xff] %vm302, 0.0
          %316 = vst.msk [vmem:[#allocation2 + $0x68] sm:$0xff] %vm302, 0.0
          %317 = vst.msk [vmem:[#allocation2 + $0x70] sm:$0xff] %vm302, 0.0
          %318 = vst.msk [vmem:[#allocation2 + $0x78] sm:$0xff] %vm302, 0.0
          %319 = vst.msk [vmem:[#allocation2 + $0x80] sm:$0xff] %vm302, 0.0
          %320 = vst.msk [vmem:[#allocation2 + $0x88] sm:$0xff] %vm302, 0.0
          %321 = vst.msk [vmem:[#allocation2 + $0x90] sm:$0xff] %vm302, 0.0
          %322 = vst.msk [vmem:[#allocation2 + $0x98] sm:$0xff] %vm302, 0.0
          %323 = vst.msk [vmem:[#allocation2 + $0xa0] sm:$0xff] %vm302, 0.0
          %324 = vst.msk [vmem:[#allocation2 + $0xa8] sm:$0xff] %vm302, 0.0
          %325 = vst.msk [vmem:[#allocation2 + $0xb0] sm:$0xff] %vm302, 0.0
          %326 = vst.msk [vmem:[#allocation2 + $0xb8] sm:$0xff] %vm302, 0.0
          %327 = vst.msk [vmem:[#allocation2 + $0xc0] sm:$0xff] %vm302, 0.0
          %328 = vst.msk [vmem:[#allocation2 + $0xc8] sm:$0xff] %vm302, 0.0
          %329 = vst.msk [vmem:[#allocation2 + $0xd0] sm:$0xff] %vm302, 0.0
          %330 = vst.msk [vmem:[#allocation2 + $0xd8] sm:$0xff] %vm302, 0.0
          %331 = vst.msk [vmem:[#allocation2 + $0xe0] sm:$0xff] %vm302, 0.0
          %332 = vst.msk [vmem:[#allocation2 + $0xe8] sm:$0xff] %vm302, 0.0
          %333 = vst.msk [vmem:[#allocation2 + $0xf0] sm:$0xff] %vm302, 0.0
          %334 = vst.msk [vmem:[#allocation2 + $0xf8] sm:$0xff] %vm302, 0.0
          %335 = vst.msk [vmem:[#allocation2 + $0x100] sm:$0xff] %vm302, 0.0
          %336 = vst.msk [vmem:[#allocation2 + $0x108] sm:$0xff] %vm302, 0.0
          %337 = vst.msk [vmem:[#allocation2 + $0x110] sm:$0xff] %vm302, 0.0
          %338 = vst.msk [vmem:[#allocation2 + $0x118] sm:$0xff] %vm302, 0.0
          %339 = vst.msk [vmem:[#allocation2 + $0x120] sm:$0xff] %vm302, 0.0
          %340 = vst.msk [vmem:[#allocation2 + $0x128] sm:$0xff] %vm302, 0.0
          %341 = vst.msk [vmem:[#allocation2 + $0x130] sm:$0xff] %vm302, 0.0
          %342 = vst.msk [vmem:[#allocation2 + $0x138] sm:$0xff] %vm302, 0.0
          %343 = vst.msk [vmem:[#allocation2 + $0x140] sm:$0xff] %vm302, 0.0
          %344 = vst.msk [vmem:[#allocation2 + $0x148] sm:$0xff] %vm302, 0.0
          %345 = vst.msk [vmem:[#allocation2 + $0x150] sm:$0xff] %vm302, 0.0
          %346 = vst.msk [vmem:[#allocation2 + $0x158] sm:$0xff] %vm302, 0.0
          %347 = vst.msk [vmem:[#allocation2 + $0x160] sm:$0xff] %vm302, 0.0
          %348 = vst.msk [vmem:[#allocation2 + $0x168] sm:$0xff] %vm302, 0.0
          %349 = vst.msk [vmem:[#allocation2 + $0x170] sm:$0xff] %vm302, 0.0
          %350 = vst.msk [vmem:[#allocation2 + $0x178] sm:$0xff] %vm302, 0.0
          %351 = vst.msk [vmem:[#allocation2 + $0x180] sm:$0xff] %vm302, 0.0
          %352 = vst.msk [vmem:[#allocation2 + $0x188] sm:$0xff] %vm302, 0.0
          %353 = vst.msk [vmem:[#allocation2 + $0x190] sm:$0xff] %vm302, 0.0
          %354 = vst.msk [vmem:[#allocation2 + $0x198] sm:$0xff] %vm302, 0.0
          %355 = vst.msk [vmem:[#allocation2 + $0x1a0] sm:$0xff] %vm302, 0.0
          %356 = vst.msk [vmem:[#allocation2 + $0x1a8] sm:$0xff] %vm302, 0.0
          %357 = vst.msk [vmem:[#allocation2 + $0x1b0] sm:$0xff] %vm302, 0.0
          %358 = vst.msk [vmem:[#allocation2 + $0x1b8] sm:$0xff] %vm302, 0.0
          %359 = vst.msk [vmem:[#allocation2 + $0x1c0] sm:$0xff] %vm302, 0.0
          %360 = vst.msk [vmem:[#allocation2 + $0x1c8] sm:$0xff] %vm302, 0.0
          %361 = vst.msk [vmem:[#allocation2 + $0x1d0] sm:$0xff] %vm302, 0.0
          %362 = vst.msk [vmem:[#allocation2 + $0x1d8] sm:$0xff] %vm302, 0.0
          %363 = vst.msk [vmem:[#allocation2 + $0x1e0] sm:$0xff] %vm302, 0.0
          %364 = vst.msk [vmem:[#allocation2 + $0x1e8] sm:$0xff] %vm302, 0.0
          %365 = vst.msk [vmem:[#allocation2 + $0x1f0] sm:$0xff] %vm302, 0.0
          %366 = vst.msk [vmem:[#allocation2 + $0x1f8] sm:$0xff] %vm302, 0.0
          %367 = vst.msk [vmem:[#allocation3] sm:$0xff] %vm302, 0.0
          %368 = vst.msk [vmem:[#allocation3 + $0x8] sm:$0xff] %vm302, 0.0
          %369 = vst.msk [vmem:[#allocation3 + $0x10] sm:$0xff] %vm302, 0.0
          %370 = vst.msk [vmem:[#allocation3 + $0x18] sm:$0xff] %vm302, 0.0
          %371 = vst.msk [vmem:[#allocation3 + $0x20] sm:$0xff] %vm302, 0.0
          %372 = vst.msk [vmem:[#allocation3 + $0x28] sm:$0xff] %vm302, 0.0
          %373 = vst.msk [vmem:[#allocation3 + $0x30] sm:$0xff] %vm302, 0.0
          %374 = vst.msk [vmem:[#allocation3 + $0x38] sm:$0xff] %vm302, 0.0
          %375 = vst.msk [vmem:[#allocation3 + $0x40] sm:$0xff] %vm302, 0.0
          %376 = vst.msk [vmem:[#allocation3 + $0x48] sm:$0xff] %vm302, 0.0
          %377 = vst.msk [vmem:[#allocation3 + $0x50] sm:$0xff] %vm302, 0.0
          %378 = vst.msk [vmem:[#allocation3 + $0x58] sm:$0xff] %vm302, 0.0
          %379 = vst.msk [vmem:[#allocation3 + $0x60] sm:$0xff] %vm302, 0.0
          %380 = vst.msk [vmem:[#allocation3 + $0x68] sm:$0xff] %vm302, 0.0
          %381 = vst.msk [vmem:[#allocation3 + $0x70] sm:$0xff] %vm302, 0.0
          %382 = vst.msk [vmem:[#allocation3 + $0x78] sm:$0xff] %vm302, 0.0
          %383 = vst.msk [vmem:[#allocation3 + $0x80] sm:$0xff] %vm302, 0.0
          %384 = vst.msk [vmem:[#allocation3 + $0x88] sm:$0xff] %vm302, 0.0
          %385 = vst.msk [vmem:[#allocation3 + $0x90] sm:$0xff] %vm302, 0.0
          %386 = vst.msk [vmem:[#allocation3 + $0x98] sm:$0xff] %vm302, 0.0
          %387 = vst.msk [vmem:[#allocation3 + $0xa0] sm:$0xff] %vm302, 0.0
          %388 = vst.msk [vmem:[#allocation3 + $0xa8] sm:$0xff] %vm302, 0.0
          %389 = vst.msk [vmem:[#allocation3 + $0xb0] sm:$0xff] %vm302, 0.0
          %390 = vst.msk [vmem:[#allocation3 + $0xb8] sm:$0xff] %vm302, 0.0
          %391 = vst.msk [vmem:[#allocation3 + $0xc0] sm:$0xff] %vm302, 0.0
          %392 = vst.msk [vmem:[#allocation3 + $0xc8] sm:$0xff] %vm302, 0.0
          %393 = vst.msk [vmem:[#allocation3 + $0xd0] sm:$0xff] %vm302, 0.0
          %394 = vst.msk [vmem:[#allocation3 + $0xd8] sm:$0xff] %vm302, 0.0
          %395 = vst.msk [vmem:[#allocation3 + $0xe0] sm:$0xff] %vm302, 0.0
          %396 = vst.msk [vmem:[#allocation3 + $0xe8] sm:$0xff] %vm302, 0.0
          %397 = vst.msk [vmem:[#allocation3 + $0xf0] sm:$0xff] %vm302, 0.0
          %398 = vst.msk [vmem:[#allocation3 + $0xf8] sm:$0xff] %vm302, 0.0
          %399 = vst.msk [vmem:[#allocation3 + $0x100] sm:$0xff] %vm302, 0.0
          %400 = vst.msk [vmem:[#allocation3 + $0x108] sm:$0xff] %vm302, 0.0
          %401 = vst.msk [vmem:[#allocation3 + $0x110] sm:$0xff] %vm302, 0.0
          %402 = vst.msk [vmem:[#allocation3 + $0x118] sm:$0xff] %vm302, 0.0
          %403 = vst.msk [vmem:[#allocation3 + $0x120] sm:$0xff] %vm302, 0.0
          %404 = vst.msk [vmem:[#allocation3 + $0x128] sm:$0xff] %vm302, 0.0
          %405 = vst.msk [vmem:[#allocation3 + $0x130] sm:$0xff] %vm302, 0.0
          %406 = vst.msk [vmem:[#allocation3 + $0x138] sm:$0xff] %vm302, 0.0
          %407 = vst.msk [vmem:[#allocation3 + $0x140] sm:$0xff] %vm302, 0.0
          %408 = vst.msk [vmem:[#allocation3 + $0x148] sm:$0xff] %vm302, 0.0
          %409 = vst.msk [vmem:[#allocation3 + $0x150] sm:$0xff] %vm302, 0.0
          %410 = vst.msk [vmem:[#allocation3 + $0x158] sm:$0xff] %vm302, 0.0
          %411 = vst.msk [vmem:[#allocation3 + $0x160] sm:$0xff] %vm302, 0.0
          %412 = vst.msk [vmem:[#allocation3 + $0x168] sm:$0xff] %vm302, 0.0
          %413 = vst.msk [vmem:[#allocation3 + $0x170] sm:$0xff] %vm302, 0.0
          %414 = vst.msk [vmem:[#allocation3 + $0x178] sm:$0xff] %vm302, 0.0
          %415 = vst.msk [vmem:[#allocation3 + $0x180] sm:$0xff] %vm302, 0.0
          %416 = vst.msk [vmem:[#allocation3 + $0x188] sm:$0xff] %vm302, 0.0
          %417 = vst.msk [vmem:[#allocation3 + $0x190] sm:$0xff] %vm302, 0.0
          %418 = vst.msk [vmem:[#allocation3 + $0x198] sm:$0xff] %vm302, 0.0
          %419 = vst.msk [vmem:[#allocation3 + $0x1a0] sm:$0xff] %vm302, 0.0
          %420 = vst.msk [vmem:[#allocation3 + $0x1a8] sm:$0xff] %vm302, 0.0
          %421 = vst.msk [vmem:[#allocation3 + $0x1b0] sm:$0xff] %vm302, 0.0
          %422 = vst.msk [vmem:[#allocation3 + $0x1b8] sm:$0xff] %vm302, 0.0
          %423 = vst.msk [vmem:[#allocation3 + $0x1c0] sm:$0xff] %vm302, 0.0
          %424 = vst.msk [vmem:[#allocation3 + $0x1c8] sm:$0xff] %vm302, 0.0
          %425 = vst.msk [vmem:[#allocation3 + $0x1d0] sm:$0xff] %vm302, 0.0
          %426 = vst.msk [vmem:[#allocation3 + $0x1d8] sm:$0xff] %vm302, 0.0
          %427 = vst.msk [vmem:[#allocation3 + $0x1e0] sm:$0xff] %vm302, 0.0
          %428 = vst.msk [vmem:[#allocation3 + $0x1e8] sm:$0xff] %vm302, 0.0
          %429 = vst.msk [vmem:[#allocation3 + $0x1f0] sm:$0xff] %vm302, 0.0
          %430 = vst.msk [vmem:[#allocation3 + $0x1f8] sm:$0xff] %vm302, 0.0
        $region32: #{tpu_custom_call.1} parent=27 // pred_fallthru
          _
        %v431 = vld [vmem:[%s269] sm:$0xff]
        %v432 = vld [vmem:[%s269 + $0x8] sm:$0xff]
        %v433 = vld [vmem:[%s269 + $0x10] sm:$0xff]
        %v434 = vld [vmem:[%s269 + $0x18] sm:$0xff]
        %v435 = vld [vmem:[%s269 + $0x20] sm:$0xff]
        %v436 = vld [vmem:[%s269 + $0x28] sm:$0xff]
        %v437 = vld [vmem:[%s269 + $0x30] sm:$0xff]
        %v438 = vld [vmem:[%s269 + $0x38] sm:$0xff]
        %v439 = vld [vmem:[%s269 + $0x40] sm:$0xff]
        %v440 = vld [vmem:[%s269 + $0x48] sm:$0xff]
        %v441 = vld [vmem:[%s269 + $0x50] sm:$0xff]
        %v442 = vld [vmem:[%s269 + $0x58] sm:$0xff]
        %v443 = vld [vmem:[%s269 + $0x60] sm:$0xff]
        %v444 = vld [vmem:[%s269 + $0x68] sm:$0xff]
        %v445 = vld [vmem:[%s269 + $0x70] sm:$0xff]
        %v446 = vld [vmem:[%s269 + $0x78] sm:$0xff]
        %v447 = vld [vmem:[%s269 + $0x80] sm:$0xff]
        %v448 = vld [vmem:[%s269 + $0x88] sm:$0xff]
        %v449 = vld [vmem:[%s269 + $0x90] sm:$0xff]
        %v450 = vld [vmem:[%s269 + $0x98] sm:$0xff]
        %v451 = vld [vmem:[%s269 + $0xa0] sm:$0xff]
        %v452 = vld [vmem:[%s269 + $0xa8] sm:$0xff]
        %v453 = vld [vmem:[%s269 + $0xb0] sm:$0xff]
        %v454 = vld [vmem:[%s269 + $0xb8] sm:$0xff]
        %v455 = vld [vmem:[%s269 + $0xc0] sm:$0xff]
        %v456 = vld [vmem:[%s269 + $0xc8] sm:$0xff]
        %v457 = vld [vmem:[%s269 + $0xd0] sm:$0xff]
        %v458 = vld [vmem:[%s269 + $0xd8] sm:$0xff]
        %v459 = vld [vmem:[%s269 + $0xe0] sm:$0xff]
        %v460 = vld [vmem:[%s269 + $0xe8] sm:$0xff]
        %v461 = vld [vmem:[%s269 + $0xf0] sm:$0xff]
        %v462 = vld [vmem:[%s269 + $0xf8] sm:$0xff]
        %v463 = vld [vmem:[%s269 + $0x100] sm:$0xff]
        %v464 = vld [vmem:[%s269 + $0x108] sm:$0xff]
        %v465 = vld [vmem:[%s269 + $0x110] sm:$0xff]
        %v466 = vld [vmem:[%s269 + $0x118] sm:$0xff]
        %v467 = vld [vmem:[%s269 + $0x120] sm:$0xff]
        %v468 = vld [vmem:[%s269 + $0x128] sm:$0xff]
        %v469 = vld [vmem:[%s269 + $0x130] sm:$0xff]
        %v470 = vld [vmem:[%s269 + $0x138] sm:$0xff]
        %v471 = vld [vmem:[%s269 + $0x140] sm:$0xff]
        %v472 = vld [vmem:[%s269 + $0x148] sm:$0xff]
        %v473 = vld [vmem:[%s269 + $0x150] sm:$0xff]
        %v474 = vld [vmem:[%s269 + $0x158] sm:$0xff]
        %v475 = vld [vmem:[%s269 + $0x160] sm:$0xff]
        %v476 = vld [vmem:[%s269 + $0x168] sm:$0xff]
        %v477 = vld [vmem:[%s269 + $0x170] sm:$0xff]
        %v478 = vld [vmem:[%s269 + $0x178] sm:$0xff]
        %v479 = vld [vmem:[%s269 + $0x180] sm:$0xff]
        %v480 = vld [vmem:[%s269 + $0x188] sm:$0xff]
        %v481 = vld [vmem:[%s269 + $0x190] sm:$0xff]
        %v482 = vld [vmem:[%s269 + $0x198] sm:$0xff]
        %v483 = vld [vmem:[%s269 + $0x1a0] sm:$0xff]
        %v484 = vld [vmem:[%s269 + $0x1a8] sm:$0xff]
        %v485 = vld [vmem:[%s269 + $0x1b0] sm:$0xff]
        %v486 = vld [vmem:[%s269 + $0x1b8] sm:$0xff]
        %v487 = vld [vmem:[%s269 + $0x1c0] sm:$0xff]
        %v488 = vld [vmem:[%s269 + $0x1c8] sm:$0xff]
        %v489 = vld [vmem:[%s269 + $0x1d0] sm:$0xff]
        %v490 = vld [vmem:[%s269 + $0x1d8] sm:$0xff]
        %v491 = vld [vmem:[%s269 + $0x1e0] sm:$0xff]
        %v492 = vld [vmem:[%s269 + $0x1e8] sm:$0xff]
        %v493 = vld [vmem:[%s269 + $0x1f0] sm:$0xff]
        %v494 = vld [vmem:[%s269 + $0x1f8] sm:$0xff]
        %v495 = vld [vmem:[%s289] sm:$0xff]
        %v496 = vld [vmem:[%s289 + $0x8] sm:$0xff]
        %v497 = vld [vmem:[%s289 + $0x10] sm:$0xff]
        %v498 = vld [vmem:[%s289 + $0x18] sm:$0xff]
        %v499 = vld [vmem:[%s289 + $0x20] sm:$0xff]
        %v500 = vld [vmem:[%s289 + $0x28] sm:$0xff]
        %v501 = vld [vmem:[%s289 + $0x30] sm:$0xff]
        %v502 = vld [vmem:[%s289 + $0x38] sm:$0xff]
        %v503 = vld [vmem:[%s289 + $0x40] sm:$0xff]
        %v504 = vld [vmem:[%s289 + $0x48] sm:$0xff]
        %v505 = vld [vmem:[%s289 + $0x50] sm:$0xff]
        %v506 = vld [vmem:[%s289 + $0x58] sm:$0xff]
        %v507 = vld [vmem:[%s289 + $0x60] sm:$0xff]
        %v508 = vld [vmem:[%s289 + $0x68] sm:$0xff]
        %v509 = vld [vmem:[%s289 + $0x70] sm:$0xff]
        %v510 = vld [vmem:[%s289 + $0x78] sm:$0xff]
        %v511 = vld [vmem:[%s289 + $0x80] sm:$0xff]
        %v512 = vld [vmem:[%s289 + $0x88] sm:$0xff]
        %v513 = vld [vmem:[%s289 + $0x90] sm:$0xff]
        %v514 = vld [vmem:[%s289 + $0x98] sm:$0xff]
        %v515 = vld [vmem:[%s289 + $0xa0] sm:$0xff]
        %v516 = vld [vmem:[%s289 + $0xa8] sm:$0xff]
        %v517 = vld [vmem:[%s289 + $0xb0] sm:$0xff]
        %v518 = vld [vmem:[%s289 + $0xb8] sm:$0xff]
        %v519 = vld [vmem:[%s289 + $0xc0] sm:$0xff]
        %v520 = vld [vmem:[%s289 + $0xc8] sm:$0xff]
        %v521 = vld [vmem:[%s289 + $0xd0] sm:$0xff]
        %v522 = vld [vmem:[%s289 + $0xd8] sm:$0xff]
        %v523 = vld [vmem:[%s289 + $0xe0] sm:$0xff]
        %v524 = vld [vmem:[%s289 + $0xe8] sm:$0xff]
        %v525 = vld [vmem:[%s289 + $0xf0] sm:$0xff]
        %v526 = vld [vmem:[%s289 + $0xf8] sm:$0xff]
        %v527 = vld [vmem:[%s289 + $0x100] sm:$0xff]
        %v528 = vld [vmem:[%s289 + $0x108] sm:$0xff]
        %v529 = vld [vmem:[%s289 + $0x110] sm:$0xff]
        %v530 = vld [vmem:[%s289 + $0x118] sm:$0xff]
        %v531 = vld [vmem:[%s289 + $0x120] sm:$0xff]
        %v532 = vld [vmem:[%s289 + $0x128] sm:$0xff]
        %v533 = vld [vmem:[%s289 + $0x130] sm:$0xff]
        %v534 = vld [vmem:[%s289 + $0x138] sm:$0xff]
        %v535 = vld [vmem:[%s289 + $0x140] sm:$0xff]
        %v536 = vld [vmem:[%s289 + $0x148] sm:$0xff]
        %v537 = vld [vmem:[%s289 + $0x150] sm:$0xff]
        %v538 = vld [vmem:[%s289 + $0x158] sm:$0xff]
        %v539 = vld [vmem:[%s289 + $0x160] sm:$0xff]
        %v540 = vld [vmem:[%s289 + $0x168] sm:$0xff]
        %v541 = vld [vmem:[%s289 + $0x170] sm:$0xff]
        %v542 = vld [vmem:[%s289 + $0x178] sm:$0xff]
        %v543 = vld [vmem:[%s289 + $0x180] sm:$0xff]
        %v544 = vld [vmem:[%s289 + $0x188] sm:$0xff]
        %v545 = vld [vmem:[%s289 + $0x190] sm:$0xff]
        %v546 = vld [vmem:[%s289 + $0x198] sm:$0xff]
        %v547 = vld [vmem:[%s289 + $0x1a0] sm:$0xff]
        %v548 = vld [vmem:[%s289 + $0x1a8] sm:$0xff]
        %v549 = vld [vmem:[%s289 + $0x1b0] sm:$0xff]
        %v550 = vld [vmem:[%s289 + $0x1b8] sm:$0xff]
        %v551 = vld [vmem:[%s289 + $0x1c0] sm:$0xff]
        %v552 = vld [vmem:[%s289 + $0x1c8] sm:$0xff]
        %v553 = vld [vmem:[%s289 + $0x1d0] sm:$0xff]
        %v554 = vld [vmem:[%s289 + $0x1d8] sm:$0xff]
        %v555 = vld [vmem:[%s289 + $0x1e0] sm:$0xff]
        %v556 = vld [vmem:[%s289 + $0x1e8] sm:$0xff]
        %v557 = vld [vmem:[%s289 + $0x1f0] sm:$0xff]
        %v558 = vld [vmem:[%s289 + $0x1f8] sm:$0xff]
        %s559 = sadd.s32 %s25, %s26
        %s560 = smul.u32 %s559, 512
        %v561 = vlaneseq
        %v562 = vshrl.u32 %v561, 7
        %v563 = vadd.s32 %v562, 8
        %v564 = vadd.s32 %v562, 16
        %v565 = vadd.s32 %v562, 24
        %v566 = vadd.s32 %v562, 32
        %v567 = vadd.s32 %v562, 40
        %v568 = vadd.s32 %v562, 48
        %v569 = vadd.s32 %v562, 56
        %v570 = vadd.s32 %v562, 64
        %v571 = vadd.s32 %v562, 72
        %v572 = vadd.s32 %v562, 80
        %v573 = vadd.s32 %v562, 88
        %v574 = vadd.s32 %v562, 96
        %v575 = vadd.s32 %v562, 104
        %v576 = vadd.s32 %v562, 112
        %v577 = vadd.s32 %v562, 120
        %v578 = vadd.s32 %v562, 128
        %v579 = vadd.s32 %v562, 136
        %v580 = vadd.s32 %v562, 144
        %v581 = vadd.s32 %v562, 152
        %v582 = vadd.s32 %v562, 160
        %v583 = vadd.s32 %v562, 168
        %v584 = vadd.s32 %v562, 176
        %v585 = vadd.s32 %v562, 184
        %v586 = vadd.s32 %v562, 192
        %v587 = vadd.s32 %v562, 200
        %v588 = vadd.s32 %v562, 208
        %v589 = vadd.s32 %v562, 216
        %v590 = vadd.s32 %v562, 224
        %v591 = vadd.s32 %v562, 232
        %v592 = vadd.s32 %v562, 240
        %v593 = vadd.s32 %v562, 248
        %v594 = vadd.s32 %v562, 256
        %v595 = vadd.s32 %v562, 264
        %v596 = vadd.s32 %v562, 272
        %v597 = vadd.s32 %v562, 280
        %v598 = vadd.s32 %v562, 288
        %v599 = vadd.s32 %v562, 296
        %v600 = vadd.s32 %v562, 304
        %v601 = vadd.s32 %v562, 312
        %v602 = vadd.s32 %v562, 320
        %v603 = vadd.s32 %v562, 328
        %v604 = vadd.s32 %v562, 336
        %v605 = vadd.s32 %v562, 344
        %v606 = vadd.s32 %v562, 352
        %v607 = vadd.s32 %v562, 360
        %v608 = vadd.s32 %v562, 368
        %v609 = vadd.s32 %v562, 376
        %v610 = vadd.s32 %v562, 384
        %v611 = vadd.s32 %v562, 392
        %v612 = vadd.s32 %v562, 400
        %v613 = vadd.s32 %v562, 408
        %v614 = vadd.s32 %v562, 416
        %v615 = vadd.s32 %v562, 424
        %v616 = vadd.s32 %v562, 432
        %v617 = vadd.s32 %v562, 440
        %v618 = vadd.s32 %v562, 448
        %v619 = vadd.s32 %v562, 456
        %v620 = vadd.s32 %v562, 464
        %v621 = vadd.s32 %v562, 472
        %v622 = vadd.s32 %v562, 480
        %v623 = vadd.s32 %v562, 488
        %v624 = vadd.s32 %v562, 496
        %v625 = vadd.s32 %v562, 504
        %v626 = vstv %s560
        %v627 = vadd.s32 %v626, %v562
        %v628 = vadd.s32 %v626, %v563
        %v629 = vadd.s32 %v626, %v564
        %v630 = vadd.s32 %v626, %v565
        %v631 = vadd.s32 %v626, %v566
        %v632 = vadd.s32 %v626, %v567
        %v633 = vadd.s32 %v626, %v568
        %v634 = vadd.s32 %v626, %v569
        %v635 = vadd.s32 %v626, %v570
        %v636 = vadd.s32 %v626, %v571
        %v637 = vadd.s32 %v626, %v572
        %v638 = vadd.s32 %v626, %v573
        %v639 = vadd.s32 %v626, %v574
        %v640 = vadd.s32 %v626, %v575
        %v641 = vadd.s32 %v626, %v576
        %v642 = vadd.s32 %v626, %v577
        %v643 = vadd.s32 %v626, %v578
        %v644 = vadd.s32 %v626, %v579
        %v645 = vadd.s32 %v626, %v580
        %v646 = vadd.s32 %v626, %v581
        %v647 = vadd.s32 %v626, %v582
        %v648 = vadd.s32 %v626, %v583
        %v649 = vadd.s32 %v626, %v584
        %v650 = vadd.s32 %v626, %v585
        %v651 = vadd.s32 %v626, %v586
        %v652 = vadd.s32 %v626, %v587
        %v653 = vadd.s32 %v626, %v588
        %v654 = vadd.s32 %v626, %v589
        %v655 = vadd.s32 %v626, %v590
        %v656 = vadd.s32 %v626, %v591
        %v657 = vadd.s32 %v626, %v592
        %v658 = vadd.s32 %v626, %v593
        %v659 = vadd.s32 %v626, %v594
        %v660 = vadd.s32 %v626, %v595
        %v661 = vadd.s32 %v626, %v596
        %v662 = vadd.s32 %v626, %v597
        %v663 = vadd.s32 %v626, %v598
        %v664 = vadd.s32 %v626, %v599
        %v665 = vadd.s32 %v626, %v600
        %v666 = vadd.s32 %v626, %v601
        %v667 = vadd.s32 %v626, %v602
        %v668 = vadd.s32 %v626, %v603
        %v669 = vadd.s32 %v626, %v604
        %v670 = vadd.s32 %v626, %v605
        %v671 = vadd.s32 %v626, %v606
        %v672 = vadd.s32 %v626, %v607
        %v673 = vadd.s32 %v626, %v608
        %v674 = vadd.s32 %v626, %v609
        %v675 = vadd.s32 %v626, %v610
        %v676 = vadd.s32 %v626, %v611
        %v677 = vadd.s32 %v626, %v612
        %v678 = vadd.s32 %v626, %v613
        %v679 = vadd.s32 %v626, %v614
        %v680 = vadd.s32 %v626, %v615
        %v681 = vadd.s32 %v626, %v616
        %v682 = vadd.s32 %v626, %v617
        %v683 = vadd.s32 %v626, %v618
        %v684 = vadd.s32 %v626, %v619
        %v685 = vadd.s32 %v626, %v620
        %v686 = vadd.s32 %v626, %v621
        %v687 = vadd.s32 %v626, %v622
        %v688 = vadd.s32 %v626, %v623
        %v689 = vadd.s32 %v626, %v624
        %v690 = vadd.s32 %v626, %v625
        %vm691 = vcmp.lt.s32.totalorder %v627, 1000
        %vm692 = vcmp.lt.s32.totalorder %v628, 1000
        %vm693 = vcmp.lt.s32.totalorder %v629, 1000
        %vm694 = vcmp.lt.s32.totalorder %v630, 1000
        %vm695 = vcmp.lt.s32.totalorder %v631, 1000
        %vm696 = vcmp.lt.s32.totalorder %v632, 1000
        %vm697 = vcmp.lt.s32.totalorder %v633, 1000
        %vm698 = vcmp.lt.s32.totalorder %v634, 1000
        %vm699 = vcmp.lt.s32.totalorder %v635, 1000
        %vm700 = vcmp.lt.s32.totalorder %v636, 1000
        %vm701 = vcmp.lt.s32.totalorder %v637, 1000
        %vm702 = vcmp.lt.s32.totalorder %v638, 1000
        %vm703 = vcmp.lt.s32.totalorder %v639, 1000
        %vm704 = vcmp.lt.s32.totalorder %v640, 1000
        %vm705 = vcmp.lt.s32.totalorder %v641, 1000
        %vm706 = vcmp.lt.s32.totalorder %v642, 1000
        %vm707 = vcmp.lt.s32.totalorder %v643, 1000
        %vm708 = vcmp.lt.s32.totalorder %v644, 1000
        %vm709 = vcmp.lt.s32.totalorder %v645, 1000
        %vm710 = vcmp.lt.s32.totalorder %v646, 1000
        %vm711 = vcmp.lt.s32.totalorder %v647, 1000
        %vm712 = vcmp.lt.s32.totalorder %v648, 1000
        %vm713 = vcmp.lt.s32.totalorder %v649, 1000
        %vm714 = vcmp.lt.s32.totalorder %v650, 1000
        %vm715 = vcmp.lt.s32.totalorder %v651, 1000
        %vm716 = vcmp.lt.s32.totalorder %v652, 1000
        %vm717 = vcmp.lt.s32.totalorder %v653, 1000
        %vm718 = vcmp.lt.s32.totalorder %v654, 1000
        %vm719 = vcmp.lt.s32.totalorder %v655, 1000
        %vm720 = vcmp.lt.s32.totalorder %v656, 1000
        %vm721 = vcmp.lt.s32.totalorder %v657, 1000
        %vm722 = vcmp.lt.s32.totalorder %v658, 1000
        %vm723 = vcmp.lt.s32.totalorder %v659, 1000
        %vm724 = vcmp.lt.s32.totalorder %v660, 1000
        %vm725 = vcmp.lt.s32.totalorder %v661, 1000
        %vm726 = vcmp.lt.s32.totalorder %v662, 1000
        %vm727 = vcmp.lt.s32.totalorder %v663, 1000
        %vm728 = vcmp.lt.s32.totalorder %v664, 1000
        %vm729 = vcmp.lt.s32.totalorder %v665, 1000
        %vm730 = vcmp.lt.s32.totalorder %v666, 1000
        %vm731 = vcmp.lt.s32.totalorder %v667, 1000
        %vm732 = vcmp.lt.s32.totalorder %v668, 1000
        %vm733 = vcmp.lt.s32.totalorder %v669, 1000
        %vm734 = vcmp.lt.s32.totalorder %v670, 1000
        %vm735 = vcmp.lt.s32.totalorder %v671, 1000
        %vm736 = vcmp.lt.s32.totalorder %v672, 1000
        %vm737 = vcmp.lt.s32.totalorder %v673, 1000
        %vm738 = vcmp.lt.s32.totalorder %v674, 1000
        %vm739 = vcmp.lt.s32.totalorder %v675, 1000
        %vm740 = vcmp.lt.s32.totalorder %v676, 1000
        %vm741 = vcmp.lt.s32.totalorder %v677, 1000
        %vm742 = vcmp.lt.s32.totalorder %v678, 1000
        %vm743 = vcmp.lt.s32.totalorder %v679, 1000
        %vm744 = vcmp.lt.s32.totalorder %v680, 1000
        %vm745 = vcmp.lt.s32.totalorder %v681, 1000
        %vm746 = vcmp.lt.s32.totalorder %v682, 1000
        %vm747 = vcmp.lt.s32.totalorder %v683, 1000
        %vm748 = vcmp.lt.s32.totalorder %v684, 1000
        %vm749 = vcmp.lt.s32.totalorder %v685, 1000
        %vm750 = vcmp.lt.s32.totalorder %v686, 1000
        %vm751 = vcmp.lt.s32.totalorder %v687, 1000
        %vm752 = vcmp.lt.s32.totalorder %v688, 1000
        %vm753 = vcmp.lt.s32.totalorder %v689, 1000
        %vm754 = vcmp.lt.s32.totalorder %v690, 1000
        %vm755 = vcmp.ne.s32.totalorder %v495, 255
        %vm756 = vcmp.ne.s32.totalorder %v496, 255
        %vm757 = vcmp.ne.s32.totalorder %v497, 255
        %vm758 = vcmp.ne.s32.totalorder %v498, 255
        %vm759 = vcmp.ne.s32.totalorder %v499, 255
        %vm760 = vcmp.ne.s32.totalorder %v500, 255
        %vm761 = vcmp.ne.s32.totalorder %v501, 255
        %vm762 = vcmp.ne.s32.totalorder %v502, 255
        %vm763 = vcmp.ne.s32.totalorder %v503, 255
        %vm764 = vcmp.ne.s32.totalorder %v504, 255
        %vm765 = vcmp.ne.s32.totalorder %v505, 255
        %vm766 = vcmp.ne.s32.totalorder %v506, 255
        %vm767 = vcmp.ne.s32.totalorder %v507, 255
        %vm768 = vcmp.ne.s32.totalorder %v508, 255
        %vm769 = vcmp.ne.s32.totalorder %v509, 255
        %vm770 = vcmp.ne.s32.totalorder %v510, 255
        %vm771 = vcmp.ne.s32.totalorder %v511, 255
        %vm772 = vcmp.ne.s32.totalorder %v512, 255
        %vm773 = vcmp.ne.s32.totalorder %v513, 255
        %vm774 = vcmp.ne.s32.totalorder %v514, 255
        %vm775 = vcmp.ne.s32.totalorder %v515, 255
        %vm776 = vcmp.ne.s32.totalorder %v516, 255
        %vm777 = vcmp.ne.s32.totalorder %v517, 255
        %vm778 = vcmp.ne.s32.totalorder %v518, 255
        %vm779 = vcmp.ne.s32.totalorder %v519, 255
        %vm780 = vcmp.ne.s32.totalorder %v520, 255
        %vm781 = vcmp.ne.s32.totalorder %v521, 255
        %vm782 = vcmp.ne.s32.totalorder %v522, 255
        %vm783 = vcmp.ne.s32.totalorder %v523, 255
        %vm784 = vcmp.ne.s32.totalorder %v524, 255
        %vm785 = vcmp.ne.s32.totalorder %v525, 255
        %vm786 = vcmp.ne.s32.totalorder %v526, 255
        %vm787 = vcmp.ne.s32.totalorder %v527, 255
        %vm788 = vcmp.ne.s32.totalorder %v528, 255
        %vm789 = vcmp.ne.s32.totalorder %v529, 255
        %vm790 = vcmp.ne.s32.totalorder %v530, 255
        %vm791 = vcmp.ne.s32.totalorder %v531, 255
        %vm792 = vcmp.ne.s32.totalorder %v532, 255
        %vm793 = vcmp.ne.s32.totalorder %v533, 255
        %vm794 = vcmp.ne.s32.totalorder %v534, 255
        %vm795 = vcmp.ne.s32.totalorder %v535, 255
        %vm796 = vcmp.ne.s32.totalorder %v536, 255
        %vm797 = vcmp.ne.s32.totalorder %v537, 255
        %vm798 = vcmp.ne.s32.totalorder %v538, 255
        %vm799 = vcmp.ne.s32.totalorder %v539, 255
        %vm800 = vcmp.ne.s32.totalorder %v540, 255
        %vm801 = vcmp.ne.s32.totalorder %v541, 255
        %vm802 = vcmp.ne.s32.totalorder %v542, 255
        %vm803 = vcmp.ne.s32.totalorder %v543, 255
        %vm804 = vcmp.ne.s32.totalorder %v544, 255
        %vm805 = vcmp.ne.s32.totalorder %v545, 255
        %vm806 = vcmp.ne.s32.totalorder %v546, 255
        %vm807 = vcmp.ne.s32.totalorder %v547, 255
        %vm808 = vcmp.ne.s32.totalorder %v548, 255
        %vm809 = vcmp.ne.s32.totalorder %v549, 255
        %vm810 = vcmp.ne.s32.totalorder %v550, 255
        %vm811 = vcmp.ne.s32.totalorder %v551, 255
        %vm812 = vcmp.ne.s32.totalorder %v552, 255
        %vm813 = vcmp.ne.s32.totalorder %v553, 255
        %vm814 = vcmp.ne.s32.totalorder %v554, 255
        %vm815 = vcmp.ne.s32.totalorder %v555, 255
        %vm816 = vcmp.ne.s32.totalorder %v556, 255
        %vm817 = vcmp.ne.s32.totalorder %v557, 255
        %vm818 = vcmp.ne.s32.totalorder %v558, 255
        %vm819 = vmand %vm691, %vm755
        %vm820 = vmand %vm692, %vm756
        %vm821 = vmand %vm693, %vm757
        %vm822 = vmand %vm694, %vm758
        %vm823 = vmand %vm695, %vm759
        %vm824 = vmand %vm696, %vm760
        %vm825 = vmand %vm697, %vm761
        %vm826 = vmand %vm698, %vm762
        %vm827 = vmand %vm699, %vm763
        %vm828 = vmand %vm700, %vm764
        %vm829 = vmand %vm701, %vm765
        %vm830 = vmand %vm702, %vm766
        %vm831 = vmand %vm703, %vm767
        %vm832 = vmand %vm704, %vm768
        %vm833 = vmand %vm705, %vm769
        %vm834 = vmand %vm706, %vm770
        %vm835 = vmand %vm707, %vm771
        %vm836 = vmand %vm708, %vm772
        %vm837 = vmand %vm709, %vm773
        %vm838 = vmand %vm710, %vm774
        %vm839 = vmand %vm711, %vm775
        %vm840 = vmand %vm712, %vm776
        %vm841 = vmand %vm713, %vm777
        %vm842 = vmand %vm714, %vm778
        %vm843 = vmand %vm715, %vm779
        %vm844 = vmand %vm716, %vm780
        %vm845 = vmand %vm717, %vm781
        %vm846 = vmand %vm718, %vm782
        %vm847 = vmand %vm719, %vm783
        %vm848 = vmand %vm720, %vm784
        %vm849 = vmand %vm721, %vm785
        %vm850 = vmand %vm722, %vm786
        %vm851 = vmand %vm723, %vm787
        %vm852 = vmand %vm724, %vm788
        %vm853 = vmand %vm725, %vm789
        %vm854 = vmand %vm726, %vm790
        %vm855 = vmand %vm727, %vm791
        %vm856 = vmand %vm728, %vm792
        %vm857 = vmand %vm729, %vm793
        %vm858 = vmand %vm730, %vm794
        %vm859 = vmand %vm731, %vm795
        %vm860 = vmand %vm732, %vm796
        %vm861 = vmand %vm733, %vm797
        %vm862 = vmand %vm734, %vm798
        %vm863 = vmand %vm735, %vm799
        %vm864 = vmand %vm736, %vm800
        %vm865 = vmand %vm737, %vm801
        %vm866 = vmand %vm738, %vm802
        %vm867 = vmand %vm739, %vm803
        %vm868 = vmand %vm740, %vm804
        %vm869 = vmand %vm741, %vm805
        %vm870 = vmand %vm742, %vm806
        %vm871 = vmand %vm743, %vm807
        %vm872 = vmand %vm744, %vm808
        %vm873 = vmand %vm745, %vm809
        %vm874 = vmand %vm746, %vm810
        %vm875 = vmand %vm747, %vm811
        %vm876 = vmand %vm748, %vm812
        %vm877 = vmand %vm749, %vm813
        %vm878 = vmand %vm750, %vm814
        %vm879 = vmand %vm751, %vm815
        %vm880 = vmand %vm752, %vm816
        %vm881 = vmand %vm753, %vm817
        %vm882 = vmand %vm754, %vm818
        %v883 = vlaneseq
        %v884 = vand.u32 %v883, 127
        %885 = vset.pattern.permute.xlu0 0
        %886 = vperm.xlu0 %885, %v495
        %v887 = vpop.permute.xlu0 %886
        %888 = vset.pattern.permute.xlu0 0
        %889 = vperm.xlu0 %888, %v496
        %v890 = vpop.permute.xlu0 %889
        %891 = vset.pattern.permute.xlu0 0
        %892 = vperm.xlu0 %891, %v497
        %v893 = vpop.permute.xlu0 %892
        %894 = vset.pattern.permute.xlu0 0
        %895 = vperm.xlu0 %894, %v498
        %v896 = vpop.permute.xlu0 %895
        %897 = vset.pattern.permute.xlu0 0
        %898 = vperm.xlu0 %897, %v499
        %v899 = vpop.permute.xlu0 %898
        %900 = vset.pattern.permute.xlu0 0
        %901 = vperm.xlu0 %900, %v500
        %v902 = vpop.permute.xlu0 %901
        %903 = vset.pattern.permute.xlu0 0
        %904 = vperm.xlu0 %903, %v501
        %v905 = vpop.permute.xlu0 %904
        %906 = vset.pattern.permute.xlu0 0
        %907 = vperm.xlu0 %906, %v502
        %v908 = vpop.permute.xlu0 %907
        %909 = vset.pattern.permute.xlu0 0
        %910 = vperm.xlu0 %909, %v503
        %v911 = vpop.permute.xlu0 %910
        %912 = vset.pattern.permute.xlu0 0
        %913 = vperm.xlu0 %912, %v504
        %v914 = vpop.permute.xlu0 %913
        %915 = vset.pattern.permute.xlu0 0
        %916 = vperm.xlu0 %915, %v505
        %v917 = vpop.permute.xlu0 %916
        %918 = vset.pattern.permute.xlu0 0
        %919 = vperm.xlu0 %918, %v506
        %v920 = vpop.permute.xlu0 %919
        %921 = vset.pattern.permute.xlu0 0
        %922 = vperm.xlu0 %921, %v507
        %v923 = vpop.permute.xlu0 %922
        %924 = vset.pattern.permute.xlu0 0
        %925 = vperm.xlu0 %924, %v508
        %v926 = vpop.permute.xlu0 %925
        %927 = vset.pattern.permute.xlu0 0
        %928 = vperm.xlu0 %927, %v509
        %v929 = vpop.permute.xlu0 %928
        %930 = vset.pattern.permute.xlu0 0
        %931 = vperm.xlu0 %930, %v510
        %v932 = vpop.permute.xlu0 %931
        %933 = vset.pattern.permute.xlu0 0
        %934 = vperm.xlu0 %933, %v511
        %v935 = vpop.permute.xlu0 %934
        %936 = vset.pattern.permute.xlu0 0
        %937 = vperm.xlu0 %936, %v512
        %v938 = vpop.permute.xlu0 %937
        %939 = vset.pattern.permute.xlu0 0
        %940 = vperm.xlu0 %939, %v513
        %v941 = vpop.permute.xlu0 %940
        %942 = vset.pattern.permute.xlu0 0
        %943 = vperm.xlu0 %942, %v514
        %v944 = vpop.permute.xlu0 %943
        %945 = vset.pattern.permute.xlu0 0
        %946 = vperm.xlu0 %945, %v515
        %v947 = vpop.permute.xlu0 %946
        %948 = vset.pattern.permute.xlu0 0
        %949 = vperm.xlu0 %948, %v516
        %v950 = vpop.permute.xlu0 %949
        %951 = vset.pattern.permute.xlu0 0
        %952 = vperm.xlu0 %951, %v517
        %v953 = vpop.permute.xlu0 %952
        %954 = vset.pattern.permute.xlu0 0
        %955 = vperm.xlu0 %954, %v518
        %v956 = vpop.permute.xlu0 %955
        %957 = vset.pattern.permute.xlu0 0
        %958 = vperm.xlu0 %957, %v519
        %v959 = vpop.permute.xlu0 %958
        %960 = vset.pattern.permute.xlu0 0
        %961 = vperm.xlu0 %960, %v520
        %v962 = vpop.permute.xlu0 %961
        %963 = vset.pattern.permute.xlu0 0
        %964 = vperm.xlu0 %963, %v521
        %v965 = vpop.permute.xlu0 %964
        %966 = vset.pattern.permute.xlu0 0
        %967 = vperm.xlu0 %966, %v522
        %v968 = vpop.permute.xlu0 %967
        %969 = vset.pattern.permute.xlu0 0
        %970 = vperm.xlu0 %969, %v523
        %v971 = vpop.permute.xlu0 %970
        %972 = vset.pattern.permute.xlu0 0
        %973 = vperm.xlu0 %972, %v524
        %v974 = vpop.permute.xlu0 %973
        %975 = vset.pattern.permute.xlu0 0
        %976 = vperm.xlu0 %975, %v525
        %v977 = vpop.permute.xlu0 %976
        %978 = vset.pattern.permute.xlu0 0
        %979 = vperm.xlu0 %978, %v526
        %v980 = vpop.permute.xlu0 %979
        %981 = vset.pattern.permute.xlu0 0
        %982 = vperm.xlu0 %981, %v527
        %v983 = vpop.permute.xlu0 %982
        %984 = vset.pattern.permute.xlu0 0
        %985 = vperm.xlu0 %984, %v528
        %v986 = vpop.permute.xlu0 %985
        %987 = vset.pattern.permute.xlu0 0
        %988 = vperm.xlu0 %987, %v529
        %v989 = vpop.permute.xlu0 %988
        %990 = vset.pattern.permute.xlu0 0
        %991 = vperm.xlu0 %990, %v530
        %v992 = vpop.permute.xlu0 %991
        %993 = vset.pattern.permute.xlu0 0
        %994 = vperm.xlu0 %993, %v531
        %v995 = vpop.permute.xlu0 %994
        %996 = vset.pattern.permute.xlu0 0
        %997 = vperm.xlu0 %996, %v532
        %v998 = vpop.permute.xlu0 %997
        %999 = vset.pattern.permute.xlu0 0
        %1000 = vperm.xlu0 %999, %v533
        %v1001 = vpop.permute.xlu0 %1000
        %1002 = vset.pattern.permute.xlu0 0
        %1003 = vperm.xlu0 %1002, %v534
        %v1004 = vpop.permute.xlu0 %1003
        %1005 = vset.pattern.permute.xlu0 0
        %1006 = vperm.xlu0 %1005, %v535
        %v1007 = vpop.permute.xlu0 %1006
        %1008 = vset.pattern.permute.xlu0 0
        %1009 = vperm.xlu0 %1008, %v536
        %v1010 = vpop.permute.xlu0 %1009
        %1011 = vset.pattern.permute.xlu0 0
        %1012 = vperm.xlu0 %1011, %v537
        %v1013 = vpop.permute.xlu0 %1012
        %1014 = vset.pattern.permute.xlu0 0
        %1015 = vperm.xlu0 %1014, %v538
        %v1016 = vpop.permute.xlu0 %1015
        %1017 = vset.pattern.permute.xlu0 0
        %1018 = vperm.xlu0 %1017, %v539
        %v1019 = vpop.permute.xlu0 %1018
        %1020 = vset.pattern.permute.xlu0 0
        %1021 = vperm.xlu0 %1020, %v540
        %v1022 = vpop.permute.xlu0 %1021
        %1023 = vset.pattern.permute.xlu0 0
        %1024 = vperm.xlu0 %1023, %v541
        %v1025 = vpop.permute.xlu0 %1024
        %1026 = vset.pattern.permute.xlu0 0
        %1027 = vperm.xlu0 %1026, %v542
        %v1028 = vpop.permute.xlu0 %1027
        %1029 = vset.pattern.permute.xlu0 0
        %1030 = vperm.xlu0 %1029, %v543
        %v1031 = vpop.permute.xlu0 %1030
        %1032 = vset.pattern.permute.xlu0 0
        %1033 = vperm.xlu0 %1032, %v544
        %v1034 = vpop.permute.xlu0 %1033
        %1035 = vset.pattern.permute.xlu0 0
        %1036 = vperm.xlu0 %1035, %v545
        %v1037 = vpop.permute.xlu0 %1036
        %1038 = vset.pattern.permute.xlu0 0
        %1039 = vperm.xlu0 %1038, %v546
        %v1040 = vpop.permute.xlu0 %1039
        %1041 = vset.pattern.permute.xlu0 0
        %1042 = vperm.xlu0 %1041, %v547
        %v1043 = vpop.permute.xlu0 %1042
        %1044 = vset.pattern.permute.xlu0 0
        %1045 = vperm.xlu0 %1044, %v548
        %v1046 = vpop.permute.xlu0 %1045
        %1047 = vset.pattern.permute.xlu0 0
        %1048 = vperm.xlu0 %1047, %v549
        %v1049 = vpop.permute.xlu0 %1048
        %1050 = vset.pattern.permute.xlu0 0
        %1051 = vperm.xlu0 %1050, %v550
        %v1052 = vpop.permute.xlu0 %1051
        %1053 = vset.pattern.permute.xlu0 0
        %1054 = vperm.xlu0 %1053, %v551
        %v1055 = vpop.permute.xlu0 %1054
        %1056 = vset.pattern.permute.xlu0 0
        %1057 = vperm.xlu0 %1056, %v552
        %v1058 = vpop.permute.xlu0 %1057
        %1059 = vset.pattern.permute.xlu0 0
        %1060 = vperm.xlu0 %1059, %v553
        %v1061 = vpop.permute.xlu0 %1060
        %1062 = vset.pattern.permute.xlu0 0
        %1063 = vperm.xlu0 %1062, %v554
        %v1064 = vpop.permute.xlu0 %1063
        %1065 = vset.pattern.permute.xlu0 0
        %1066 = vperm.xlu0 %1065, %v555
        %v1067 = vpop.permute.xlu0 %1066
        %1068 = vset.pattern.permute.xlu0 0
        %1069 = vperm.xlu0 %1068, %v556
        %v1070 = vpop.permute.xlu0 %1069
        %1071 = vset.pattern.permute.xlu0 0
        %1072 = vperm.xlu0 %1071, %v557
        %v1073 = vpop.permute.xlu0 %1072
        %1074 = vset.pattern.permute.xlu0 0
        %1075 = vperm.xlu0 %1074, %v558
        %v1076 = vpop.permute.xlu0 %1075
        %vm1077 = vcmp.eq.s32.totalorder %v884, %v887
        %vm1078 = vcmp.eq.s32.totalorder %v884, %v890
        %vm1079 = vcmp.eq.s32.totalorder %v884, %v893
        %vm1080 = vcmp.eq.s32.totalorder %v884, %v896
        %vm1081 = vcmp.eq.s32.totalorder %v884, %v899
        %vm1082 = vcmp.eq.s32.totalorder %v884, %v902
        %vm1083 = vcmp.eq.s32.totalorder %v884, %v905
        %vm1084 = vcmp.eq.s32.totalorder %v884, %v908
        %vm1085 = vcmp.eq.s32.totalorder %v884, %v911
        %vm1086 = vcmp.eq.s32.totalorder %v884, %v914
        %vm1087 = vcmp.eq.s32.totalorder %v884, %v917
        %vm1088 = vcmp.eq.s32.totalorder %v884, %v920
        %vm1089 = vcmp.eq.s32.totalorder %v884, %v923
        %vm1090 = vcmp.eq.s32.totalorder %v884, %v926
        %vm1091 = vcmp.eq.s32.totalorder %v884, %v929
        %vm1092 = vcmp.eq.s32.totalorder %v884, %v932
        %vm1093 = vcmp.eq.s32.totalorder %v884, %v935
        %vm1094 = vcmp.eq.s32.totalorder %v884, %v938
        %vm1095 = vcmp.eq.s32.totalorder %v884, %v941
        %vm1096 = vcmp.eq.s32.totalorder %v884, %v944
        %vm1097 = vcmp.eq.s32.totalorder %v884, %v947
        %vm1098 = vcmp.eq.s32.totalorder %v884, %v950
        %vm1099 = vcmp.eq.s32.totalorder %v884, %v953
        %vm1100 = vcmp.eq.s32.totalorder %v884, %v956
        %vm1101 = vcmp.eq.s32.totalorder %v884, %v959
        %vm1102 = vcmp.eq.s32.totalorder %v884, %v962
        %vm1103 = vcmp.eq.s32.totalorder %v884, %v965
        %vm1104 = vcmp.eq.s32.totalorder %v884, %v968
        %vm1105 = vcmp.eq.s32.totalorder %v884, %v971
        %vm1106 = vcmp.eq.s32.totalorder %v884, %v974
        %vm1107 = vcmp.eq.s32.totalorder %v884, %v977
        %vm1108 = vcmp.eq.s32.totalorder %v884, %v980
        %vm1109 = vcmp.eq.s32.totalorder %v884, %v983
        %vm1110 = vcmp.eq.s32.totalorder %v884, %v986
        %vm1111 = vcmp.eq.s32.totalorder %v884, %v989
        %vm1112 = vcmp.eq.s32.totalorder %v884, %v992
        %vm1113 = vcmp.eq.s32.totalorder %v884, %v995
        %vm1114 = vcmp.eq.s32.totalorder %v884, %v998
        %vm1115 = vcmp.eq.s32.totalorder %v884, %v1001
        %vm1116 = vcmp.eq.s32.totalorder %v884, %v1004
        %vm1117 = vcmp.eq.s32.totalorder %v884, %v1007
        %vm1118 = vcmp.eq.s32.totalorder %v884, %v1010
        %vm1119 = vcmp.eq.s32.totalorder %v884, %v1013
        %vm1120 = vcmp.eq.s32.totalorder %v884, %v1016
        %vm1121 = vcmp.eq.s32.totalorder %v884, %v1019
        %vm1122 = vcmp.eq.s32.totalorder %v884, %v1022
        %vm1123 = vcmp.eq.s32.totalorder %v884, %v1025
        %vm1124 = vcmp.eq.s32.totalorder %v884, %v1028
        %vm1125 = vcmp.eq.s32.totalorder %v884, %v1031
        %vm1126 = vcmp.eq.s32.totalorder %v884, %v1034
        %vm1127 = vcmp.eq.s32.totalorder %v884, %v1037
        %vm1128 = vcmp.eq.s32.totalorder %v884, %v1040
        %vm1129 = vcmp.eq.s32.totalorder %v884, %v1043
        %vm1130 = vcmp.eq.s32.totalorder %v884, %v1046
        %vm1131 = vcmp.eq.s32.totalorder %v884, %v1049
        %vm1132 = vcmp.eq.s32.totalorder %v884, %v1052
        %vm1133 = vcmp.eq.s32.totalorder %v884, %v1055
        %vm1134 = vcmp.eq.s32.totalorder %v884, %v1058
        %vm1135 = vcmp.eq.s32.totalorder %v884, %v1061
        %vm1136 = vcmp.eq.s32.totalorder %v884, %v1064
        %vm1137 = vcmp.eq.s32.totalorder %v884, %v1067
        %vm1138 = vcmp.eq.s32.totalorder %v884, %v1070
        %vm1139 = vcmp.eq.s32.totalorder %v884, %v1073
        %vm1140 = vcmp.eq.s32.totalorder %v884, %v1076
        %v1141 = vsel %vm819, 1, 0
        %v1142 = vsel %vm820, 1, 0
        %v1143 = vsel %vm821, 1, 0
        %v1144 = vsel %vm822, 1, 0
        %v1145 = vsel %vm823, 1, 0
        %v1146 = vsel %vm824, 1, 0
        %v1147 = vsel %vm825, 1, 0
        %v1148 = vsel %vm826, 1, 0
        %v1149 = vsel %vm827, 1, 0
        %v1150 = vsel %vm828, 1, 0
        %v1151 = vsel %vm829, 1, 0
        %v1152 = vsel %vm830, 1, 0
        %v1153 = vsel %vm831, 1, 0
        %v1154 = vsel %vm832, 1, 0
        %v1155 = vsel %vm833, 1, 0
        %v1156 = vsel %vm834, 1, 0
        %v1157 = vsel %vm835, 1, 0
        %v1158 = vsel %vm836, 1, 0
        %v1159 = vsel %vm837, 1, 0
        %v1160 = vsel %vm838, 1, 0
        %v1161 = vsel %vm839, 1, 0
        %v1162 = vsel %vm840, 1, 0
        %v1163 = vsel %vm841, 1, 0
        %v1164 = vsel %vm842, 1, 0
        %v1165 = vsel %vm843, 1, 0
        %v1166 = vsel %vm844, 1, 0
        %v1167 = vsel %vm845, 1, 0
        %v1168 = vsel %vm846, 1, 0
        %v1169 = vsel %vm847, 1, 0
        %v1170 = vsel %vm848, 1, 0
        %v1171 = vsel %vm849, 1, 0
        %v1172 = vsel %vm850, 1, 0
        %v1173 = vsel %vm851, 1, 0
        %v1174 = vsel %vm852, 1, 0
        %v1175 = vsel %vm853, 1, 0
        %v1176 = vsel %vm854, 1, 0
        %v1177 = vsel %vm855, 1, 0
        %v1178 = vsel %vm856, 1, 0
        %v1179 = vsel %vm857, 1, 0
        %v1180 = vsel %vm858, 1, 0
        %v1181 = vsel %vm859, 1, 0
        %v1182 = vsel %vm860, 1, 0
        %v1183 = vsel %vm861, 1, 0
        %v1184 = vsel %vm862, 1, 0
        %v1185 = vsel %vm863, 1, 0
        %v1186 = vsel %vm864, 1, 0
        %v1187 = vsel %vm865, 1, 0
        %v1188 = vsel %vm866, 1, 0
        %v1189 = vsel %vm867, 1, 0
        %v1190 = vsel %vm868, 1, 0
        %v1191 = vsel %vm869, 1, 0
        %v1192 = vsel %vm870, 1, 0
        %v1193 = vsel %vm871, 1, 0
        %v1194 = vsel %vm872, 1, 0
        %v1195 = vsel %vm873, 1, 0
        %v1196 = vsel %vm874, 1, 0
        %v1197 = vsel %vm875, 1, 0
        %v1198 = vsel %vm876, 1, 0
        %v1199 = vsel %vm877, 1, 0
        %v1200 = vsel %vm878, 1, 0
        %v1201 = vsel %vm879, 1, 0
        %v1202 = vsel %vm880, 1, 0
        %v1203 = vsel %vm881, 1, 0
        %v1204 = vsel %vm882, 1, 0
        %1205 = vset.pattern.permute.xlu0 0
        %1206 = vperm.xlu0 %1205, %v1141
        %v1207 = vpop.permute.xlu0 %1206
        %1208 = vset.pattern.permute.xlu0 0
        %1209 = vperm.xlu0 %1208, %v1142
        %v1210 = vpop.permute.xlu0 %1209
        %1211 = vset.pattern.permute.xlu0 0
        %1212 = vperm.xlu0 %1211, %v1143
        %v1213 = vpop.permute.xlu0 %1212
        %1214 = vset.pattern.permute.xlu0 0
        %1215 = vperm.xlu0 %1214, %v1144
        %v1216 = vpop.permute.xlu0 %1215
        %1217 = vset.pattern.permute.xlu0 0
        %1218 = vperm.xlu0 %1217, %v1145
        %v1219 = vpop.permute.xlu0 %1218
        %1220 = vset.pattern.permute.xlu0 0
        %1221 = vperm.xlu0 %1220, %v1146
        %v1222 = vpop.permute.xlu0 %1221
        %1223 = vset.pattern.permute.xlu0 0
        %1224 = vperm.xlu0 %1223, %v1147
        %v1225 = vpop.permute.xlu0 %1224
        %1226 = vset.pattern.permute.xlu0 0
        %1227 = vperm.xlu0 %1226, %v1148
        %v1228 = vpop.permute.xlu0 %1227
        %1229 = vset.pattern.permute.xlu0 0
        %1230 = vperm.xlu0 %1229, %v1149
        %v1231 = vpop.permute.xlu0 %1230
        %1232 = vset.pattern.permute.xlu0 0
        %1233 = vperm.xlu0 %1232, %v1150
        %v1234 = vpop.permute.xlu0 %1233
        %1235 = vset.pattern.permute.xlu0 0
        %1236 = vperm.xlu0 %1235, %v1151
        %v1237 = vpop.permute.xlu0 %1236
        %1238 = vset.pattern.permute.xlu0 0
        %1239 = vperm.xlu0 %1238, %v1152
        %v1240 = vpop.permute.xlu0 %1239
        %1241 = vset.pattern.permute.xlu0 0
        %1242 = vperm.xlu0 %1241, %v1153
        %v1243 = vpop.permute.xlu0 %1242
        %1244 = vset.pattern.permute.xlu0 0
        %1245 = vperm.xlu0 %1244, %v1154
        %v1246 = vpop.permute.xlu0 %1245
        %1247 = vset.pattern.permute.xlu0 0
        %1248 = vperm.xlu0 %1247, %v1155
        %v1249 = vpop.permute.xlu0 %1248
        %1250 = vset.pattern.permute.xlu0 0
        %1251 = vperm.xlu0 %1250, %v1156
        %v1252 = vpop.permute.xlu0 %1251
        %1253 = vset.pattern.permute.xlu0 0
        %1254 = vperm.xlu0 %1253, %v1157
        %v1255 = vpop.permute.xlu0 %1254
        %1256 = vset.pattern.permute.xlu0 0
        %1257 = vperm.xlu0 %1256, %v1158
        %v1258 = vpop.permute.xlu0 %1257
        %1259 = vset.pattern.permute.xlu0 0
        %1260 = vperm.xlu0 %1259, %v1159
        %v1261 = vpop.permute.xlu0 %1260
        %1262 = vset.pattern.permute.xlu0 0
        %1263 = vperm.xlu0 %1262, %v1160
        %v1264 = vpop.permute.xlu0 %1263
        %1265 = vset.pattern.permute.xlu0 0
        %1266 = vperm.xlu0 %1265, %v1161
        %v1267 = vpop.permute.xlu0 %1266
        %1268 = vset.pattern.permute.xlu0 0
        %1269 = vperm.xlu0 %1268, %v1162
        %v1270 = vpop.permute.xlu0 %1269
        %1271 = vset.pattern.permute.xlu0 0
        %1272 = vperm.xlu0 %1271, %v1163
        %v1273 = vpop.permute.xlu0 %1272
        %1274 = vset.pattern.permute.xlu0 0
        %1275 = vperm.xlu0 %1274, %v1164
        %v1276 = vpop.permute.xlu0 %1275
        %1277 = vset.pattern.permute.xlu0 0
        %1278 = vperm.xlu0 %1277, %v1165
        %v1279 = vpop.permute.xlu0 %1278
        %1280 = vset.pattern.permute.xlu0 0
        %1281 = vperm.xlu0 %1280, %v1166
        %v1282 = vpop.permute.xlu0 %1281
        %1283 = vset.pattern.permute.xlu0 0
        %1284 = vperm.xlu0 %1283, %v1167
        %v1285 = vpop.permute.xlu0 %1284
        %1286 = vset.pattern.permute.xlu0 0
        %1287 = vperm.xlu0 %1286, %v1168
        %v1288 = vpop.permute.xlu0 %1287
        %1289 = vset.pattern.permute.xlu0 0
        %1290 = vperm.xlu0 %1289, %v1169
        %v1291 = vpop.permute.xlu0 %1290
        %1292 = vset.pattern.permute.xlu0 0
        %1293 = vperm.xlu0 %1292, %v1170
        %v1294 = vpop.permute.xlu0 %1293
        %1295 = vset.pattern.permute.xlu0 0
        %1296 = vperm.xlu0 %1295, %v1171
        %v1297 = vpop.permute.xlu0 %1296
        %1298 = vset.pattern.permute.xlu0 0
        %1299 = vperm.xlu0 %1298, %v1172
        %v1300 = vpop.permute.xlu0 %1299
        %1301 = vset.pattern.permute.xlu0 0
        %1302 = vperm.xlu0 %1301, %v1173
        %v1303 = vpop.permute.xlu0 %1302
        %1304 = vset.pattern.permute.xlu0 0
        %1305 = vperm.xlu0 %1304, %v1174
        %v1306 = vpop.permute.xlu0 %1305
        %1307 = vset.pattern.permute.xlu0 0
        %1308 = vperm.xlu0 %1307, %v1175
        %v1309 = vpop.permute.xlu0 %1308
        %1310 = vset.pattern.permute.xlu0 0
        %1311 = vperm.xlu0 %1310, %v1176
        %v1312 = vpop.permute.xlu0 %1311
        %1313 = vset.pattern.permute.xlu0 0
        %1314 = vperm.xlu0 %1313, %v1177
        %v1315 = vpop.permute.xlu0 %1314
        %1316 = vset.pattern.permute.xlu0 0
        %1317 = vperm.xlu0 %1316, %v1178
        %v1318 = vpop.permute.xlu0 %1317
        %1319 = vset.pattern.permute.xlu0 0
        %1320 = vperm.xlu0 %1319, %v1179
        %v1321 = vpop.permute.xlu0 %1320
        %1322 = vset.pattern.permute.xlu0 0
        %1323 = vperm.xlu0 %1322, %v1180
        %v1324 = vpop.permute.xlu0 %1323
        %1325 = vset.pattern.permute.xlu0 0
        %1326 = vperm.xlu0 %1325, %v1181
        %v1327 = vpop.permute.xlu0 %1326
        %1328 = vset.pattern.permute.xlu0 0
        %1329 = vperm.xlu0 %1328, %v1182
        %v1330 = vpop.permute.xlu0 %1329
        %1331 = vset.pattern.permute.xlu0 0
        %1332 = vperm.xlu0 %1331, %v1183
        %v1333 = vpop.permute.xlu0 %1332
        %1334 = vset.pattern.permute.xlu0 0
        %1335 = vperm.xlu0 %1334, %v1184
        %v1336 = vpop.permute.xlu0 %1335
        %1337 = vset.pattern.permute.xlu0 0
        %1338 = vperm.xlu0 %1337, %v1185
        %v1339 = vpop.permute.xlu0 %1338
        %1340 = vset.pattern.permute.xlu0 0
        %1341 = vperm.xlu0 %1340, %v1186
        %v1342 = vpop.permute.xlu0 %1341
        %1343 = vset.pattern.permute.xlu0 0
        %1344 = vperm.xlu0 %1343, %v1187
        %v1345 = vpop.permute.xlu0 %1344
        %1346 = vset.pattern.permute.xlu0 0
        %1347 = vperm.xlu0 %1346, %v1188
        %v1348 = vpop.permute.xlu0 %1347
        %1349 = vset.pattern.permute.xlu0 0
        %1350 = vperm.xlu0 %1349, %v1189
        %v1351 = vpop.permute.xlu0 %1350
        %1352 = vset.pattern.permute.xlu0 0
        %1353 = vperm.xlu0 %1352, %v1190
        %v1354 = vpop.permute.xlu0 %1353
        %1355 = vset.pattern.permute.xlu0 0
        %1356 = vperm.xlu0 %1355, %v1191
        %v1357 = vpop.permute.xlu0 %1356
        %1358 = vset.pattern.permute.xlu0 0
        %1359 = vperm.xlu0 %1358, %v1192
        %v1360 = vpop.permute.xlu0 %1359
        %1361 = vset.pattern.permute.xlu0 0
        %1362 = vperm.xlu0 %1361, %v1193
        %v1363 = vpop.permute.xlu0 %1362
        %1364 = vset.pattern.permute.xlu0 0
        %1365 = vperm.xlu0 %1364, %v1194
        %v1366 = vpop.permute.xlu0 %1365
        %1367 = vset.pattern.permute.xlu0 0
        %1368 = vperm.xlu0 %1367, %v1195
        %v1369 = vpop.permute.xlu0 %1368
        %1370 = vset.pattern.permute.xlu0 0
        %1371 = vperm.xlu0 %1370, %v1196
        %v1372 = vpop.permute.xlu0 %1371
        %1373 = vset.pattern.permute.xlu0 0
        %1374 = vperm.xlu0 %1373, %v1197
        %v1375 = vpop.permute.xlu0 %1374
        %1376 = vset.pattern.permute.xlu0 0
        %1377 = vperm.xlu0 %1376, %v1198
        %v1378 = vpop.permute.xlu0 %1377
        %1379 = vset.pattern.permute.xlu0 0
        %1380 = vperm.xlu0 %1379, %v1199
        %v1381 = vpop.permute.xlu0 %1380
        %1382 = vset.pattern.permute.xlu0 0
        %1383 = vperm.xlu0 %1382, %v1200
        %v1384 = vpop.permute.xlu0 %1383
        %1385 = vset.pattern.permute.xlu0 0
        %1386 = vperm.xlu0 %1385, %v1201
        %v1387 = vpop.permute.xlu0 %1386
        %1388 = vset.pattern.permute.xlu0 0
        %1389 = vperm.xlu0 %1388, %v1202
        %v1390 = vpop.permute.xlu0 %1389
        %1391 = vset.pattern.permute.xlu0 0
        %1392 = vperm.xlu0 %1391, %v1203
        %v1393 = vpop.permute.xlu0 %1392
        %1394 = vset.pattern.permute.xlu0 0
        %1395 = vperm.xlu0 %1394, %v1204
        %v1396 = vpop.permute.xlu0 %1395
        %vm1397 = vcmp.eq.s32.totalorder %v1207, 1
        %vm1398 = vcmp.eq.s32.totalorder %v1210, 1
        %vm1399 = vcmp.eq.s32.totalorder %v1213, 1
        %vm1400 = vcmp.eq.s32.totalorder %v1216, 1
        %vm1401 = vcmp.eq.s32.totalorder %v1219, 1
        %vm1402 = vcmp.eq.s32.totalorder %v1222, 1
        %vm1403 = vcmp.eq.s32.totalorder %v1225, 1
        %vm1404 = vcmp.eq.s32.totalorder %v1228, 1
        %vm1405 = vcmp.eq.s32.totalorder %v1231, 1
        %vm1406 = vcmp.eq.s32.totalorder %v1234, 1
        %vm1407 = vcmp.eq.s32.totalorder %v1237, 1
        %vm1408 = vcmp.eq.s32.totalorder %v1240, 1
        %vm1409 = vcmp.eq.s32.totalorder %v1243, 1
        %vm1410 = vcmp.eq.s32.totalorder %v1246, 1
        %vm1411 = vcmp.eq.s32.totalorder %v1249, 1
        %vm1412 = vcmp.eq.s32.totalorder %v1252, 1
        %vm1413 = vcmp.eq.s32.totalorder %v1255, 1
        %vm1414 = vcmp.eq.s32.totalorder %v1258, 1
        %vm1415 = vcmp.eq.s32.totalorder %v1261, 1
        %vm1416 = vcmp.eq.s32.totalorder %v1264, 1
        %vm1417 = vcmp.eq.s32.totalorder %v1267, 1
        %vm1418 = vcmp.eq.s32.totalorder %v1270, 1
        %vm1419 = vcmp.eq.s32.totalorder %v1273, 1
        %vm1420 = vcmp.eq.s32.totalorder %v1276, 1
        %vm1421 = vcmp.eq.s32.totalorder %v1279, 1
        %vm1422 = vcmp.eq.s32.totalorder %v1282, 1
        %vm1423 = vcmp.eq.s32.totalorder %v1285, 1
        %vm1424 = vcmp.eq.s32.totalorder %v1288, 1
        %vm1425 = vcmp.eq.s32.totalorder %v1291, 1
        %vm1426 = vcmp.eq.s32.totalorder %v1294, 1
        %vm1427 = vcmp.eq.s32.totalorder %v1297, 1
        %vm1428 = vcmp.eq.s32.totalorder %v1300, 1
        %vm1429 = vcmp.eq.s32.totalorder %v1303, 1
        %vm1430 = vcmp.eq.s32.totalorder %v1306, 1
        %vm1431 = vcmp.eq.s32.totalorder %v1309, 1
        %vm1432 = vcmp.eq.s32.totalorder %v1312, 1
        %vm1433 = vcmp.eq.s32.totalorder %v1315, 1
        %vm1434 = vcmp.eq.s32.totalorder %v1318, 1
        %vm1435 = vcmp.eq.s32.totalorder %v1321, 1
        %vm1436 = vcmp.eq.s32.totalorder %v1324, 1
        %vm1437 = vcmp.eq.s32.totalorder %v1327, 1
        %vm1438 = vcmp.eq.s32.totalorder %v1330, 1
        %vm1439 = vcmp.eq.s32.totalorder %v1333, 1
        %vm1440 = vcmp.eq.s32.totalorder %v1336, 1
        %vm1441 = vcmp.eq.s32.totalorder %v1339, 1
        %vm1442 = vcmp.eq.s32.totalorder %v1342, 1
        %vm1443 = vcmp.eq.s32.totalorder %v1345, 1
        %vm1444 = vcmp.eq.s32.totalorder %v1348, 1
        %vm1445 = vcmp.eq.s32.totalorder %v1351, 1
        %vm1446 = vcmp.eq.s32.totalorder %v1354, 1
        %vm1447 = vcmp.eq.s32.totalorder %v1357, 1
        %vm1448 = vcmp.eq.s32.totalorder %v1360, 1
        %vm1449 = vcmp.eq.s32.totalorder %v1363, 1
        %vm1450 = vcmp.eq.s32.totalorder %v1366, 1
        %vm1451 = vcmp.eq.s32.totalorder %v1369, 1
        %vm1452 = vcmp.eq.s32.totalorder %v1372, 1
        %vm1453 = vcmp.eq.s32.totalorder %v1375, 1
        %vm1454 = vcmp.eq.s32.totalorder %v1378, 1
        %vm1455 = vcmp.eq.s32.totalorder %v1381, 1
        %vm1456 = vcmp.eq.s32.totalorder %v1384, 1
        %vm1457 = vcmp.eq.s32.totalorder %v1387, 1
        %vm1458 = vcmp.eq.s32.totalorder %v1390, 1
        %vm1459 = vcmp.eq.s32.totalorder %v1393, 1
        %vm1460 = vcmp.eq.s32.totalorder %v1396, 1
        %vm1461 = vmand %vm1077, %vm1397
        %vm1462 = vmand %vm1078, %vm1398
        %vm1463 = vmand %vm1079, %vm1399
        %vm1464 = vmand %vm1080, %vm1400
        %vm1465 = vmand %vm1081, %vm1401
        %vm1466 = vmand %vm1082, %vm1402
        %vm1467 = vmand %vm1083, %vm1403
        %vm1468 = vmand %vm1084, %vm1404
        %vm1469 = vmand %vm1085, %vm1405
        %vm1470 = vmand %vm1086, %vm1406
        %vm1471 = vmand %vm1087, %vm1407
        %vm1472 = vmand %vm1088, %vm1408
        %vm1473 = vmand %vm1089, %vm1409
        %vm1474 = vmand %vm1090, %vm1410
        %vm1475 = vmand %vm1091, %vm1411
        %vm1476 = vmand %vm1092, %vm1412
        %vm1477 = vmand %vm1093, %vm1413
        %vm1478 = vmand %vm1094, %vm1414
        %vm1479 = vmand %vm1095, %vm1415
        %vm1480 = vmand %vm1096, %vm1416
        %vm1481 = vmand %vm1097, %vm1417
        %vm1482 = vmand %vm1098, %vm1418
        %vm1483 = vmand %vm1099, %vm1419
        %vm1484 = vmand %vm1100, %vm1420
        %vm1485 = vmand %vm1101, %vm1421
        %vm1486 = vmand %vm1102, %vm1422
        %vm1487 = vmand %vm1103, %vm1423
        %vm1488 = vmand %vm1104, %vm1424
        %vm1489 = vmand %vm1105, %vm1425
        %vm1490 = vmand %vm1106, %vm1426
        %vm1491 = vmand %vm1107, %vm1427
        %vm1492 = vmand %vm1108, %vm1428
        %vm1493 = vmand %vm1109, %vm1429
        %vm1494 = vmand %vm1110, %vm1430
        %vm1495 = vmand %vm1111, %vm1431
        %vm1496 = vmand %vm1112, %vm1432
        %vm1497 = vmand %vm1113, %vm1433
        %vm1498 = vmand %vm1114, %vm1434
        %vm1499 = vmand %vm1115, %vm1435
        %vm1500 = vmand %vm1116, %vm1436
        %vm1501 = vmand %vm1117, %vm1437
        %vm1502 = vmand %vm1118, %vm1438
        %vm1503 = vmand %vm1119, %vm1439
        %vm1504 = vmand %vm1120, %vm1440
        %vm1505 = vmand %vm1121, %vm1441
        %vm1506 = vmand %vm1122, %vm1442
        %vm1507 = vmand %vm1123, %vm1443
        %vm1508 = vmand %vm1124, %vm1444
        %vm1509 = vmand %vm1125, %vm1445
        %vm1510 = vmand %vm1126, %vm1446
        %vm1511 = vmand %vm1127, %vm1447
        %vm1512 = vmand %vm1128, %vm1448
        %vm1513 = vmand %vm1129, %vm1449
        %vm1514 = vmand %vm1130, %vm1450
        %vm1515 = vmand %vm1131, %vm1451
        %vm1516 = vmand %vm1132, %vm1452
        %vm1517 = vmand %vm1133, %vm1453
        %vm1518 = vmand %vm1134, %vm1454
        %vm1519 = vmand %vm1135, %vm1455
        %vm1520 = vmand %vm1136, %vm1456
        %vm1521 = vmand %vm1137, %vm1457
        %vm1522 = vmand %vm1138, %vm1458
        %vm1523 = vmand %vm1139, %vm1459
        %vm1524 = vmand %vm1140, %vm1460
        %v1525 = vsub.f32 1.0, %v431
        %v1526 = vsub.f32 1.0, %v432
        %v1527 = vsub.f32 1.0, %v433
        %v1528 = vsub.f32 1.0, %v434
        %v1529 = vsub.f32 1.0, %v435
        %v1530 = vsub.f32 1.0, %v436
        %v1531 = vsub.f32 1.0, %v437
        %v1532 = vsub.f32 1.0, %v438
        %v1533 = vsub.f32 1.0, %v439
        %v1534 = vsub.f32 1.0, %v440
        %v1535 = vsub.f32 1.0, %v441
        %v1536 = vsub.f32 1.0, %v442
        %v1537 = vsub.f32 1.0, %v443
        %v1538 = vsub.f32 1.0, %v444
        %v1539 = vsub.f32 1.0, %v445
        %v1540 = vsub.f32 1.0, %v446
        %v1541 = vsub.f32 1.0, %v447
        %v1542 = vsub.f32 1.0, %v448
        %v1543 = vsub.f32 1.0, %v449
        %v1544 = vsub.f32 1.0, %v450
        %v1545 = vsub.f32 1.0, %v451
        %v1546 = vsub.f32 1.0, %v452
        %v1547 = vsub.f32 1.0, %v453
        %v1548 = vsub.f32 1.0, %v454
        %v1549 = vsub.f32 1.0, %v455
        %v1550 = vsub.f32 1.0, %v456
        %v1551 = vsub.f32 1.0, %v457
        %v1552 = vsub.f32 1.0, %v458
        %v1553 = vsub.f32 1.0, %v459
        %v1554 = vsub.f32 1.0, %v460
        %v1555 = vsub.f32 1.0, %v461
        %v1556 = vsub.f32 1.0, %v462
        %v1557 = vsub.f32 1.0, %v463
        %v1558 = vsub.f32 1.0, %v464
        %v1559 = vsub.f32 1.0, %v465
        %v1560 = vsub.f32 1.0, %v466
        %v1561 = vsub.f32 1.0, %v467
        %v1562 = vsub.f32 1.0, %v468
        %v1563 = vsub.f32 1.0, %v469
        %v1564 = vsub.f32 1.0, %v470
        %v1565 = vsub.f32 1.0, %v471
        %v1566 = vsub.f32 1.0, %v472
        %v1567 = vsub.f32 1.0, %v473
        %v1568 = vsub.f32 1.0, %v474
        %v1569 = vsub.f32 1.0, %v475
        %v1570 = vsub.f32 1.0, %v476
        %v1571 = vsub.f32 1.0, %v477
        %v1572 = vsub.f32 1.0, %v478
        %v1573 = vsub.f32 1.0, %v479
        %v1574 = vsub.f32 1.0, %v480
        %v1575 = vsub.f32 1.0, %v481
        %v1576 = vsub.f32 1.0, %v482
        %v1577 = vsub.f32 1.0, %v483
        %v1578 = vsub.f32 1.0, %v484
        %v1579 = vsub.f32 1.0, %v485
        %v1580 = vsub.f32 1.0, %v486
        %v1581 = vsub.f32 1.0, %v487
        %v1582 = vsub.f32 1.0, %v488
        %v1583 = vsub.f32 1.0, %v489
        %v1584 = vsub.f32 1.0, %v490
        %v1585 = vsub.f32 1.0, %v491
        %v1586 = vsub.f32 1.0, %v492
        %v1587 = vsub.f32 1.0, %v493
        %v1588 = vsub.f32 1.0, %v494
        %v1589 = vmul.f32 %v1525, %v1525
        %v1590 = vmul.f32 %v1526, %v1526
        %v1591 = vmul.f32 %v1527, %v1527
        %v1592 = vmul.f32 %v1528, %v1528
        %v1593 = vmul.f32 %v1529, %v1529
        %v1594 = vmul.f32 %v1530, %v1530
        %v1595 = vmul.f32 %v1531, %v1531
        %v1596 = vmul.f32 %v1532, %v1532
        %v1597 = vmul.f32 %v1533, %v1533
        %v1598 = vmul.f32 %v1534, %v1534
        %v1599 = vmul.f32 %v1535, %v1535
        %v1600 = vmul.f32 %v1536, %v1536
        %v1601 = vmul.f32 %v1537, %v1537
        %v1602 = vmul.f32 %v1538, %v1538
        %v1603 = vmul.f32 %v1539, %v1539
        %v1604 = vmul.f32 %v1540, %v1540
        %v1605 = vmul.f32 %v1541, %v1541
        %v1606 = vmul.f32 %v1542, %v1542
        %v1607 = vmul.f32 %v1543, %v1543
        %v1608 = vmul.f32 %v1544, %v1544
        %v1609 = vmul.f32 %v1545, %v1545
        %v1610 = vmul.f32 %v1546, %v1546
        %v1611 = vmul.f32 %v1547, %v1547
        %v1612 = vmul.f32 %v1548, %v1548
        %v1613 = vmul.f32 %v1549, %v1549
        %v1614 = vmul.f32 %v1550, %v1550
        %v1615 = vmul.f32 %v1551, %v1551
        %v1616 = vmul.f32 %v1552, %v1552
        %v1617 = vmul.f32 %v1553, %v1553
        %v1618 = vmul.f32 %v1554, %v1554
        %v1619 = vmul.f32 %v1555, %v1555
        %v1620 = vmul.f32 %v1556, %v1556
        %v1621 = vmul.f32 %v1557, %v1557
        %v1622 = vmul.f32 %v1558, %v1558
        %v1623 = vmul.f32 %v1559, %v1559
        %v1624 = vmul.f32 %v1560, %v1560
        %v1625 = vmul.f32 %v1561, %v1561
        %v1626 = vmul.f32 %v1562, %v1562
        %v1627 = vmul.f32 %v1563, %v1563
        %v1628 = vmul.f32 %v1564, %v1564
        %v1629 = vmul.f32 %v1565, %v1565
        %v1630 = vmul.f32 %v1566, %v1566
        %v1631 = vmul.f32 %v1567, %v1567
        %v1632 = vmul.f32 %v1568, %v1568
        %v1633 = vmul.f32 %v1569, %v1569
        %v1634 = vmul.f32 %v1570, %v1570
        %v1635 = vmul.f32 %v1571, %v1571
        %v1636 = vmul.f32 %v1572, %v1572
        %v1637 = vmul.f32 %v1573, %v1573
        %v1638 = vmul.f32 %v1574, %v1574
        %v1639 = vmul.f32 %v1575, %v1575
        %v1640 = vmul.f32 %v1576, %v1576
        %v1641 = vmul.f32 %v1577, %v1577
        %v1642 = vmul.f32 %v1578, %v1578
        %v1643 = vmul.f32 %v1579, %v1579
        %v1644 = vmul.f32 %v1580, %v1580
        %v1645 = vmul.f32 %v1581, %v1581
        %v1646 = vmul.f32 %v1582, %v1582
        %v1647 = vmul.f32 %v1583, %v1583
        %v1648 = vmul.f32 %v1584, %v1584
        %v1649 = vmul.f32 %v1585, %v1585
        %v1650 = vmul.f32 %v1586, %v1586
        %v1651 = vmul.f32 %v1587, %v1587
        %v1652 = vmul.f32 %v1588, %v1588
        %v1653 = vsel %vm1461, %v1589, 0.0
        %v1654 = vsel %vm1462, %v1590, 0.0
        %v1655 = vsel %vm1463, %v1591, 0.0
        %v1656 = vsel %vm1464, %v1592, 0.0
        %v1657 = vsel %vm1465, %v1593, 0.0
        %v1658 = vsel %vm1466, %v1594, 0.0
        %v1659 = vsel %vm1467, %v1595, 0.0
        %v1660 = vsel %vm1468, %v1596, 0.0
        %v1661 = vsel %vm1469, %v1597, 0.0
        %v1662 = vsel %vm1470, %v1598, 0.0
        %v1663 = vsel %vm1471, %v1599, 0.0
        %v1664 = vsel %vm1472, %v1600, 0.0
        %v1665 = vsel %vm1473, %v1601, 0.0
        %v1666 = vsel %vm1474, %v1602, 0.0
        %v1667 = vsel %vm1475, %v1603, 0.0
        %v1668 = vsel %vm1476, %v1604, 0.0
        %v1669 = vsel %vm1477, %v1605, 0.0
        %v1670 = vsel %vm1478, %v1606, 0.0
        %v1671 = vsel %vm1479, %v1607, 0.0
        %v1672 = vsel %vm1480, %v1608, 0.0
        %v1673 = vsel %vm1481, %v1609, 0.0
        %v1674 = vsel %vm1482, %v1610, 0.0
        %v1675 = vsel %vm1483, %v1611, 0.0
        %v1676 = vsel %vm1484, %v1612, 0.0
        %v1677 = vsel %vm1485, %v1613, 0.0
        %v1678 = vsel %vm1486, %v1614, 0.0
        %v1679 = vsel %vm1487, %v1615, 0.0
        %v1680 = vsel %vm1488, %v1616, 0.0
        %v1681 = vsel %vm1489, %v1617, 0.0
        %v1682 = vsel %vm1490, %v1618, 0.0
        %v1683 = vsel %vm1491, %v1619, 0.0
        %v1684 = vsel %vm1492, %v1620, 0.0
        %v1685 = vsel %vm1493, %v1621, 0.0
        %v1686 = vsel %vm1494, %v1622, 0.0
        %v1687 = vsel %vm1495, %v1623, 0.0
        %v1688 = vsel %vm1496, %v1624, 0.0
        %v1689 = vsel %vm1497, %v1625, 0.0
        %v1690 = vsel %vm1498, %v1626, 0.0
        %v1691 = vsel %vm1499, %v1627, 0.0
        %v1692 = vsel %vm1500, %v1628, 0.0
        %v1693 = vsel %vm1501, %v1629, 0.0
        %v1694 = vsel %vm1502, %v1630, 0.0
        %v1695 = vsel %vm1503, %v1631, 0.0
        %v1696 = vsel %vm1504, %v1632, 0.0
        %v1697 = vsel %vm1505, %v1633, 0.0
        %v1698 = vsel %vm1506, %v1634, 0.0
        %v1699 = vsel %vm1507, %v1635, 0.0
        %v1700 = vsel %vm1508, %v1636, 0.0
        %v1701 = vsel %vm1509, %v1637, 0.0
        %v1702 = vsel %vm1510, %v1638, 0.0
        %v1703 = vsel %vm1511, %v1639, 0.0
        %v1704 = vsel %vm1512, %v1640, 0.0
        %v1705 = vsel %vm1513, %v1641, 0.0
        %v1706 = vsel %vm1514, %v1642, 0.0
        %v1707 = vsel %vm1515, %v1643, 0.0
        %v1708 = vsel %vm1516, %v1644, 0.0
        %v1709 = vsel %vm1517, %v1645, 0.0
        %v1710 = vsel %vm1518, %v1646, 0.0
        %v1711 = vsel %vm1519, %v1647, 0.0
        %v1712 = vsel %vm1520, %v1648, 0.0
        %v1713 = vsel %vm1521, %v1649, 0.0
        %v1714 = vsel %vm1522, %v1650, 0.0
        %v1715 = vsel %vm1523, %v1651, 0.0
        %v1716 = vsel %vm1524, %v1652, 0.0
        %vm1717 = vcmask 130048
        %v1718 = vsel %vm1717, %v1653, 0.0
        %1719 = vadd.xlane.f32.xlu0 %v1718
        %v1720 = vpop.xlane.xlu0 %1719
        %v1721 = vsel %vm1717, %v1654, 0.0
        %1722 = vadd.xlane.f32.xlu0 %v1721
        %v1723 = vpop.xlane.xlu0 %1722
        %v1724 = vsel %vm1717, %v1655, 0.0
        %1725 = vadd.xlane.f32.xlu0 %v1724
        %v1726 = vpop.xlane.xlu0 %1725
        %v1727 = vsel %vm1717, %v1656, 0.0
        %1728 = vadd.xlane.f32.xlu0 %v1727
        %v1729 = vpop.xlane.xlu0 %1728
        %v1730 = vsel %vm1717, %v1657, 0.0
        %1731 = vadd.xlane.f32.xlu0 %v1730
        %v1732 = vpop.xlane.xlu0 %1731
        %v1733 = vsel %vm1717, %v1658, 0.0
        %1734 = vadd.xlane.f32.xlu0 %v1733
        %v1735 = vpop.xlane.xlu0 %1734
        %v1736 = vsel %vm1717, %v1659, 0.0
        %1737 = vadd.xlane.f32.xlu0 %v1736
        %v1738 = vpop.xlane.xlu0 %1737
        %v1739 = vsel %vm1717, %v1660, 0.0
        %1740 = vadd.xlane.f32.xlu0 %v1739
        %v1741 = vpop.xlane.xlu0 %1740
        %v1742 = vsel %vm1717, %v1661, 0.0
        %1743 = vadd.xlane.f32.xlu0 %v1742
        %v1744 = vpop.xlane.xlu0 %1743
        %v1745 = vsel %vm1717, %v1662, 0.0
        %1746 = vadd.xlane.f32.xlu0 %v1745
        %v1747 = vpop.xlane.xlu0 %1746
        %v1748 = vsel %vm1717, %v1663, 0.0
        %1749 = vadd.xlane.f32.xlu0 %v1748
        %v1750 = vpop.xlane.xlu0 %1749
        %v1751 = vsel %vm1717, %v1664, 0.0
        %1752 = vadd.xlane.f32.xlu0 %v1751
        %v1753 = vpop.xlane.xlu0 %1752
        %v1754 = vsel %vm1717, %v1665, 0.0
        %1755 = vadd.xlane.f32.xlu0 %v1754
        %v1756 = vpop.xlane.xlu0 %1755
        %v1757 = vsel %vm1717, %v1666, 0.0
        %1758 = vadd.xlane.f32.xlu0 %v1757
        %v1759 = vpop.xlane.xlu0 %1758
        %v1760 = vsel %vm1717, %v1667, 0.0
        %1761 = vadd.xlane.f32.xlu0 %v1760
        %v1762 = vpop.xlane.xlu0 %1761
        %v1763 = vsel %vm1717, %v1668, 0.0
        %1764 = vadd.xlane.f32.xlu0 %v1763
        %v1765 = vpop.xlane.xlu0 %1764
        %v1766 = vsel %vm1717, %v1669, 0.0
        %1767 = vadd.xlane.f32.xlu0 %v1766
        %v1768 = vpop.xlane.xlu0 %1767
        %v1769 = vsel %vm1717, %v1670, 0.0
        %1770 = vadd.xlane.f32.xlu0 %v1769
        %v1771 = vpop.xlane.xlu0 %1770
        %v1772 = vsel %vm1717, %v1671, 0.0
        %1773 = vadd.xlane.f32.xlu0 %v1772
        %v1774 = vpop.xlane.xlu0 %1773
        %v1775 = vsel %vm1717, %v1672, 0.0
        %1776 = vadd.xlane.f32.xlu0 %v1775
        %v1777 = vpop.xlane.xlu0 %1776
        %v1778 = vsel %vm1717, %v1673, 0.0
        %1779 = vadd.xlane.f32.xlu0 %v1778
        %v1780 = vpop.xlane.xlu0 %1779
        %v1781 = vsel %vm1717, %v1674, 0.0
        %1782 = vadd.xlane.f32.xlu0 %v1781
        %v1783 = vpop.xlane.xlu0 %1782
        %v1784 = vsel %vm1717, %v1675, 0.0
        %1785 = vadd.xlane.f32.xlu0 %v1784
        %v1786 = vpop.xlane.xlu0 %1785
        %v1787 = vsel %vm1717, %v1676, 0.0
        %1788 = vadd.xlane.f32.xlu0 %v1787
        %v1789 = vpop.xlane.xlu0 %1788
        %v1790 = vsel %vm1717, %v1677, 0.0
        %1791 = vadd.xlane.f32.xlu0 %v1790
        %v1792 = vpop.xlane.xlu0 %1791
        %v1793 = vsel %vm1717, %v1678, 0.0
        %1794 = vadd.xlane.f32.xlu0 %v1793
        %v1795 = vpop.xlane.xlu0 %1794
        %v1796 = vsel %vm1717, %v1679, 0.0
        %1797 = vadd.xlane.f32.xlu0 %v1796
        %v1798 = vpop.xlane.xlu0 %1797
        %v1799 = vsel %vm1717, %v1680, 0.0
        %1800 = vadd.xlane.f32.xlu0 %v1799
        %v1801 = vpop.xlane.xlu0 %1800
        %v1802 = vsel %vm1717, %v1681, 0.0
        %1803 = vadd.xlane.f32.xlu0 %v1802
        %v1804 = vpop.xlane.xlu0 %1803
        %v1805 = vsel %vm1717, %v1682, 0.0
        %1806 = vadd.xlane.f32.xlu0 %v1805
        %v1807 = vpop.xlane.xlu0 %1806
        %v1808 = vsel %vm1717, %v1683, 0.0
        %1809 = vadd.xlane.f32.xlu0 %v1808
        %v1810 = vpop.xlane.xlu0 %1809
        %v1811 = vsel %vm1717, %v1684, 0.0
        %1812 = vadd.xlane.f32.xlu0 %v1811
        %v1813 = vpop.xlane.xlu0 %1812
        %v1814 = vsel %vm1717, %v1685, 0.0
        %1815 = vadd.xlane.f32.xlu0 %v1814
        %v1816 = vpop.xlane.xlu0 %1815
        %v1817 = vsel %vm1717, %v1686, 0.0
        %1818 = vadd.xlane.f32.xlu0 %v1817
        %v1819 = vpop.xlane.xlu0 %1818
        %v1820 = vsel %vm1717, %v1687, 0.0
        %1821 = vadd.xlane.f32.xlu0 %v1820
        %v1822 = vpop.xlane.xlu0 %1821
        %v1823 = vsel %vm1717, %v1688, 0.0
        %1824 = vadd.xlane.f32.xlu0 %v1823
        %v1825 = vpop.xlane.xlu0 %1824
        %v1826 = vsel %vm1717, %v1689, 0.0
        %1827 = vadd.xlane.f32.xlu0 %v1826
        %v1828 = vpop.xlane.xlu0 %1827
        %v1829 = vsel %vm1717, %v1690, 0.0
        %1830 = vadd.xlane.f32.xlu0 %v1829
        %v1831 = vpop.xlane.xlu0 %1830
        %v1832 = vsel %vm1717, %v1691, 0.0
        %1833 = vadd.xlane.f32.xlu0 %v1832
        %v1834 = vpop.xlane.xlu0 %1833
        %v1835 = vsel %vm1717, %v1692, 0.0
        %1836 = vadd.xlane.f32.xlu0 %v1835
        %v1837 = vpop.xlane.xlu0 %1836
        %v1838 = vsel %vm1717, %v1693, 0.0
        %1839 = vadd.xlane.f32.xlu0 %v1838
        %v1840 = vpop.xlane.xlu0 %1839
        %v1841 = vsel %vm1717, %v1694, 0.0
        %1842 = vadd.xlane.f32.xlu0 %v1841
        %v1843 = vpop.xlane.xlu0 %1842
        %v1844 = vsel %vm1717, %v1695, 0.0
        %1845 = vadd.xlane.f32.xlu0 %v1844
        %v1846 = vpop.xlane.xlu0 %1845
        %v1847 = vsel %vm1717, %v1696, 0.0
        %1848 = vadd.xlane.f32.xlu0 %v1847
        %v1849 = vpop.xlane.xlu0 %1848
        %v1850 = vsel %vm1717, %v1697, 0.0
        %1851 = vadd.xlane.f32.xlu0 %v1850
        %v1852 = vpop.xlane.xlu0 %1851
        %v1853 = vsel %vm1717, %v1698, 0.0
        %1854 = vadd.xlane.f32.xlu0 %v1853
        %v1855 = vpop.xlane.xlu0 %1854
        %v1856 = vsel %vm1717, %v1699, 0.0
        %1857 = vadd.xlane.f32.xlu0 %v1856
        %v1858 = vpop.xlane.xlu0 %1857
        %v1859 = vsel %vm1717, %v1700, 0.0
        %1860 = vadd.xlane.f32.xlu0 %v1859
        %v1861 = vpop.xlane.xlu0 %1860
        %v1862 = vsel %vm1717, %v1701, 0.0
        %1863 = vadd.xlane.f32.xlu0 %v1862
        %v1864 = vpop.xlane.xlu0 %1863
        %v1865 = vsel %vm1717, %v1702, 0.0
        %1866 = vadd.xlane.f32.xlu0 %v1865
        %v1867 = vpop.xlane.xlu0 %1866
        %v1868 = vsel %vm1717, %v1703, 0.0
        %1869 = vadd.xlane.f32.xlu0 %v1868
        %v1870 = vpop.xlane.xlu0 %1869
        %v1871 = vsel %vm1717, %v1704, 0.0
        %1872 = vadd.xlane.f32.xlu0 %v1871
        %v1873 = vpop.xlane.xlu0 %1872
        %v1874 = vsel %vm1717, %v1705, 0.0
        %1875 = vadd.xlane.f32.xlu0 %v1874
        %v1876 = vpop.xlane.xlu0 %1875
        %v1877 = vsel %vm1717, %v1706, 0.0
        %1878 = vadd.xlane.f32.xlu0 %v1877
        %v1879 = vpop.xlane.xlu0 %1878
        %v1880 = vsel %vm1717, %v1707, 0.0
        %1881 = vadd.xlane.f32.xlu0 %v1880
        %v1882 = vpop.xlane.xlu0 %1881
        %v1883 = vsel %vm1717, %v1708, 0.0
        %1884 = vadd.xlane.f32.xlu0 %v1883
        %v1885 = vpop.xlane.xlu0 %1884
        %v1886 = vsel %vm1717, %v1709, 0.0
        %1887 = vadd.xlane.f32.xlu0 %v1886
        %v1888 = vpop.xlane.xlu0 %1887
        %v1889 = vsel %vm1717, %v1710, 0.0
        %1890 = vadd.xlane.f32.xlu0 %v1889
        %v1891 = vpop.xlane.xlu0 %1890
        %v1892 = vsel %vm1717, %v1711, 0.0
        %1893 = vadd.xlane.f32.xlu0 %v1892
        %v1894 = vpop.xlane.xlu0 %1893
        %v1895 = vsel %vm1717, %v1712, 0.0
        %1896 = vadd.xlane.f32.xlu0 %v1895
        %v1897 = vpop.xlane.xlu0 %1896
        %v1898 = vsel %vm1717, %v1713, 0.0
        %1899 = vadd.xlane.f32.xlu0 %v1898
        %v1900 = vpop.xlane.xlu0 %1899
        %v1901 = vsel %vm1717, %v1714, 0.0
        %1902 = vadd.xlane.f32.xlu0 %v1901
        %v1903 = vpop.xlane.xlu0 %1902
        %v1904 = vsel %vm1717, %v1715, 0.0
        %1905 = vadd.xlane.f32.xlu0 %v1904
        %v1906 = vpop.xlane.xlu0 %1905
        %v1907 = vsel %vm1717, %v1716, 0.0
        %1908 = vadd.xlane.f32.xlu0 %v1907
        %v1909 = vpop.xlane.xlu0 %1908
        %v1910 = vld [vmem:[#allocation2] sm:$0xff]
        %v1911 = vld [vmem:[#allocation2 + $0x8] sm:$0xff]
        %v1912 = vld [vmem:[#allocation2 + $0x10] sm:$0xff]
        %v1913 = vld [vmem:[#allocation2 + $0x18] sm:$0xff]
        %v1914 = vld [vmem:[#allocation2 + $0x20] sm:$0xff]
        %v1915 = vld [vmem:[#allocation2 + $0x28] sm:$0xff]
        %v1916 = vld [vmem:[#allocation2 + $0x30] sm:$0xff]
        %v1917 = vld [vmem:[#allocation2 + $0x38] sm:$0xff]
        %v1918 = vld [vmem:[#allocation2 + $0x40] sm:$0xff]
        %v1919 = vld [vmem:[#allocation2 + $0x48] sm:$0xff]
        %v1920 = vld [vmem:[#allocation2 + $0x50] sm:$0xff]
        %v1921 = vld [vmem:[#allocation2 + $0x58] sm:$0xff]
        %v1922 = vld [vmem:[#allocation2 + $0x60] sm:$0xff]
        %v1923 = vld [vmem:[#allocation2 + $0x68] sm:$0xff]
        %v1924 = vld [vmem:[#allocation2 + $0x70] sm:$0xff]
        %v1925 = vld [vmem:[#allocation2 + $0x78] sm:$0xff]
        %v1926 = vld [vmem:[#allocation2 + $0x80] sm:$0xff]
        %v1927 = vld [vmem:[#allocation2 + $0x88] sm:$0xff]
        %v1928 = vld [vmem:[#allocation2 + $0x90] sm:$0xff]
        %v1929 = vld [vmem:[#allocation2 + $0x98] sm:$0xff]
        %v1930 = vld [vmem:[#allocation2 + $0xa0] sm:$0xff]
        %v1931 = vld [vmem:[#allocation2 + $0xa8] sm:$0xff]
        %v1932 = vld [vmem:[#allocation2 + $0xb0] sm:$0xff]
        %v1933 = vld [vmem:[#allocation2 + $0xb8] sm:$0xff]
        %v1934 = vld [vmem:[#allocation2 + $0xc0] sm:$0xff]
        %v1935 = vld [vmem:[#allocation2 + $0xc8] sm:$0xff]
        %v1936 = vld [vmem:[#allocation2 + $0xd0] sm:$0xff]
        %v1937 = vld [vmem:[#allocation2 + $0xd8] sm:$0xff]
        %v1938 = vld [vmem:[#allocation2 + $0xe0] sm:$0xff]
        %v1939 = vld [vmem:[#allocation2 + $0xe8] sm:$0xff]
        %v1940 = vld [vmem:[#allocation2 + $0xf0] sm:$0xff]
        %v1941 = vld [vmem:[#allocation2 + $0xf8] sm:$0xff]
        %v1942 = vld [vmem:[#allocation2 + $0x100] sm:$0xff]
        %v1943 = vld [vmem:[#allocation2 + $0x108] sm:$0xff]
        %v1944 = vld [vmem:[#allocation2 + $0x110] sm:$0xff]
        %v1945 = vld [vmem:[#allocation2 + $0x118] sm:$0xff]
        %v1946 = vld [vmem:[#allocation2 + $0x120] sm:$0xff]
        %v1947 = vld [vmem:[#allocation2 + $0x128] sm:$0xff]
        %v1948 = vld [vmem:[#allocation2 + $0x130] sm:$0xff]
        %v1949 = vld [vmem:[#allocation2 + $0x138] sm:$0xff]
        %v1950 = vld [vmem:[#allocation2 + $0x140] sm:$0xff]
        %v1951 = vld [vmem:[#allocation2 + $0x148] sm:$0xff]
        %v1952 = vld [vmem:[#allocation2 + $0x150] sm:$0xff]
        %v1953 = vld [vmem:[#allocation2 + $0x158] sm:$0xff]
        %v1954 = vld [vmem:[#allocation2 + $0x160] sm:$0xff]
        %v1955 = vld [vmem:[#allocation2 + $0x168] sm:$0xff]
        %v1956 = vld [vmem:[#allocation2 + $0x170] sm:$0xff]
        %v1957 = vld [vmem:[#allocation2 + $0x178] sm:$0xff]
        %v1958 = vld [vmem:[#allocation2 + $0x180] sm:$0xff]
        %v1959 = vld [vmem:[#allocation2 + $0x188] sm:$0xff]
        %v1960 = vld [vmem:[#allocation2 + $0x190] sm:$0xff]
        %v1961 = vld [vmem:[#allocation2 + $0x198] sm:$0xff]
        %v1962 = vld [vmem:[#allocation2 + $0x1a0] sm:$0xff]
        %v1963 = vld [vmem:[#allocation2 + $0x1a8] sm:$0xff]
        %v1964 = vld [vmem:[#allocation2 + $0x1b0] sm:$0xff]
        %v1965 = vld [vmem:[#allocation2 + $0x1b8] sm:$0xff]
        %v1966 = vld [vmem:[#allocation2 + $0x1c0] sm:$0xff]
        %v1967 = vld [vmem:[#allocation2 + $0x1c8] sm:$0xff]
        %v1968 = vld [vmem:[#allocation2 + $0x1d0] sm:$0xff]
        %v1969 = vld [vmem:[#allocation2 + $0x1d8] sm:$0xff]
        %v1970 = vld [vmem:[#allocation2 + $0x1e0] sm:$0xff]
        %v1971 = vld [vmem:[#allocation2 + $0x1e8] sm:$0xff]
        %v1972 = vld [vmem:[#allocation2 + $0x1f0] sm:$0xff]
        %v1973 = vld [vmem:[#allocation2 + $0x1f8] sm:$0xff]
        %v1974 = vadd.f32 %v1910, %v1720
        %v1975 = vadd.f32 %v1911, %v1723
        %v1976 = vadd.f32 %v1912, %v1726
        %v1977 = vadd.f32 %v1913, %v1729
        %v1978 = vadd.f32 %v1914, %v1732
        %v1979 = vadd.f32 %v1915, %v1735
        %v1980 = vadd.f32 %v1916, %v1738
        %v1981 = vadd.f32 %v1917, %v1741
        %v1982 = vadd.f32 %v1918, %v1744
        %v1983 = vadd.f32 %v1919, %v1747
        %v1984 = vadd.f32 %v1920, %v1750
        %v1985 = vadd.f32 %v1921, %v1753
        %v1986 = vadd.f32 %v1922, %v1756
        %v1987 = vadd.f32 %v1923, %v1759
        %v1988 = vadd.f32 %v1924, %v1762
        %v1989 = vadd.f32 %v1925, %v1765
        %v1990 = vadd.f32 %v1926, %v1768
        %v1991 = vadd.f32 %v1927, %v1771
        %v1992 = vadd.f32 %v1928, %v1774
        %v1993 = vadd.f32 %v1929, %v1777
        %v1994 = vadd.f32 %v1930, %v1780
        %v1995 = vadd.f32 %v1931, %v1783
        %v1996 = vadd.f32 %v1932, %v1786
        %v1997 = vadd.f32 %v1933, %v1789
        %v1998 = vadd.f32 %v1934, %v1792
        %v1999 = vadd.f32 %v1935, %v1795
        %v2000 = vadd.f32 %v1936, %v1798
        %v2001 = vadd.f32 %v1937, %v1801
        %v2002 = vadd.f32 %v1938, %v1804
        %v2003 = vadd.f32 %v1939, %v1807
        %v2004 = vadd.f32 %v1940, %v1810
        %v2005 = vadd.f32 %v1941, %v1813
        %v2006 = vadd.f32 %v1942, %v1816
        %v2007 = vadd.f32 %v1943, %v1819
        %v2008 = vadd.f32 %v1944, %v1822
        %v2009 = vadd.f32 %v1945, %v1825
        %v2010 = vadd.f32 %v1946, %v1828
        %v2011 = vadd.f32 %v1947, %v1831
        %v2012 = vadd.f32 %v1948, %v1834
        %v2013 = vadd.f32 %v1949, %v1837
        %v2014 = vadd.f32 %v1950, %v1840
        %v2015 = vadd.f32 %v1951, %v1843
        %v2016 = vadd.f32 %v1952, %v1846
        %v2017 = vadd.f32 %v1953, %v1849
        %v2018 = vadd.f32 %v1954, %v1852
        %v2019 = vadd.f32 %v1955, %v1855
        %v2020 = vadd.f32 %v1956, %v1858
        %v2021 = vadd.f32 %v1957, %v1861
        %v2022 = vadd.f32 %v1958, %v1864
        %v2023 = vadd.f32 %v1959, %v1867
        %v2024 = vadd.f32 %v1960, %v1870
        %v2025 = vadd.f32 %v1961, %v1873
        %v2026 = vadd.f32 %v1962, %v1876
        %v2027 = vadd.f32 %v1963, %v1879
        %v2028 = vadd.f32 %v1964, %v1882
        %v2029 = vadd.f32 %v1965, %v1885
        %v2030 = vadd.f32 %v1966, %v1888
        %v2031 = vadd.f32 %v1967, %v1891
        %v2032 = vadd.f32 %v1968, %v1894
        %v2033 = vadd.f32 %v1969, %v1897
        %v2034 = vadd.f32 %v1970, %v1900
        %v2035 = vadd.f32 %v1971, %v1903
        %v2036 = vadd.f32 %v1972, %v1906
        %v2037 = vadd.f32 %v1973, %v1909
        %vm2038 = vcmask 7168
        %2039 = vst.msk [vmem:[#allocation2] sm:$0xff] %vm2038, %v1974
        %2040 = vst.msk [vmem:[#allocation2 + $0x8] sm:$0xff] %vm2038, %v1975
        %2041 = vst.msk [vmem:[#allocation2 + $0x10] sm:$0xff] %vm2038, %v1976
        %2042 = vst.msk [vmem:[#allocation2 + $0x18] sm:$0xff] %vm2038, %v1977
        %2043 = vst.msk [vmem:[#allocation2 + $0x20] sm:$0xff] %vm2038, %v1978
        %2044 = vst.msk [vmem:[#allocation2 + $0x28] sm:$0xff] %vm2038, %v1979
        %2045 = vst.msk [vmem:[#allocation2 + $0x30] sm:$0xff] %vm2038, %v1980
        %2046 = vst.msk [vmem:[#allocation2 + $0x38] sm:$0xff] %vm2038, %v1981
        %2047 = vst.msk [vmem:[#allocation2 + $0x40] sm:$0xff] %vm2038, %v1982
        %2048 = vst.msk [vmem:[#allocation2 + $0x48] sm:$0xff] %vm2038, %v1983
        %2049 = vst.msk [vmem:[#allocation2 + $0x50] sm:$0xff] %vm2038, %v1984
        %2050 = vst.msk [vmem:[#allocation2 + $0x58] sm:$0xff] %vm2038, %v1985
        %2051 = vst.msk [vmem:[#allocation2 + $0x60] sm:$0xff] %vm2038, %v1986
        %2052 = vst.msk [vmem:[#allocation2 + $0x68] sm:$0xff] %vm2038, %v1987
        %2053 = vst.msk [vmem:[#allocation2 + $0x70] sm:$0xff] %vm2038, %v1988
        %2054 = vst.msk [vmem:[#allocation2 + $0x78] sm:$0xff] %vm2038, %v1989
        %2055 = vst.msk [vmem:[#allocation2 + $0x80] sm:$0xff] %vm2038, %v1990
        %2056 = vst.msk [vmem:[#allocation2 + $0x88] sm:$0xff] %vm2038, %v1991
        %2057 = vst.msk [vmem:[#allocation2 + $0x90] sm:$0xff] %vm2038, %v1992
        %2058 = vst.msk [vmem:[#allocation2 + $0x98] sm:$0xff] %vm2038, %v1993
        %2059 = vst.msk [vmem:[#allocation2 + $0xa0] sm:$0xff] %vm2038, %v1994
        %2060 = vst.msk [vmem:[#allocation2 + $0xa8] sm:$0xff] %vm2038, %v1995
        %2061 = vst.msk [vmem:[#allocation2 + $0xb0] sm:$0xff] %vm2038, %v1996
        %2062 = vst.msk [vmem:[#allocation2 + $0xb8] sm:$0xff] %vm2038, %v1997
        %2063 = vst.msk [vmem:[#allocation2 + $0xc0] sm:$0xff] %vm2038, %v1998
        %2064 = vst.msk [vmem:[#allocation2 + $0xc8] sm:$0xff] %vm2038, %v1999
        %2065 = vst.msk [vmem:[#allocation2 + $0xd0] sm:$0xff] %vm2038, %v2000
        %2066 = vst.msk [vmem:[#allocation2 + $0xd8] sm:$0xff] %vm2038, %v2001
        %2067 = vst.msk [vmem:[#allocation2 + $0xe0] sm:$0xff] %vm2038, %v2002
        %2068 = vst.msk [vmem:[#allocation2 + $0xe8] sm:$0xff] %vm2038, %v2003
        %2069 = vst.msk [vmem:[#allocation2 + $0xf0] sm:$0xff] %vm2038, %v2004
        %2070 = vst.msk [vmem:[#allocation2 + $0xf8] sm:$0xff] %vm2038, %v2005
        %2071 = vst.msk [vmem:[#allocation2 + $0x100] sm:$0xff] %vm2038, %v2006
        %2072 = vst.msk [vmem:[#allocation2 + $0x108] sm:$0xff] %vm2038, %v2007
        %2073 = vst.msk [vmem:[#allocation2 + $0x110] sm:$0xff] %vm2038, %v2008
        %2074 = vst.msk [vmem:[#allocation2 + $0x118] sm:$0xff] %vm2038, %v2009
        %2075 = vst.msk [vmem:[#allocation2 + $0x120] sm:$0xff] %vm2038, %v2010
        %2076 = vst.msk [vmem:[#allocation2 + $0x128] sm:$0xff] %vm2038, %v2011
        %2077 = vst.msk [vmem:[#allocation2 + $0x130] sm:$0xff] %vm2038, %v2012
        %2078 = vst.msk [vmem:[#allocation2 + $0x138] sm:$0xff] %vm2038, %v2013
        %2079 = vst.msk [vmem:[#allocation2 + $0x140] sm:$0xff] %vm2038, %v2014
        %2080 = vst.msk [vmem:[#allocation2 + $0x148] sm:$0xff] %vm2038, %v2015
        %2081 = vst.msk [vmem:[#allocation2 + $0x150] sm:$0xff] %vm2038, %v2016
        %2082 = vst.msk [vmem:[#allocation2 + $0x158] sm:$0xff] %vm2038, %v2017
        %2083 = vst.msk [vmem:[#allocation2 + $0x160] sm:$0xff] %vm2038, %v2018
        %2084 = vst.msk [vmem:[#allocation2 + $0x168] sm:$0xff] %vm2038, %v2019
        %2085 = vst.msk [vmem:[#allocation2 + $0x170] sm:$0xff] %vm2038, %v2020
        %2086 = vst.msk [vmem:[#allocation2 + $0x178] sm:$0xff] %vm2038, %v2021
        %2087 = vst.msk [vmem:[#allocation2 + $0x180] sm:$0xff] %vm2038, %v2022
        %2088 = vst.msk [vmem:[#allocation2 + $0x188] sm:$0xff] %vm2038, %v2023
        %2089 = vst.msk [vmem:[#allocation2 + $0x190] sm:$0xff] %vm2038, %v2024
        %2090 = vst.msk [vmem:[#allocation2 + $0x198] sm:$0xff] %vm2038, %v2025
        %2091 = vst.msk [vmem:[#allocation2 + $0x1a0] sm:$0xff] %vm2038, %v2026
        %2092 = vst.msk [vmem:[#allocation2 + $0x1a8] sm:$0xff] %vm2038, %v2027
        %2093 = vst.msk [vmem:[#allocation2 + $0x1b0] sm:$0xff] %vm2038, %v2028
        %2094 = vst.msk [vmem:[#allocation2 + $0x1b8] sm:$0xff] %vm2038, %v2029
        %2095 = vst.msk [vmem:[#allocation2 + $0x1c0] sm:$0xff] %vm2038, %v2030
        %2096 = vst.msk [vmem:[#allocation2 + $0x1c8] sm:$0xff] %vm2038, %v2031
        %2097 = vst.msk [vmem:[#allocation2 + $0x1d0] sm:$0xff] %vm2038, %v2032
        %2098 = vst.msk [vmem:[#allocation2 + $0x1d8] sm:$0xff] %vm2038, %v2033
        %2099 = vst.msk [vmem:[#allocation2 + $0x1e0] sm:$0xff] %vm2038, %v2034
        %2100 = vst.msk [vmem:[#allocation2 + $0x1e8] sm:$0xff] %vm2038, %v2035
        %2101 = vst.msk [vmem:[#allocation2 + $0x1f0] sm:$0xff] %vm2038, %v2036
        %2102 = vst.msk [vmem:[#allocation2 + $0x1f8] sm:$0xff] %vm2038, %v2037
        %v2103 = vld [vmem:[#allocation3] sm:$0xff]
        %v2104 = vld [vmem:[#allocation3 + $0x8] sm:$0xff]
        %v2105 = vld [vmem:[#allocation3 + $0x10] sm:$0xff]
        %v2106 = vld [vmem:[#allocation3 + $0x18] sm:$0xff]
        %v2107 = vld [vmem:[#allocation3 + $0x20] sm:$0xff]
        %v2108 = vld [vmem:[#allocation3 + $0x28] sm:$0xff]
        %v2109 = vld [vmem:[#allocation3 + $0x30] sm:$0xff]
        %v2110 = vld [vmem:[#allocation3 + $0x38] sm:$0xff]
        %v2111 = vld [vmem:[#allocation3 + $0x40] sm:$0xff]
        %v2112 = vld [vmem:[#allocation3 + $0x48] sm:$0xff]
        %v2113 = vld [vmem:[#allocation3 + $0x50] sm:$0xff]
        %v2114 = vld [vmem:[#allocation3 + $0x58] sm:$0xff]
        %v2115 = vld [vmem:[#allocation3 + $0x60] sm:$0xff]
        %v2116 = vld [vmem:[#allocation3 + $0x68] sm:$0xff]
        %v2117 = vld [vmem:[#allocation3 + $0x70] sm:$0xff]
        %v2118 = vld [vmem:[#allocation3 + $0x78] sm:$0xff]
        %v2119 = vld [vmem:[#allocation3 + $0x80] sm:$0xff]
        %v2120 = vld [vmem:[#allocation3 + $0x88] sm:$0xff]
        %v2121 = vld [vmem:[#allocation3 + $0x90] sm:$0xff]
        %v2122 = vld [vmem:[#allocation3 + $0x98] sm:$0xff]
        %v2123 = vld [vmem:[#allocation3 + $0xa0] sm:$0xff]
        %v2124 = vld [vmem:[#allocation3 + $0xa8] sm:$0xff]
        %v2125 = vld [vmem:[#allocation3 + $0xb0] sm:$0xff]
        %v2126 = vld [vmem:[#allocation3 + $0xb8] sm:$0xff]
        %v2127 = vld [vmem:[#allocation3 + $0xc0] sm:$0xff]
        %v2128 = vld [vmem:[#allocation3 + $0xc8] sm:$0xff]
        %v2129 = vld [vmem:[#allocation3 + $0xd0] sm:$0xff]
        %v2130 = vld [vmem:[#allocation3 + $0xd8] sm:$0xff]
        %v2131 = vld [vmem:[#allocation3 + $0xe0] sm:$0xff]
        %v2132 = vld [vmem:[#allocation3 + $0xe8] sm:$0xff]
        %v2133 = vld [vmem:[#allocation3 + $0xf0] sm:$0xff]
        %v2134 = vld [vmem:[#allocation3 + $0xf8] sm:$0xff]
        %v2135 = vld [vmem:[#allocation3 + $0x100] sm:$0xff]
        %v2136 = vld [vmem:[#allocation3 + $0x108] sm:$0xff]
        %v2137 = vld [vmem:[#allocation3 + $0x110] sm:$0xff]
        %v2138 = vld [vmem:[#allocation3 + $0x118] sm:$0xff]
        %v2139 = vld [vmem:[#allocation3 + $0x120] sm:$0xff]
        %v2140 = vld [vmem:[#allocation3 + $0x128] sm:$0xff]
        %v2141 = vld [vmem:[#allocation3 + $0x130] sm:$0xff]
        %v2142 = vld [vmem:[#allocation3 + $0x138] sm:$0xff]
        %v2143 = vld [vmem:[#allocation3 + $0x140] sm:$0xff]
        %v2144 = vld [vmem:[#allocation3 + $0x148] sm:$0xff]
        %v2145 = vld [vmem:[#allocation3 + $0x150] sm:$0xff]
        %v2146 = vld [vmem:[#allocation3 + $0x158] sm:$0xff]
        %v2147 = vld [vmem:[#allocation3 + $0x160] sm:$0xff]
        %v2148 = vld [vmem:[#allocation3 + $0x168] sm:$0xff]
        %v2149 = vld [vmem:[#allocation3 + $0x170] sm:$0xff]
        %v2150 = vld [vmem:[#allocation3 + $0x178] sm:$0xff]
        %v2151 = vld [vmem:[#allocation3 + $0x180] sm:$0xff]
        %v2152 = vld [vmem:[#allocation3 + $0x188] sm:$0xff]
        %v2153 = vld [vmem:[#allocation3 + $0x190] sm:$0xff]
        %v2154 = vld [vmem:[#allocation3 + $0x198] sm:$0xff]
        %v2155 = vld [vmem:[#allocation3 + $0x1a0] sm:$0xff]
        %v2156 = vld [vmem:[#allocation3 + $0x1a8] sm:$0xff]
        %v2157 = vld [vmem:[#allocation3 + $0x1b0] sm:$0xff]
        %v2158 = vld [vmem:[#allocation3 + $0x1b8] sm:$0xff]
        %v2159 = vld [vmem:[#allocation3 + $0x1c0] sm:$0xff]
        %v2160 = vld [vmem:[#allocation3 + $0x1c8] sm:$0xff]
        %v2161 = vld [vmem:[#allocation3 + $0x1d0] sm:$0xff]
        %v2162 = vld [vmem:[#allocation3 + $0x1d8] sm:$0xff]
        %v2163 = vld [vmem:[#allocation3 + $0x1e0] sm:$0xff]
        %v2164 = vld [vmem:[#allocation3 + $0x1e8] sm:$0xff]
        %v2165 = vld [vmem:[#allocation3 + $0x1f0] sm:$0xff]
        %v2166 = vld [vmem:[#allocation3 + $0x1f8] sm:$0xff]
        %v2167 = vcvt.s32.f32 %v1141
        %v2168 = vcvt.s32.f32 %v1142
        %v2169 = vcvt.s32.f32 %v1143
        %v2170 = vcvt.s32.f32 %v1144
        %v2171 = vcvt.s32.f32 %v1145
        %v2172 = vcvt.s32.f32 %v1146
        %v2173 = vcvt.s32.f32 %v1147
        %v2174 = vcvt.s32.f32 %v1148
        %v2175 = vcvt.s32.f32 %v1149
        %v2176 = vcvt.s32.f32 %v1150
        %v2177 = vcvt.s32.f32 %v1151
        %v2178 = vcvt.s32.f32 %v1152
        %v2179 = vcvt.s32.f32 %v1153
        %v2180 = vcvt.s32.f32 %v1154
        %v2181 = vcvt.s32.f32 %v1155
        %v2182 = vcvt.s32.f32 %v1156
        %v2183 = vcvt.s32.f32 %v1157
        %v2184 = vcvt.s32.f32 %v1158
        %v2185 = vcvt.s32.f32 %v1159
        %v2186 = vcvt.s32.f32 %v1160
        %v2187 = vcvt.s32.f32 %v1161
        %v2188 = vcvt.s32.f32 %v1162
        %v2189 = vcvt.s32.f32 %v1163
        %v2190 = vcvt.s32.f32 %v1164
        %v2191 = vcvt.s32.f32 %v1165
        %v2192 = vcvt.s32.f32 %v1166
        %v2193 = vcvt.s32.f32 %v1167
        %v2194 = vcvt.s32.f32 %v1168
        %v2195 = vcvt.s32.f32 %v1169
        %v2196 = vcvt.s32.f32 %v1170
        %v2197 = vcvt.s32.f32 %v1171
        %v2198 = vcvt.s32.f32 %v1172
        %v2199 = vcvt.s32.f32 %v1173
        %v2200 = vcvt.s32.f32 %v1174
        %v2201 = vcvt.s32.f32 %v1175
        %v2202 = vcvt.s32.f32 %v1176
        %v2203 = vcvt.s32.f32 %v1177
        %v2204 = vcvt.s32.f32 %v1178
        %v2205 = vcvt.s32.f32 %v1179
        %v2206 = vcvt.s32.f32 %v1180
        %v2207 = vcvt.s32.f32 %v1181
        %v2208 = vcvt.s32.f32 %v1182
        %v2209 = vcvt.s32.f32 %v1183
        %v2210 = vcvt.s32.f32 %v1184
        %v2211 = vcvt.s32.f32 %v1185
        %v2212 = vcvt.s32.f32 %v1186
        %v2213 = vcvt.s32.f32 %v1187
        %v2214 = vcvt.s32.f32 %v1188
        %v2215 = vcvt.s32.f32 %v1189
        %v2216 = vcvt.s32.f32 %v1190
        %v2217 = vcvt.s32.f32 %v1191
        %v2218 = vcvt.s32.f32 %v1192
        %v2219 = vcvt.s32.f32 %v1193
        %v2220 = vcvt.s32.f32 %v1194
        %v2221 = vcvt.s32.f32 %v1195
        %v2222 = vcvt.s32.f32 %v1196
        %v2223 = vcvt.s32.f32 %v1197
        %v2224 = vcvt.s32.f32 %v1198
        %v2225 = vcvt.s32.f32 %v1199
        %v2226 = vcvt.s32.f32 %v1200
        %v2227 = vcvt.s32.f32 %v1201
        %v2228 = vcvt.s32.f32 %v1202
        %v2229 = vcvt.s32.f32 %v1203
        %v2230 = vcvt.s32.f32 %v1204
        %v2231 = vadd.f32 %v2103, %v2167
        %v2232 = vadd.f32 %v2104, %v2168
        %v2233 = vadd.f32 %v2105, %v2169
        %v2234 = vadd.f32 %v2106, %v2170
        %v2235 = vadd.f32 %v2107, %v2171
        %v2236 = vadd.f32 %v2108, %v2172
        %v2237 = vadd.f32 %v2109, %v2173
        %v2238 = vadd.f32 %v2110, %v2174
        %v2239 = vadd.f32 %v2111, %v2175
        %v2240 = vadd.f32 %v2112, %v2176
        %v2241 = vadd.f32 %v2113, %v2177
        %v2242 = vadd.f32 %v2114, %v2178
        %v2243 = vadd.f32 %v2115, %v2179
        %v2244 = vadd.f32 %v2116, %v2180
        %v2245 = vadd.f32 %v2117, %v2181
        %v2246 = vadd.f32 %v2118, %v2182
        %v2247 = vadd.f32 %v2119, %v2183
        %v2248 = vadd.f32 %v2120, %v2184
        %v2249 = vadd.f32 %v2121, %v2185
        %v2250 = vadd.f32 %v2122, %v2186
        %v2251 = vadd.f32 %v2123, %v2187
        %v2252 = vadd.f32 %v2124, %v2188
        %v2253 = vadd.f32 %v2125, %v2189
        %v2254 = vadd.f32 %v2126, %v2190
        %v2255 = vadd.f32 %v2127, %v2191
        %v2256 = vadd.f32 %v2128, %v2192
        %v2257 = vadd.f32 %v2129, %v2193
        %v2258 = vadd.f32 %v2130, %v2194
        %v2259 = vadd.f32 %v2131, %v2195
        %v2260 = vadd.f32 %v2132, %v2196
        %v2261 = vadd.f32 %v2133, %v2197
        %v2262 = vadd.f32 %v2134, %v2198
        %v2263 = vadd.f32 %v2135, %v2199
        %v2264 = vadd.f32 %v2136, %v2200
        %v2265 = vadd.f32 %v2137, %v2201
        %v2266 = vadd.f32 %v2138, %v2202
        %v2267 = vadd.f32 %v2139, %v2203
        %v2268 = vadd.f32 %v2140, %v2204
        %v2269 = vadd.f32 %v2141, %v2205
        %v2270 = vadd.f32 %v2142, %v2206
        %v2271 = vadd.f32 %v2143, %v2207
        %v2272 = vadd.f32 %v2144, %v2208
        %v2273 = vadd.f32 %v2145, %v2209
        %v2274 = vadd.f32 %v2146, %v2210
        %v2275 = vadd.f32 %v2147, %v2211
        %v2276 = vadd.f32 %v2148, %v2212
        %v2277 = vadd.f32 %v2149, %v2213
        %v2278 = vadd.f32 %v2150, %v2214
        %v2279 = vadd.f32 %v2151, %v2215
        %v2280 = vadd.f32 %v2152, %v2216
        %v2281 = vadd.f32 %v2153, %v2217
        %v2282 = vadd.f32 %v2154, %v2218
        %v2283 = vadd.f32 %v2155, %v2219
        %v2284 = vadd.f32 %v2156, %v2220
        %v2285 = vadd.f32 %v2157, %v2221
        %v2286 = vadd.f32 %v2158, %v2222
        %v2287 = vadd.f32 %v2159, %v2223
        %v2288 = vadd.f32 %v2160, %v2224
        %v2289 = vadd.f32 %v2161, %v2225
        %v2290 = vadd.f32 %v2162, %v2226
        %v2291 = vadd.f32 %v2163, %v2227
        %v2292 = vadd.f32 %v2164, %v2228
        %v2293 = vadd.f32 %v2165, %v2229
        %v2294 = vadd.f32 %v2166, %v2230
        %2295 = vst.msk [vmem:[#allocation3] sm:$0xff] %vm2038, %v2231
        %2296 = vst.msk [vmem:[#allocation3 + $0x8] sm:$0xff] %vm2038, %v2232
        %2297 = vst.msk [vmem:[#allocation3 + $0x10] sm:$0xff] %vm2038, %v2233
        %2298 = vst.msk [vmem:[#allocation3 + $0x18] sm:$0xff] %vm2038, %v2234
        %2299 = vst.msk [vmem:[#allocation3 + $0x20] sm:$0xff] %vm2038, %v2235
        %2300 = vst.msk [vmem:[#allocation3 + $0x28] sm:$0xff] %vm2038, %v2236
        %2301 = vst.msk [vmem:[#allocation3 + $0x30] sm:$0xff] %vm2038, %v2237
        %2302 = vst.msk [vmem:[#allocation3 + $0x38] sm:$0xff] %vm2038, %v2238
        %2303 = vst.msk [vmem:[#allocation3 + $0x40] sm:$0xff] %vm2038, %v2239
        %2304 = vst.msk [vmem:[#allocation3 + $0x48] sm:$0xff] %vm2038, %v2240
        %2305 = vst.msk [vmem:[#allocation3 + $0x50] sm:$0xff] %vm2038, %v2241
        %2306 = vst.msk [vmem:[#allocation3 + $0x58] sm:$0xff] %vm2038, %v2242
        %2307 = vst.msk [vmem:[#allocation3 + $0x60] sm:$0xff] %vm2038, %v2243
        %2308 = vst.msk [vmem:[#allocation3 + $0x68] sm:$0xff] %vm2038, %v2244
        %2309 = vst.msk [vmem:[#allocation3 + $0x70] sm:$0xff] %vm2038, %v2245
        %2310 = vst.msk [vmem:[#allocation3 + $0x78] sm:$0xff] %vm2038, %v2246
        %2311 = vst.msk [vmem:[#allocation3 + $0x80] sm:$0xff] %vm2038, %v2247
        %2312 = vst.msk [vmem:[#allocation3 + $0x88] sm:$0xff] %vm2038, %v2248
        %2313 = vst.msk [vmem:[#allocation3 + $0x90] sm:$0xff] %vm2038, %v2249
        %2314 = vst.msk [vmem:[#allocation3 + $0x98] sm:$0xff] %vm2038, %v2250
        %2315 = vst.msk [vmem:[#allocation3 + $0xa0] sm:$0xff] %vm2038, %v2251
        %2316 = vst.msk [vmem:[#allocation3 + $0xa8] sm:$0xff] %vm2038, %v2252
        %2317 = vst.msk [vmem:[#allocation3 + $0xb0] sm:$0xff] %vm2038, %v2253
        %2318 = vst.msk [vmem:[#allocation3 + $0xb8] sm:$0xff] %vm2038, %v2254
        %2319 = vst.msk [vmem:[#allocation3 + $0xc0] sm:$0xff] %vm2038, %v2255
        %2320 = vst.msk [vmem:[#allocation3 + $0xc8] sm:$0xff] %vm2038, %v2256
        %2321 = vst.msk [vmem:[#allocation3 + $0xd0] sm:$0xff] %vm2038, %v2257
        %2322 = vst.msk [vmem:[#allocation3 + $0xd8] sm:$0xff] %vm2038, %v2258
        %2323 = vst.msk [vmem:[#allocation3 + $0xe0] sm:$0xff] %vm2038, %v2259
        %2324 = vst.msk [vmem:[#allocation3 + $0xe8] sm:$0xff] %vm2038, %v2260
        %2325 = vst.msk [vmem:[#allocation3 + $0xf0] sm:$0xff] %vm2038, %v2261
        %2326 = vst.msk [vmem:[#allocation3 + $0xf8] sm:$0xff] %vm2038, %v2262
        %2327 = vst.msk [vmem:[#allocation3 + $0x100] sm:$0xff] %vm2038, %v2263
        %2328 = vst.msk [vmem:[#allocation3 + $0x108] sm:$0xff] %vm2038, %v2264
        %2329 = vst.msk [vmem:[#allocation3 + $0x110] sm:$0xff] %vm2038, %v2265
        %2330 = vst.msk [vmem:[#allocation3 + $0x118] sm:$0xff] %vm2038, %v2266
        %2331 = vst.msk [vmem:[#allocation3 + $0x120] sm:$0xff] %vm2038, %v2267
        %2332 = vst.msk [vmem:[#allocation3 + $0x128] sm:$0xff] %vm2038, %v2268
        %2333 = vst.msk [vmem:[#allocation3 + $0x130] sm:$0xff] %vm2038, %v2269
        %2334 = vst.msk [vmem:[#allocation3 + $0x138] sm:$0xff] %vm2038, %v2270
        %2335 = vst.msk [vmem:[#allocation3 + $0x140] sm:$0xff] %vm2038, %v2271
        %2336 = vst.msk [vmem:[#allocation3 + $0x148] sm:$0xff] %vm2038, %v2272
        %2337 = vst.msk [vmem:[#allocation3 + $0x150] sm:$0xff] %vm2038, %v2273
        %2338 = vst.msk [vmem:[#allocation3 + $0x158] sm:$0xff] %vm2038, %v2274
        %2339 = vst.msk [vmem:[#allocation3 + $0x160] sm:$0xff] %vm2038, %v2275
        %2340 = vst.msk [vmem:[#allocation3 + $0x168] sm:$0xff] %vm2038, %v2276
        %2341 = vst.msk [vmem:[#allocation3 + $0x170] sm:$0xff] %vm2038, %v2277
        %2342 = vst.msk [vmem:[#allocation3 + $0x178] sm:$0xff] %vm2038, %v2278
        %2343 = vst.msk [vmem:[#allocation3 + $0x180] sm:$0xff] %vm2038, %v2279
        %2344 = vst.msk [vmem:[#allocation3 + $0x188] sm:$0xff] %vm2038, %v2280
        %2345 = vst.msk [vmem:[#allocation3 + $0x190] sm:$0xff] %vm2038, %v2281
        %2346 = vst.msk [vmem:[#allocation3 + $0x198] sm:$0xff] %vm2038, %v2282
        %2347 = vst.msk [vmem:[#allocation3 + $0x1a0] sm:$0xff] %vm2038, %v2283
        %2348 = vst.msk [vmem:[#allocation3 + $0x1a8] sm:$0xff] %vm2038, %v2284
        %2349 = vst.msk [vmem:[#allocation3 + $0x1b0] sm:$0xff] %vm2038, %v2285
        %2350 = vst.msk [vmem:[#allocation3 + $0x1b8] sm:$0xff] %vm2038, %v2286
        %2351 = vst.msk [vmem:[#allocation3 + $0x1c0] sm:$0xff] %vm2038, %v2287
        %2352 = vst.msk [vmem:[#allocation3 + $0x1c8] sm:$0xff] %vm2038, %v2288
        %2353 = vst.msk [vmem:[#allocation3 + $0x1d0] sm:$0xff] %vm2038, %v2289
        %2354 = vst.msk [vmem:[#allocation3 + $0x1d8] sm:$0xff] %vm2038, %v2290
        %2355 = vst.msk [vmem:[#allocation3 + $0x1e0] sm:$0xff] %vm2038, %v2291
        %2356 = vst.msk [vmem:[#allocation3 + $0x1e8] sm:$0xff] %vm2038, %v2292
        %2357 = vst.msk [vmem:[#allocation3 + $0x1f0] sm:$0xff] %vm2038, %v2293
        %2358 = vst.msk [vmem:[#allocation3 + $0x1f8] sm:$0xff] %vm2038, %v2294
        // Predicated region
        $region33: #{tpu_custom_call.1} parent=27 // pred_check
          %p2359 = pneg %p298
        $region34: #{tpu_custom_call.1} parent=27 // pred_check_branch
          %2361 = sbr.rel (%p2359) target = $region36
        $region35: #{tpu_custom_call.1} parent=27 // pred_region
          %v2362 = vld [vmem:[#allocation2] sm:$0xff]
          %v2363 = vld [vmem:[#allocation2 + $0x8] sm:$0xff]
          %v2364 = vld [vmem:[#allocation2 + $0x10] sm:$0xff]
          %v2365 = vld [vmem:[#allocation2 + $0x18] sm:$0xff]
          %v2366 = vld [vmem:[#allocation2 + $0x20] sm:$0xff]
          %v2367 = vld [vmem:[#allocation2 + $0x28] sm:$0xff]
          %v2368 = vld [vmem:[#allocation2 + $0x30] sm:$0xff]
          %v2369 = vld [vmem:[#allocation2 + $0x38] sm:$0xff]
          %v2370 = vld [vmem:[#allocation2 + $0x40] sm:$0xff]
          %v2371 = vld [vmem:[#allocation2 + $0x48] sm:$0xff]
          %v2372 = vld [vmem:[#allocation2 + $0x50] sm:$0xff]
          %v2373 = vld [vmem:[#allocation2 + $0x58] sm:$0xff]
          %v2374 = vld [vmem:[#allocation2 + $0x60] sm:$0xff]
          %v2375 = vld [vmem:[#allocation2 + $0x68] sm:$0xff]
          %v2376 = vld [vmem:[#allocation2 + $0x70] sm:$0xff]
          %v2377 = vld [vmem:[#allocation2 + $0x78] sm:$0xff]
          %v2378 = vld [vmem:[#allocation2 + $0x80] sm:$0xff]
          %v2379 = vld [vmem:[#allocation2 + $0x88] sm:$0xff]
          %v2380 = vld [vmem:[#allocation2 + $0x90] sm:$0xff]
          %v2381 = vld [vmem:[#allocation2 + $0x98] sm:$0xff]
          %v2382 = vld [vmem:[#allocation2 + $0xa0] sm:$0xff]
          %v2383 = vld [vmem:[#allocation2 + $0xa8] sm:$0xff]
          %v2384 = vld [vmem:[#allocation2 + $0xb0] sm:$0xff]
          %v2385 = vld [vmem:[#allocation2 + $0xb8] sm:$0xff]
          %v2386 = vld [vmem:[#allocation2 + $0xc0] sm:$0xff]
          %v2387 = vld [vmem:[#allocation2 + $0xc8] sm:$0xff]
          %v2388 = vld [vmem:[#allocation2 + $0xd0] sm:$0xff]
          %v2389 = vld [vmem:[#allocation2 + $0xd8] sm:$0xff]
          %v2390 = vld [vmem:[#allocation2 + $0xe0] sm:$0xff]
          %v2391 = vld [vmem:[#allocation2 + $0xe8] sm:$0xff]
          %v2392 = vld [vmem:[#allocation2 + $0xf0] sm:$0xff]
          %v2393 = vld [vmem:[#allocation2 + $0xf8] sm:$0xff]
          %v2394 = vld [vmem:[#allocation2 + $0x100] sm:$0xff]
          %v2395 = vld [vmem:[#allocation2 + $0x108] sm:$0xff]
          %v2396 = vld [vmem:[#allocation2 + $0x110] sm:$0xff]
          %v2397 = vld [vmem:[#allocation2 + $0x118] sm:$0xff]
          %v2398 = vld [vmem:[#allocation2 + $0x120] sm:$0xff]
          %v2399 = vld [vmem:[#allocation2 + $0x128] sm:$0xff]
          %v2400 = vld [vmem:[#allocation2 + $0x130] sm:$0xff]
          %v2401 = vld [vmem:[#allocation2 + $0x138] sm:$0xff]
          %v2402 = vld [vmem:[#allocation2 + $0x140] sm:$0xff]
          %v2403 = vld [vmem:[#allocation2 + $0x148] sm:$0xff]
          %v2404 = vld [vmem:[#allocation2 + $0x150] sm:$0xff]
          %v2405 = vld [vmem:[#allocation2 + $0x158] sm:$0xff]
          %v2406 = vld [vmem:[#allocation2 + $0x160] sm:$0xff]
          %v2407 = vld [vmem:[#allocation2 + $0x168] sm:$0xff]
          %v2408 = vld [vmem:[#allocation2 + $0x170] sm:$0xff]
          %v2409 = vld [vmem:[#allocation2 + $0x178] sm:$0xff]
          %v2410 = vld [vmem:[#allocation2 + $0x180] sm:$0xff]
          %v2411 = vld [vmem:[#allocation2 + $0x188] sm:$0xff]
          %v2412 = vld [vmem:[#allocation2 + $0x190] sm:$0xff]
          %v2413 = vld [vmem:[#allocation2 + $0x198] sm:$0xff]
          %v2414 = vld [vmem:[#allocation2 + $0x1a0] sm:$0xff]
          %v2415 = vld [vmem:[#allocation2 + $0x1a8] sm:$0xff]
          %v2416 = vld [vmem:[#allocation2 + $0x1b0] sm:$0xff]
          %v2417 = vld [vmem:[#allocation2 + $0x1b8] sm:$0xff]
          %v2418 = vld [vmem:[#allocation2 + $0x1c0] sm:$0xff]
          %v2419 = vld [vmem:[#allocation2 + $0x1c8] sm:$0xff]
          %v2420 = vld [vmem:[#allocation2 + $0x1d0] sm:$0xff]
          %v2421 = vld [vmem:[#allocation2 + $0x1d8] sm:$0xff]
          %v2422 = vld [vmem:[#allocation2 + $0x1e0] sm:$0xff]
          %v2423 = vld [vmem:[#allocation2 + $0x1e8] sm:$0xff]
          %v2424 = vld [vmem:[#allocation2 + $0x1f0] sm:$0xff]
          %v2425 = vld [vmem:[#allocation2 + $0x1f8] sm:$0xff]
          %v2426 = vsel %vm2038, %v2362, 0.0
          %v2427 = vsel %vm2038, %v2363, 0.0
          %v2428 = vadd.f32 %v2426, %v2427
          %v2429 = vsel %vm2038, %v2364, 0.0
          %v2430 = vadd.f32 %v2428, %v2429
          %v2431 = vsel %vm2038, %v2365, 0.0
          %v2432 = vadd.f32 %v2430, %v2431
          %v2433 = vsel %vm2038, %v2366, 0.0
          %v2434 = vadd.f32 %v2432, %v2433
          %v2435 = vsel %vm2038, %v2367, 0.0
          %v2436 = vadd.f32 %v2434, %v2435
          %v2437 = vsel %vm2038, %v2368, 0.0
          %v2438 = vadd.f32 %v2436, %v2437
          %v2439 = vsel %vm2038, %v2369, 0.0
          %v2440 = vadd.f32 %v2438, %v2439
          %v2441 = vsel %vm2038, %v2370, 0.0
          %v2442 = vadd.f32 %v2440, %v2441
          %v2443 = vsel %vm2038, %v2371, 0.0
          %v2444 = vadd.f32 %v2442, %v2443
          %v2445 = vsel %vm2038, %v2372, 0.0
          %v2446 = vadd.f32 %v2444, %v2445
          %v2447 = vsel %vm2038, %v2373, 0.0
          %v2448 = vadd.f32 %v2446, %v2447
          %v2449 = vsel %vm2038, %v2374, 0.0
          %v2450 = vadd.f32 %v2448, %v2449
          %v2451 = vsel %vm2038, %v2375, 0.0
          %v2452 = vadd.f32 %v2450, %v2451
          %v2453 = vsel %vm2038, %v2376, 0.0
          %v2454 = vadd.f32 %v2452, %v2453
          %v2455 = vsel %vm2038, %v2377, 0.0
          %v2456 = vadd.f32 %v2454, %v2455
          %v2457 = vsel %vm2038, %v2378, 0.0
          %v2458 = vadd.f32 %v2456, %v2457
          %v2459 = vsel %vm2038, %v2379, 0.0
          %v2460 = vadd.f32 %v2458, %v2459
          %v2461 = vsel %vm2038, %v2380, 0.0
          %v2462 = vadd.f32 %v2460, %v2461
          %v2463 = vsel %vm2038, %v2381, 0.0
          %v2464 = vadd.f32 %v2462, %v2463
          %v2465 = vsel %vm2038, %v2382, 0.0
          %v2466 = vadd.f32 %v2464, %v2465
          %v2467 = vsel %vm2038, %v2383, 0.0
          %v2468 = vadd.f32 %v2466, %v2467
          %v2469 = vsel %vm2038, %v2384, 0.0
          %v2470 = vadd.f32 %v2468, %v2469
          %v2471 = vsel %vm2038, %v2385, 0.0
          %v2472 = vadd.f32 %v2470, %v2471
          %v2473 = vsel %vm2038, %v2386, 0.0
          %v2474 = vadd.f32 %v2472, %v2473
          %v2475 = vsel %vm2038, %v2387, 0.0
          %v2476 = vadd.f32 %v2474, %v2475
          %v2477 = vsel %vm2038, %v2388, 0.0
          %v2478 = vadd.f32 %v2476, %v2477
          %v2479 = vsel %vm2038, %v2389, 0.0
          %v2480 = vadd.f32 %v2478, %v2479
          %v2481 = vsel %vm2038, %v2390, 0.0
          %v2482 = vadd.f32 %v2480, %v2481
          %v2483 = vsel %vm2038, %v2391, 0.0
          %v2484 = vadd.f32 %v2482, %v2483
          %v2485 = vsel %vm2038, %v2392, 0.0
          %v2486 = vadd.f32 %v2484, %v2485
          %v2487 = vsel %vm2038, %v2393, 0.0
          %v2488 = vadd.f32 %v2486, %v2487
          %v2489 = vsel %vm2038, %v2394, 0.0
          %v2490 = vadd.f32 %v2488, %v2489
          %v2491 = vsel %vm2038, %v2395, 0.0
          %v2492 = vadd.f32 %v2490, %v2491
          %v2493 = vsel %vm2038, %v2396, 0.0
          %v2494 = vadd.f32 %v2492, %v2493
          %v2495 = vsel %vm2038, %v2397, 0.0
          %v2496 = vadd.f32 %v2494, %v2495
          %v2497 = vsel %vm2038, %v2398, 0.0
          %v2498 = vadd.f32 %v2496, %v2497
          %v2499 = vsel %vm2038, %v2399, 0.0
          %v2500 = vadd.f32 %v2498, %v2499
          %v2501 = vsel %vm2038, %v2400, 0.0
          %v2502 = vadd.f32 %v2500, %v2501
          %v2503 = vsel %vm2038, %v2401, 0.0
          %v2504 = vadd.f32 %v2502, %v2503
          %v2505 = vsel %vm2038, %v2402, 0.0
          %v2506 = vadd.f32 %v2504, %v2505
          %v2507 = vsel %vm2038, %v2403, 0.0
          %v2508 = vadd.f32 %v2506, %v2507
          %v2509 = vsel %vm2038, %v2404, 0.0
          %v2510 = vadd.f32 %v2508, %v2509
          %v2511 = vsel %vm2038, %v2405, 0.0
          %v2512 = vadd.f32 %v2510, %v2511
          %v2513 = vsel %vm2038, %v2406, 0.0
          %v2514 = vadd.f32 %v2512, %v2513
          %v2515 = vsel %vm2038, %v2407, 0.0
          %v2516 = vadd.f32 %v2514, %v2515
          %v2517 = vsel %vm2038, %v2408, 0.0
          %v2518 = vadd.f32 %v2516, %v2517
          %v2519 = vsel %vm2038, %v2409, 0.0
          %v2520 = vadd.f32 %v2518, %v2519
          %v2521 = vsel %vm2038, %v2410, 0.0
          %v2522 = vadd.f32 %v2520, %v2521
          %v2523 = vsel %vm2038, %v2411, 0.0
          %v2524 = vadd.f32 %v2522, %v2523
          %v2525 = vsel %vm2038, %v2412, 0.0
          %v2526 = vadd.f32 %v2524, %v2525
          %v2527 = vsel %vm2038, %v2413, 0.0
          %v2528 = vadd.f32 %v2526, %v2527
          %v2529 = vsel %vm2038, %v2414, 0.0
          %v2530 = vadd.f32 %v2528, %v2529
          %v2531 = vsel %vm2038, %v2415, 0.0
          %v2532 = vadd.f32 %v2530, %v2531
          %v2533 = vsel %vm2038, %v2416, 0.0
          %v2534 = vadd.f32 %v2532, %v2533
          %v2535 = vsel %vm2038, %v2417, 0.0
          %v2536 = vadd.f32 %v2534, %v2535
          %v2537 = vsel %vm2038, %v2418, 0.0
          %v2538 = vadd.f32 %v2536, %v2537
          %v2539 = vsel %vm2038, %v2419, 0.0
          %v2540 = vadd.f32 %v2538, %v2539
          %v2541 = vsel %vm2038, %v2420, 0.0
          %v2542 = vadd.f32 %v2540, %v2541
          %v2543 = vsel %vm2038, %v2421, 0.0
          %v2544 = vadd.f32 %v2542, %v2543
          %v2545 = vsel %vm2038, %v2422, 0.0
          %v2546 = vadd.f32 %v2544, %v2545
          %v2547 = vsel %vm2038, %v2423, 0.0
          %v2548 = vadd.f32 %v2546, %v2547
          %v2549 = vsel %vm2038, %v2424, 0.0
          %v2550 = vadd.f32 %v2548, %v2549
          %v2551 = vsel %vm2038, %v2425, 0.0
          %v2552 = vadd.f32 %v2550, %v2551
          %2553 = vadd.xlane.f32.xlu0 %v2552
          %v2554 = vpop.xlane.xlu0 %2553
          %v2555 = vrot.slane %v2554, 4
          %v2556 = vadd.f32 %v2554, %v2555
          %v2557 = vrot.slane %v2556, 2
          %v2558 = vadd.f32 %v2556, %v2557
          %v2559 = vrot.slane %v2558, 1
          %v2560 = vadd.f32 %v2558, %v2559
          %s2561 = vtos %v2560
          %v2562 = vld [vmem:[#allocation3] sm:$0xff]
          %v2563 = vld [vmem:[#allocation3 + $0x8] sm:$0xff]
          %v2564 = vld [vmem:[#allocation3 + $0x10] sm:$0xff]
          %v2565 = vld [vmem:[#allocation3 + $0x18] sm:$0xff]
          %v2566 = vld [vmem:[#allocation3 + $0x20] sm:$0xff]
          %v2567 = vld [vmem:[#allocation3 + $0x28] sm:$0xff]
          %v2568 = vld [vmem:[#allocation3 + $0x30] sm:$0xff]
          %v2569 = vld [vmem:[#allocation3 + $0x38] sm:$0xff]
          %v2570 = vld [vmem:[#allocation3 + $0x40] sm:$0xff]
          %v2571 = vld [vmem:[#allocation3 + $0x48] sm:$0xff]
          %v2572 = vld [vmem:[#allocation3 + $0x50] sm:$0xff]
          %v2573 = vld [vmem:[#allocation3 + $0x58] sm:$0xff]
          %v2574 = vld [vmem:[#allocation3 + $0x60] sm:$0xff]
          %v2575 = vld [vmem:[#allocation3 + $0x68] sm:$0xff]
          %v2576 = vld [vmem:[#allocation3 + $0x70] sm:$0xff]
          %v2577 = vld [vmem:[#allocation3 + $0x78] sm:$0xff]
          %v2578 = vld [vmem:[#allocation3 + $0x80] sm:$0xff]
          %v2579 = vld [vmem:[#allocation3 + $0x88] sm:$0xff]
          %v2580 = vld [vmem:[#allocation3 + $0x90] sm:$0xff]
          %v2581 = vld [vmem:[#allocation3 + $0x98] sm:$0xff]
          %v2582 = vld [vmem:[#allocation3 + $0xa0] sm:$0xff]
          %v2583 = vld [vmem:[#allocation3 + $0xa8] sm:$0xff]
          %v2584 = vld [vmem:[#allocation3 + $0xb0] sm:$0xff]
          %v2585 = vld [vmem:[#allocation3 + $0xb8] sm:$0xff]
          %v2586 = vld [vmem:[#allocation3 + $0xc0] sm:$0xff]
          %v2587 = vld [vmem:[#allocation3 + $0xc8] sm:$0xff]
          %v2588 = vld [vmem:[#allocation3 + $0xd0] sm:$0xff]
          %v2589 = vld [vmem:[#allocation3 + $0xd8] sm:$0xff]
          %v2590 = vld [vmem:[#allocation3 + $0xe0] sm:$0xff]
          %v2591 = vld [vmem:[#allocation3 + $0xe8] sm:$0xff]
          %v2592 = vld [vmem:[#allocation3 + $0xf0] sm:$0xff]
          %v2593 = vld [vmem:[#allocation3 + $0xf8] sm:$0xff]
          %v2594 = vld [vmem:[#allocation3 + $0x100] sm:$0xff]
          %v2595 = vld [vmem:[#allocation3 + $0x108] sm:$0xff]
          %v2596 = vld [vmem:[#allocation3 + $0x110] sm:$0xff]
          %v2597 = vld [vmem:[#allocation3 + $0x118] sm:$0xff]
          %v2598 = vld [vmem:[#allocation3 + $0x120] sm:$0xff]
          %v2599 = vld [vmem:[#allocation3 + $0x128] sm:$0xff]
          %v2600 = vld [vmem:[#allocation3 + $0x130] sm:$0xff]
          %v2601 = vld [vmem:[#allocation3 + $0x138] sm:$0xff]
          %v2602 = vld [vmem:[#allocation3 + $0x140] sm:$0xff]
          %v2603 = vld [vmem:[#allocation3 + $0x148] sm:$0xff]
          %v2604 = vld [vmem:[#allocation3 + $0x150] sm:$0xff]
          %v2605 = vld [vmem:[#allocation3 + $0x158] sm:$0xff]
          %v2606 = vld [vmem:[#allocation3 + $0x160] sm:$0xff]
          %v2607 = vld [vmem:[#allocation3 + $0x168] sm:$0xff]
          %v2608 = vld [vmem:[#allocation3 + $0x170] sm:$0xff]
          %v2609 = vld [vmem:[#allocation3 + $0x178] sm:$0xff]
          %v2610 = vld [vmem:[#allocation3 + $0x180] sm:$0xff]
          %v2611 = vld [vmem:[#allocation3 + $0x188] sm:$0xff]
          %v2612 = vld [vmem:[#allocation3 + $0x190] sm:$0xff]
          %v2613 = vld [vmem:[#allocation3 + $0x198] sm:$0xff]
          %v2614 = vld [vmem:[#allocation3 + $0x1a0] sm:$0xff]
          %v2615 = vld [vmem:[#allocation3 + $0x1a8] sm:$0xff]
          %v2616 = vld [vmem:[#allocation3 + $0x1b0] sm:$0xff]
          %v2617 = vld [vmem:[#allocation3 + $0x1b8] sm:$0xff]
          %v2618 = vld [vmem:[#allocation3 + $0x1c0] sm:$0xff]
          %v2619 = vld [vmem:[#allocation3 + $0x1c8] sm:$0xff]
          %v2620 = vld [vmem:[#allocation3 + $0x1d0] sm:$0xff]
          %v2621 = vld [vmem:[#allocation3 + $0x1d8] sm:$0xff]
          %v2622 = vld [vmem:[#allocation3 + $0x1e0] sm:$0xff]
          %v2623 = vld [vmem:[#allocation3 + $0x1e8] sm:$0xff]
          %v2624 = vld [vmem:[#allocation3 + $0x1f0] sm:$0xff]
          %v2625 = vld [vmem:[#allocation3 + $0x1f8] sm:$0xff]
          %v2626 = vsel %vm2038, %v2562, 0.0
          %v2627 = vsel %vm2038, %v2563, 0.0
          %v2628 = vadd.f32 %v2626, %v2627
          %v2629 = vsel %vm2038, %v2564, 0.0
          %v2630 = vadd.f32 %v2628, %v2629
          %v2631 = vsel %vm2038, %v2565, 0.0
          %v2632 = vadd.f32 %v2630, %v2631
          %v2633 = vsel %vm2038, %v2566, 0.0
          %v2634 = vadd.f32 %v2632, %v2633
          %v2635 = vsel %vm2038, %v2567, 0.0
          %v2636 = vadd.f32 %v2634, %v2635
          %v2637 = vsel %vm2038, %v2568, 0.0
          %v2638 = vadd.f32 %v2636, %v2637
          %v2639 = vsel %vm2038, %v2569, 0.0
          %v2640 = vadd.f32 %v2638, %v2639
          %v2641 = vsel %vm2038, %v2570, 0.0
          %v2642 = vadd.f32 %v2640, %v2641
          %v2643 = vsel %vm2038, %v2571, 0.0
          %v2644 = vadd.f32 %v2642, %v2643
          %v2645 = vsel %vm2038, %v2572, 0.0
          %v2646 = vadd.f32 %v2644, %v2645
          %v2647 = vsel %vm2038, %v2573, 0.0
          %v2648 = vadd.f32 %v2646, %v2647
          %v2649 = vsel %vm2038, %v2574, 0.0
          %v2650 = vadd.f32 %v2648, %v2649
          %v2651 = vsel %vm2038, %v2575, 0.0
          %v2652 = vadd.f32 %v2650, %v2651
          %v2653 = vsel %vm2038, %v2576, 0.0
          %v2654 = vadd.f32 %v2652, %v2653
          %v2655 = vsel %vm2038, %v2577, 0.0
          %v2656 = vadd.f32 %v2654, %v2655
          %v2657 = vsel %vm2038, %v2578, 0.0
          %v2658 = vadd.f32 %v2656, %v2657
          %v2659 = vsel %vm2038, %v2579, 0.0
          %v2660 = vadd.f32 %v2658, %v2659
          %v2661 = vsel %vm2038, %v2580, 0.0
          %v2662 = vadd.f32 %v2660, %v2661
          %v2663 = vsel %vm2038, %v2581, 0.0
          %v2664 = vadd.f32 %v2662, %v2663
          %v2665 = vsel %vm2038, %v2582, 0.0
          %v2666 = vadd.f32 %v2664, %v2665
          %v2667 = vsel %vm2038, %v2583, 0.0
          %v2668 = vadd.f32 %v2666, %v2667
          %v2669 = vsel %vm2038, %v2584, 0.0
          %v2670 = vadd.f32 %v2668, %v2669
          %v2671 = vsel %vm2038, %v2585, 0.0
          %v2672 = vadd.f32 %v2670, %v2671
          %v2673 = vsel %vm2038, %v2586, 0.0
          %v2674 = vadd.f32 %v2672, %v2673
          %v2675 = vsel %vm2038, %v2587, 0.0
          %v2676 = vadd.f32 %v2674, %v2675
          %v2677 = vsel %vm2038, %v2588, 0.0
          %v2678 = vadd.f32 %v2676, %v2677
          %v2679 = vsel %vm2038, %v2589, 0.0
          %v2680 = vadd.f32 %v2678, %v2679
          %v2681 = vsel %vm2038, %v2590, 0.0
          %v2682 = vadd.f32 %v2680, %v2681
          %v2683 = vsel %vm2038, %v2591, 0.0
          %v2684 = vadd.f32 %v2682, %v2683
          %v2685 = vsel %vm2038, %v2592, 0.0
          %v2686 = vadd.f32 %v2684, %v2685
          %v2687 = vsel %vm2038, %v2593, 0.0
          %v2688 = vadd.f32 %v2686, %v2687
          %v2689 = vsel %vm2038, %v2594, 0.0
          %v2690 = vadd.f32 %v2688, %v2689
          %v2691 = vsel %vm2038, %v2595, 0.0
          %v2692 = vadd.f32 %v2690, %v2691
          %v2693 = vsel %vm2038, %v2596, 0.0
          %v2694 = vadd.f32 %v2692, %v2693
          %v2695 = vsel %vm2038, %v2597, 0.0
          %v2696 = vadd.f32 %v2694, %v2695
          %v2697 = vsel %vm2038, %v2598, 0.0
          %v2698 = vadd.f32 %v2696, %v2697
          %v2699 = vsel %vm2038, %v2599, 0.0
          %v2700 = vadd.f32 %v2698, %v2699
          %v2701 = vsel %vm2038, %v2600, 0.0
          %v2702 = vadd.f32 %v2700, %v2701
          %v2703 = vsel %vm2038, %v2601, 0.0
          %v2704 = vadd.f32 %v2702, %v2703
          %v2705 = vsel %vm2038, %v2602, 0.0
          %v2706 = vadd.f32 %v2704, %v2705
          %v2707 = vsel %vm2038, %v2603, 0.0
          %v2708 = vadd.f32 %v2706, %v2707
          %v2709 = vsel %vm2038, %v2604, 0.0
          %v2710 = vadd.f32 %v2708, %v2709
          %v2711 = vsel %vm2038, %v2605, 0.0
          %v2712 = vadd.f32 %v2710, %v2711
          %v2713 = vsel %vm2038, %v2606, 0.0
          %v2714 = vadd.f32 %v2712, %v2713
          %v2715 = vsel %vm2038, %v2607, 0.0
          %v2716 = vadd.f32 %v2714, %v2715
          %v2717 = vsel %vm2038, %v2608, 0.0
          %v2718 = vadd.f32 %v2716, %v2717
          %v2719 = vsel %vm2038, %v2609, 0.0
          %v2720 = vadd.f32 %v2718, %v2719
          %v2721 = vsel %vm2038, %v2610, 0.0
          %v2722 = vadd.f32 %v2720, %v2721
          %v2723 = vsel %vm2038, %v2611, 0.0
          %v2724 = vadd.f32 %v2722, %v2723
          %v2725 = vsel %vm2038, %v2612, 0.0
          %v2726 = vadd.f32 %v2724, %v2725
          %v2727 = vsel %vm2038, %v2613, 0.0
          %v2728 = vadd.f32 %v2726, %v2727
          %v2729 = vsel %vm2038, %v2614, 0.0
          %v2730 = vadd.f32 %v2728, %v2729
          %v2731 = vsel %vm2038, %v2615, 0.0
          %v2732 = vadd.f32 %v2730, %v2731
          %v2733 = vsel %vm2038, %v2616, 0.0
          %v2734 = vadd.f32 %v2732, %v2733
          %v2735 = vsel %vm2038, %v2617, 0.0
          %v2736 = vadd.f32 %v2734, %v2735
          %v2737 = vsel %vm2038, %v2618, 0.0
          %v2738 = vadd.f32 %v2736, %v2737
          %v2739 = vsel %vm2038, %v2619, 0.0
          %v2740 = vadd.f32 %v2738, %v2739
          %v2741 = vsel %vm2038, %v2620, 0.0
          %v2742 = vadd.f32 %v2740, %v2741
          %v2743 = vsel %vm2038, %v2621, 0.0
          %v2744 = vadd.f32 %v2742, %v2743
          %v2745 = vsel %vm2038, %v2622, 0.0
          %v2746 = vadd.f32 %v2744, %v2745
          %v2747 = vsel %vm2038, %v2623, 0.0
          %v2748 = vadd.f32 %v2746, %v2747
          %v2749 = vsel %vm2038, %v2624, 0.0
          %v2750 = vadd.f32 %v2748, %v2749
          %v2751 = vsel %vm2038, %v2625, 0.0
          %v2752 = vadd.f32 %v2750, %v2751
          %2753 = vadd.xlane.f32.xlu0 %v2752
          %v2754 = vpop.xlane.xlu0 %2753
          %v2755 = vrot.slane %v2754, 4
          %v2756 = vadd.f32 %v2754, %v2755
          %v2757 = vrot.slane %v2756, 2
          %v2758 = vadd.f32 %v2756, %v2757
          %v2759 = vrot.slane %v2758, 1
          %v2760 = vadd.f32 %v2758, %v2759
          %s2761 = vtos %v2760
          %v2762 = vstv %s2561
          %2763 = vst [vmem:[%s250] sm:$0xff] %v2762
          %v2764 = vstv %s2761
          %2765 = vst [vmem:[%s257] sm:$0xff] %v2764
        $region36: #{tpu_custom_call.1} parent=27 // pred_fallthru
          _
        %s2766 = sand.u32 %s105, 1
        %s2767 = scalar_lea.sflag [#allocation5], %s2766
        %s2768 = sand.u32 %s105, 1
        %s2769 = smul.addr %s2768, 8
        %s2770 = scalar_lea.vmem [#allocation4], %s2769
        %s2771 = sand.u32 %s131, 1
        %s2772 = scalar_lea.sflag [#allocation7], %s2771
        %s2773 = sand.u32 %s131, 1
        %s2774 = smul.addr %s2773, 8
        %s2775 = scalar_lea.vmem [#allocation6], %s2774
        // Predicated region
        $region37: #{tpu_custom_call.1} parent=27 // pred_check
          %p2776 = pneg %p115
        $region38: #{tpu_custom_call.1} parent=27 // pred_check_branch
          %2778 = sbr.rel (%p2776) target = $region40
        $region39: #{tpu_custom_call.1} parent=27 // pred_region
          %s2780 = ssub.s32 128, 128
          %2781 = vsyncadd %s2767, %s2780
          %s2782 = smul.addr %s25, 128
          %s2783 = scalar_lea.hbm %s2, %s2782
          %s2785 = sshll.u32 %s2770, 4
          %s2786 = int_to_ptr.vmem [resolvable:$true] %s2785
          %2788 = dma.vmem_to_hbm [thread:$0]  %s2786, 128, %s2783, %s2767
        $region40: #{tpu_custom_call.1} parent=27 // pred_fallthru
          _
        // Predicated region
        $region41: #{tpu_custom_call.1} parent=27 // pred_check
          %p2789 = pneg %p141
        $region42: #{tpu_custom_call.1} parent=27 // pred_check_branch
          %2791 = sbr.rel (%p2789) target = $region44
        $region43: #{tpu_custom_call.1} parent=27 // pred_region
          %s2793 = ssub.s32 128, 128
          %2794 = vsyncadd %s2772, %s2793
          %s2795 = smul.addr %s25, 128
          %s2796 = scalar_lea.hbm %s3, %s2795
          %s2798 = sshll.u32 %s2775, 4
          %s2799 = int_to_ptr.vmem [resolvable:$true] %s2798
          %2801 = dma.vmem_to_hbm [thread:$0]  %s2799, 128, %s2796, %s2772
        $region44: #{tpu_custom_call.1} parent=27 // pred_fallthru
          _
      $region28: #{tpu_custom_call.1} parent=5 // pred_fallthru
        _
      %p2802 = scmp.le.s32.totalorder 2, %s16
      // Predicated region
      $region45: #{tpu_custom_call.1} parent=5 // pred_check
        %p2803 = pneg %p2802
      $region46: #{tpu_custom_call.1} parent=5 // pred_check_branch
        %2805 = sbr.rel (%p2803) target = $region48
      $region47: #{tpu_custom_call.1} parent=5 // pred_region
        %s2806 = ssub.s32 %s16, 2
        // Predicated region
        $region49: #{tpu_custom_call.1} parent=47 // pred_check
          %p2807 = pneg %p121
        $region50: #{tpu_custom_call.1} parent=47 // pred_check_branch
          %2809 = sbr.rel (%p2807) target = $region52
        $region51: #{tpu_custom_call.1} parent=47 // pred_region
          %s2810 = sand.u32 %s106, 1
          %s2811 = scalar_lea.sflag [#allocation5], %s2810
          %s2812 = sand.u32 %s106, 1
          %s2813 = smul.addr %s2812, 8
          %s2814 = scalar_lea.vmem [#allocation4], %s2813
          %2815 = dma.done %s2811, 128
        $region52: #{tpu_custom_call.1} parent=47 // pred_fallthru
          _
        // Predicated region
        $region53: #{tpu_custom_call.1} parent=47 // pred_check
          %p2816 = pneg %p147
        $region54: #{tpu_custom_call.1} parent=47 // pred_check_branch
          %2818 = sbr.rel (%p2816) target = $region56
        $region55: #{tpu_custom_call.1} parent=47 // pred_region
          %s2819 = sand.u32 %s132, 1
          %s2820 = scalar_lea.sflag [#allocation7], %s2819
          %s2821 = sand.u32 %s132, 1
          %s2822 = smul.addr %s2821, 8
          %s2823 = scalar_lea.vmem [#allocation6], %s2822
          %2824 = dma.done %s2820, 128
        $region56: #{tpu_custom_call.1} parent=47 // pred_fallthru
          _
      $region48: #{tpu_custom_call.1} parent=5 // pred_fallthru
        _
    $region6: #{tpu_custom_call.1} parent=1 // loop_footer
      %s20 = sadd.s32 1, %s16
    $region7: #{tpu_custom_call.1} parent=1 // loop_footer_branch
      %15 = sbr.rel target = $region3
    $region8: #{tpu_custom_call.1} parent=1 // loop_exit
      _
    %2825 = vsyncpa [#allocation5], 1
    %s2826 = scalar_lea.sflag [#allocation5], 1
    %2827 = vsyncpa %s2826, 1
    %2828 = vsyncpa [#allocation7], 1
    %s2829 = scalar_lea.sflag [#allocation7], 1
    %2830 = vsyncpa %s2829, 1

</llo_original>
